<compile_context>
chip_gen: v7x
topology: tpu7x:2x2x1
jax: 0.10.0
libtpu: 0.0.40
codegen_flags: <defaults>
</compile_context>

<pallas_src>
import functools
import math

import jax
import jax.numpy as jnp
from jax.experimental import pallas as pl
from jax.experimental.pallas import tpu as pltpu


_BD = 128   # dst tile (multiple of 8/16 sublanes)
_BS = 256   # src / reduction tile (multiple of the 256-wide v6e/v7x MXU; 2x128 on v5e)


def _round_up(n, m):
    return ((n + m - 1) // m) * m


def _sage_conv_kernel(adj_ref, hsrc_ref, hdst_ref, invdeg_ref,
                      wself_ref, wneigh_ref, bias_ref,
                      out_ref, acc_ref, *, apply_relu):
    """One (dst-tile i, src-tile k) step of SAGEConv('mean')."""
    k = pl.program_id(1)

    @pl.when(k == 0)
    def _init():
        acc_ref[...] = jnp.zeros_like(acc_ref)

    # Neighbor sum: int8 {0,1} adjacency tile -> bf16 on the VPU, MXU dot,
    # f32 accumulation in VMEM scratch.
    adj = adj_ref[...].astype(jnp.float32).astype(jnp.bfloat16)
    hsrc = hsrc_ref[...].astype(jnp.bfloat16)
    acc_ref[...] += jnp.dot(adj, hsrc, preferred_element_type=jnp.float32)

    @pl.when(k == pl.num_programs(1) - 1)
    def _epilogue():
        # Exact 'mean': f32 1/deg row scale of the accumulated neighbor sum.
        h_neigh = acc_ref[...] * invdeg_ref[...]
        # Two separate matmuls (no [h_dst | h_neigh] lane concat): identical MXU
        # passes for K >= 128 and no full-width VMEM copy / unaligned slice.
        out = jnp.dot(hdst_ref[...].astype(jnp.bfloat16), wself_ref[...],
                      preferred_element_type=jnp.float32)
        out = out + jnp.dot(h_neigh.astype(jnp.bfloat16), wneigh_ref[...],
                            preferred_element_type=jnp.float32)
        out = out + bias_ref[...]                       # f32 epilogue on the VPU
        if apply_relu:
            out = jnp.maximum(out, 0.0)
            # TODO(synk): training-mode Dropout(0.5) would use pltpu.prng_seed +
            # pltpu.prng_random_bits here; eval mode == identity.
        out_ref[...] = out.astype(out_ref.dtype)


def _sage_conv(h, adj_i8, inv_deg, w_self, w_neigh, bias, *, apply_relu,
               bd=_BD, bs=_BS):
    """One SAGEConv('mean') layer as a tiled, pipelined pallas_call."""
    n_dst_p, n_src_p = adj_i8.shape
    f_in = h.shape[1]
    f_out = w_self.shape[1]
    assert h.shape[0] == n_src_p
    assert n_dst_p % bd == 0 and n_src_p % bs == 0

    grid = (n_dst_p // bd, n_src_p // bs)

    flops = 2 * n_dst_p * n_src_p * f_in + 4 * n_dst_p * f_in * f_out
    bytes_accessed = (adj_i8.size                               # int8 adj stream
                      + grid[0] * n_src_p * f_in * 4            # h src tiles (per dst tile)
                      + n_dst_p * f_in * 4 + n_dst_p * 4        # h dst + 1/deg
                      + 2 * f_in * f_out * 2 + f_out * 4        # bf16 weights + bias
                      + n_dst_p * f_out * 4)                    # output

    kernel = functools.partial(_sage_conv_kernel, apply_relu=apply_relu)
    return pl.pallas_call(
        kernel,
        out_shape=jax.ShapeDtypeStruct((n_dst_p, f_out), jnp.float32),
        grid_spec=pltpu.PrefetchScalarGridSpec(
            num_scalar_prefetch=0,
            grid=grid,
            in_specs=[
                pl.BlockSpec((bd, bs), lambda i, k: (i, k)),        # adj (streams from HBM)
                pl.BlockSpec((bs, f_in), lambda i, k: (k, 0)),      # h src tile
                pl.BlockSpec((bd, f_in), lambda i, k: (i, 0)),      # h dst tile (constant in k)
                pl.BlockSpec((bd, 1), lambda i, k: (i, 0)),         # 1/deg (f32, exact)
                pl.BlockSpec((f_in, f_out), lambda i, k: (0, 0)),   # W_self (VMEM-resident)
                pl.BlockSpec((f_in, f_out), lambda i, k: (0, 0)),   # W_neigh (VMEM-resident)
                pl.BlockSpec((1, f_out), lambda i, k: (0, 0)),      # bias (VMEM-resident)
            ],
            out_specs=pl.BlockSpec((bd, f_out), lambda i, k: (i, 0)),
            scratch_shapes=[pltpu.VMEM((bd, f_in), jnp.float32)],   # neighbor-sum accumulator
        ),
        compiler_params=pltpu.CompilerParams(
            dimension_semantics=("parallel", "arbitrary"),
            # Explicit, modest bound; raise when scaling bd/bs for realistic
            # block sizes (keep below 64 MiB physical VMEM on v7x).
            vmem_limit_bytes=32 * 1024 * 1024,
        ),
        cost_estimate=pl.CostEstimate(flops=int(flops), transcendentals=0,
                                      bytes_accessed=int(bytes_accessed)),
    )(adj_i8, h, h, inv_deg, w_self, w_neigh, bias)


def _sage_forward_impl(x_pad, layers, n_out_rows):
    """3-layer SAGE forward (eval mode). `layers` comes from prepare_inputs."""
    h = x_pad
    n_layers = len(layers)
    for l, (adj_i8, inv_deg, w_self, w_neigh, bias) in enumerate(layers):
        h = _sage_conv(h, adj_i8, inv_deg, w_self, w_neigh, bias,
                       apply_relu=(l != n_layers - 1))
    return h[:n_out_rows]


sage_forward = jax.jit(_sage_forward_impl, static_argnums=(2,))


def prepare_inputs(blocks, params, x, *, bd=_BD, bs=_BS):
    """One-time prep hoisted out of the forward pass (per review):
      * {0,1} adjacency -> int8, zero-padded so (n_dst, n_src) are tile multiples
      * exact f32 1/deg column for the mean normalization (0 on padded rows)
      * weights -> bf16, bias -> (1, f_out) f32
      * x zero-padded along rows to the layer-0 src padding
    Returns (x_padded, layer_param_tuple, n_out_rows_true).
    """
    lcm = bd * bs // math.gcd(bd, bs)
    src_pad = _round_up(blocks[0].shape[1], bs)
    x_pad = jnp.zeros((src_pad, x.shape[1]), jnp.float32)
    x_pad = x_pad.at[: x.shape[0]].set(x.astype(jnp.float32))

    layers = []
    prev_pad = src_pad
    for adj, (w_self, w_neigh, bias) in zip(blocks, params):
        n_dst, n_src = adj.shape
        assert n_dst <= n_src, "dst nodes must be a prefix of src nodes (DGL block)"
        assert n_src <= prev_pad, "block l src nodes must be block l-1 dst nodes"
        dst_pad = _round_up(n_dst, lcm)          # multiple of bd, and of bs as next src
        adj_i8 = jnp.zeros((dst_pad, prev_pad), jnp.int8)
        adj_i8 = adj_i8.at[:n_dst, :n_src].set((adj > 0).astype(jnp.int8))
        deg = jnp.maximum(adj.sum(axis=1, keepdims=True), 1.0)
        inv_deg = jnp.zeros((dst_pad, 1), jnp.float32).at[:n_dst].set(1.0 / deg)
        layers.append((adj_i8, inv_deg,
                       w_self.astype(jnp.bfloat16),
                       w_neigh.astype(jnp.bfloat16),
                       bias.astype(jnp.float32).reshape(1, -1)))
        prev_pad = dst_pad

    return x_pad, tuple(layers), blocks[-1].shape[0]


def sage_reference(blocks, x, params):
    """Pure-JAX f32 reference (mirrors the PyTorch module in eval mode)."""
    h = x.astype(jnp.float32)
    n_layers = len(params)
    for l, (adj, (w_self, w_neigh, bias)) in enumerate(zip(blocks, params)):
        n_dst = adj.shape[0]
        deg = jnp.maximum(adj.sum(axis=1, keepdims=True), 1.0)
        h_neigh = (adj @ h) / deg
        h = h[:n_dst] @ w_self + h_neigh @ w_neigh + bias
        if l != n_layers - 1:
            h = jnp.maximum(h, 0.0)
    return h


if __name__ == "__main__":
    in_size, hid_size, out_size = 64, 128, 32
    # sampled-block node counts (src includes dst as its leading rows)
    sizes = [(1024, 512), (512, 256), (256, 128)]   # (n_src, n_dst) per block

    root = jax.random.PRNGKey(0)
    keys = jax.random.split(root, 8)

    x = jax.random.normal(keys[0], (sizes[0][0], in_size), dtype=jnp.float32)

    blocks = []
    for l, (n_src, n_dst) in enumerate(sizes):
        a = (jax.random.uniform(keys[1 + l], (n_dst, n_src)) < 0.1)
        blocks.append(a.astype(jnp.float32))        # dense {0,1} adjacency

    dims = [(in_size, hid_size), (hid_size, hid_size), (hid_size, out_size)]
    params = []
    for l, (fi, fo) in enumerate(dims):
        k_ws, k_wn, k_b = jax.random.split(keys[4 + l], 3)
        scale = 1.0 / float(fi) ** 0.5
        w_self = jax.random.uniform(k_ws, (fi, fo), minval=-scale, maxval=scale,
                                    dtype=jnp.float32)
        w_neigh = jax.random.uniform(k_wn, (fi, fo), minval=-scale, maxval=scale,
                                     dtype=jnp.float32)
        bias = jax.random.uniform(k_b, (1, fo), minval=-scale, maxval=scale,
                                  dtype=jnp.float32)
        params.append((w_self, w_neigh, bias))

    # one-time prep (int8 adjacency, bf16 weights, tile padding)
    x_pad, layers, n_out_rows = prepare_inputs(blocks, params, x)

    out = sage_forward(x_pad, layers, n_out_rows)
    out = jax.block_until_ready(out)
    assert out.shape == (sizes[-1][1], out_size), out.shape

    ref = sage_reference(blocks, x, params)
    max_err = float(jnp.max(jnp.abs(out - ref)))
    assert jnp.allclose(out, ref, rtol=5e-2, atol=5e-2), max_err

    print("KERNEL_OK")
</pallas_src>

<mosaic_0001>
module attributes {stable_mosaic.version = 11 : i64} {
  func.func @_sage_conv_kernel(%arg0: i32, %arg1: i32, %arg2: memref<128x256xi8, #tpu.memory_space<vmem>>, %arg3: memref<256x64xf32, #tpu.memory_space<vmem>>, %arg4: memref<128x64xf32, #tpu.memory_space<vmem>>, %arg5: memref<128x1xf32, #tpu.memory_space<vmem>>, %arg6: memref<64x128xbf16, #tpu.memory_space<vmem>>, %arg7: memref<64x128xbf16, #tpu.memory_space<vmem>>, %arg8: memref<1x128xf32, #tpu.memory_space<vmem>>, %arg9: memref<128x128xf32, #tpu.memory_space<vmem>>, %arg10: memref<128x64xf32, #tpu.memory_space<vmem>>) attributes {dimension_semantics = [#tpu.dimension_semantics<parallel>, #tpu.dimension_semantics<arbitrary>], iteration_bounds = array<i64: 4, 4>, scalar_prefetch = 0 : i64, scratch_operands = 1 : i64, tpu.core_type = #tpu.core_type<tc>, window_params = [{transform_indices = @transform_0, window_bounds = array<i64: 128, 256>}, {transform_indices = @transform_1, window_bounds = array<i64: 256, 64>}, {transform_indices = @transform_2, window_bounds = array<i64: 128, 64>}, {transform_indices = @transform_3, window_bounds = array<i64: 128, 1>}, {pipeline_mode = #tpu.pipeline_mode<synchronous>, transform_indices = @transform_4, window_bounds = array<i64: 64, 128>}, {pipeline_mode = #tpu.pipeline_mode<synchronous>, transform_indices = @transform_5, window_bounds = array<i64: 64, 128>}, {pipeline_mode = #tpu.pipeline_mode<synchronous>, transform_indices = @transform_6, window_bounds = array<i64: 1, 128>}, {transform_indices = @transform_7, window_bounds = array<i64: 128, 128>}]} {
    %c0_i32 = arith.constant 0 : i32
    %0 = arith.cmpi eq, %arg1, %c0_i32 : i32
    %1 = arith.extui %0 : i1 to i32
    %c0_i32_0 = arith.constant 0 : i32
    %2 = arith.cmpi ne, %1, %c0_i32_0 : i32
    scf.if %2 {
      %cst_9 = arith.constant 0.000000e+00 : f32
      %15 = vector.broadcast %cst_9 : f32 to vector<128x64xf32>
      %c0_10 = arith.constant 0 : index
      %c0_11 = arith.constant 0 : index
      %16 = vector.load %arg10[%c0_10, %c0_11] : memref<128x64xf32, #tpu.memory_space<vmem>>, vector<128x64xf32>
      tpu.vector_store %arg10[%c0_10, %c0_11], %15 {strides = array<i32>} : memref<128x64xf32, #tpu.memory_space<vmem>>, vector<128x64xf32>,
    } else {
    }
    %c0 = arith.constant 0 : index
    %c0_1 = arith.constant 0 : index
    %3 = vector.load %arg2[%c0, %c0_1] : memref<128x256xi8, #tpu.memory_space<vmem>>, vector<128x256xi8>
    %4 = arith.sitofp %3 : vector<128x256xi8> to vector<128x256xf32>
    %5 = arith.truncf %4 : vector<128x256xf32> to vector<128x256xbf16>
    %c0_2 = arith.constant 0 : index
    %c0_3 = arith.constant 0 : index
    %6 = vector.load %arg3[%c0_2, %c0_3] : memref<256x64xf32, #tpu.memory_space<vmem>>, vector<256x64xf32>
    %7 = arith.truncf %6 : vector<256x64xf32> to vector<256x64xbf16>
    %c0_4 = arith.constant 0 : index
    %c0_5 = arith.constant 0 : index
    %8 = vector.load %arg10[%c0_4, %c0_5] : memref<128x64xf32, #tpu.memory_space<vmem>>, vector<128x64xf32>
    %cst = arith.constant dense<0.000000e+00> : vector<128x64xf32>
    %9 = tpu.matmul %5, %7, %cst {dimension_numbers = #tpu.dot_dimension_numbers<[1], [0], [0], [1], [0, 0, 1, 1], [], []>} : vector<128x256xbf16>, vector<256x64xbf16>, vector<128x64xf32> -> vector<128x64xf32>
    %10 = arith.addf %8, %9 : vector<128x64xf32>
    %c0_6 = arith.constant 0 : index
    %c0_7 = arith.constant 0 : index
    %11 = vector.load %arg10[%c0_6, %c0_7] : memref<128x64xf32, #tpu.memory_space<vmem>>, vector<128x64xf32>
    tpu.vector_store %arg10[%c0_6, %c0_7], %10 {strides = array<i32>} : memref<128x64xf32, #tpu.memory_space<vmem>>, vector<128x64xf32>,
    %c3_i32 = arith.constant 3 : i32
    %12 = arith.cmpi eq, %arg1, %c3_i32 : i32
    %13 = arith.extui %12 : i1 to i32
    %c0_i32_8 = arith.constant 0 : i32
    %14 = arith.cmpi ne, %13, %c0_i32_8 : i32
    scf.if %14 {
      %c0_9 = arith.constant 0 : index
      %c0_10 = arith.constant 0 : index
      %15 = vector.load %arg10[%c0_9, %c0_10] : memref<128x64xf32, #tpu.memory_space<vmem>>, vector<128x64xf32>
      %c0_11 = arith.constant 0 : index
      %c0_12 = arith.constant 0 : index
      %16 = vector.load %arg5[%c0_11, %c0_12] : memref<128x1xf32, #tpu.memory_space<vmem>>, vector<128x1xf32>
      %17 = vector.broadcast %16 : vector<128x1xf32> to vector<128x64xf32>
      %18 = arith.mulf %15, %17 : vector<128x64xf32>
      %c0_13 = arith.constant 0 : index
      %c0_14 = arith.constant 0 : index
      %19 = vector.load %arg4[%c0_13, %c0_14] : memref<128x64xf32, #tpu.memory_space<vmem>>, vector<128x64xf32>
      %20 = arith.truncf %19 : vector<128x64xf32> to vector<128x64xbf16>
      %c0_15 = arith.constant 0 : index
      %c0_16 = arith.constant 0 : index
      %21 = vector.load %arg6[%c0_15, %c0_16] : memref<64x128xbf16, #tpu.memory_space<vmem>>, vector<64x128xbf16>
      %cst_17 = arith.constant dense<0.000000e+00> : vector<128x128xf32>
      %22 = tpu.matmul %20, %21, %cst_17 {dimension_numbers = #tpu.dot_dimension_numbers<[1], [0], [0], [1], [0, 0, 1, 1], [], []>} : vector<128x64xbf16>, vector<64x128xbf16>, vector<128x128xf32> -> vector<128x128xf32>
      %23 = arith.truncf %18 : vector<128x64xf32> to vector<128x64xbf16>
      %c0_18 = arith.constant 0 : index
      %c0_19 = arith.constant 0 : index
      %24 = vector.load %arg7[%c0_18, %c0_19] : memref<64x128xbf16, #tpu.memory_space<vmem>>, vector<64x128xbf16>
      %cst_20 = arith.constant dense<0.000000e+00> : vector<128x128xf32>
      %25 = tpu.matmul %23, %24, %cst_20 {dimension_numbers = #tpu.dot_dimension_numbers<[1], [0], [0], [1], [0, 0, 1, 1], [], []>} : vector<128x64xbf16>, vector<64x128xbf16>, vector<128x128xf32> -> vector<128x128xf32>
      %26 = arith.addf %22, %25 : vector<128x128xf32>
      %c0_21 = arith.constant 0 : index
      %c0_22 = arith.constant 0 : index
      %27 = vector.load %arg8[%c0_21, %c0_22] : memref<1x128xf32, #tpu.memory_space<vmem>>, vector<1x128xf32>
      %28 = vector.broadcast %27 : vector<1x128xf32> to vector<128x128xf32>
      %29 = arith.addf %26, %28 : vector<128x128xf32>
      %cst_23 = arith.constant 0.000000e+00 : f32
      %30 = vector.broadcast %cst_23 : f32 to vector<128x128xf32>
      %31 = arith.maximumf %29, %30 : vector<128x128xf32>
      %c0_24 = arith.constant 0 : index
      %c0_25 = arith.constant 0 : index
      %32 = vector.load %arg9[%c0_24, %c0_25] : memref<128x128xf32, #tpu.memory_space<vmem>>, vector<128x128xf32>
      tpu.vector_store %arg9[%c0_24, %c0_25], %31 {strides = array<i32>} : memref<128x128xf32, #tpu.memory_space<vmem>>, vector<128x128xf32>,
    } else {
    }
    return
  }
  func.func @transform_0(%arg0: i32, %arg1: i32) -> (i32, i32) {
    %c0_i32 = arith.constant 0 : i32
    return %arg0, %arg1 : i32, i32
  }
  func.func @transform_1(%arg0: i32, %arg1: i32) -> (i32, i32) {
    %c0_i32 = arith.constant 0 : i32
    %c0_i32_0 = arith.constant 0 : i32
    return %arg1, %c0_i32 : i32, i32
  }
  func.func @transform_2(%arg0: i32, %arg1: i32) -> (i32, i32) {
    %c0_i32 = arith.constant 0 : i32
    %c0_i32_0 = arith.constant 0 : i32
    return %arg0, %c0_i32 : i32, i32
  }
  func.func @transform_3(%arg0: i32, %arg1: i32) -> (i32, i32) {
    %c0_i32 = arith.constant 0 : i32
    %c0_i32_0 = arith.constant 0 : i32
    return %arg0, %c0_i32 : i32, i32
  }
  func.func @transform_4(%arg0: i32, %arg1: i32) -> (i32, i32) {
    %c0_i32 = arith.constant 0 : i32
    %c0_i32_0 = arith.constant 0 : i32
    %c0_i32_1 = arith.constant 0 : i32
    return %c0_i32, %c0_i32_0 : i32, i32
  }
  func.func @transform_5(%arg0: i32, %arg1: i32) -> (i32, i32) {
    %c0_i32 = arith.constant 0 : i32
    %c0_i32_0 = arith.constant 0 : i32
    %c0_i32_1 = arith.constant 0 : i32
    return %c0_i32, %c0_i32_0 : i32, i32
  }
  func.func @transform_6(%arg0: i32, %arg1: i32) -> (i32, i32) {
    %c0_i32 = arith.constant 0 : i32
    %c0_i32_0 = arith.constant 0 : i32
    %c0_i32_1 = arith.constant 0 : i32
    return %c0_i32, %c0_i32_0 : i32, i32
  }
  func.func @transform_7(%arg0: i32, %arg1: i32) -> (i32, i32) {
    %c0_i32 = arith.constant 0 : i32
    %c0_i32_0 = arith.constant 0 : i32
    return %arg0, %c0_i32 : i32, i32
  }
}

module attributes {stable_mosaic.version = 11 : i64} {
  func.func @_sage_conv_kernel(%arg0: i32, %arg1: i32, %arg2: memref<128x256xi8, #tpu.memory_space<vmem>>, %arg3: memref<256x128xf32, #tpu.memory_space<vmem>>, %arg4: memref<128x128xf32, #tpu.memory_space<vmem>>, %arg5: memref<128x1xf32, #tpu.memory_space<vmem>>, %arg6: memref<128x128xbf16, #tpu.memory_space<vmem>>, %arg7: memref<128x128xbf16, #tpu.memory_space<vmem>>, %arg8: memref<1x128xf32, #tpu.memory_space<vmem>>, %arg9: memref<128x128xf32, #tpu.memory_space<vmem>>, %arg10: memref<128x128xf32, #tpu.memory_space<vmem>>) attributes {dimension_semantics = [#tpu.dimension_semantics<parallel>, #tpu.dimension_semantics<arbitrary>], iteration_bounds = array<i64: 2, 2>, scalar_prefetch = 0 : i64, scratch_operands = 1 : i64, tpu.core_type = #tpu.core_type<tc>, window_params = [{transform_indices = @transform_0, window_bounds = array<i64: 128, 256>}, {transform_indices = @transform_1, window_bounds = array<i64: 256, 128>}, {transform_indices = @transform_2, window_bounds = array<i64: 128, 128>}, {transform_indices = @transform_3, window_bounds = array<i64: 128, 1>}, {pipeline_mode = #tpu.pipeline_mode<synchronous>, transform_indices = @transform_4, window_bounds = array<i64: 128, 128>}, {pipeline_mode = #tpu.pipeline_mode<synchronous>, transform_indices = @transform_5, window_bounds = array<i64: 128, 128>}, {pipeline_mode = #tpu.pipeline_mode<synchronous>, transform_indices = @transform_6, window_bounds = array<i64: 1, 128>}, {transform_indices = @transform_7, window_bounds = array<i64: 128, 128>}]} {
    %c0_i32 = arith.constant 0 : i32
    %0 = arith.cmpi eq, %arg1, %c0_i32 : i32
    %1 = arith.extui %0 : i1 to i32
    %c0_i32_0 = arith.constant 0 : i32
    %2 = arith.cmpi ne, %1, %c0_i32_0 : i32
    scf.if %2 {
      %cst_9 = arith.constant 0.000000e+00 : f32
      %15 = vector.broadcast %cst_9 : f32 to vector<128x128xf32>
      %c0_10 = arith.constant 0 : index
      %c0_11 = arith.constant 0 : index
      %16 = vector.load %arg10[%c0_10, %c0_11] : memref<128x128xf32, #tpu.memory_space<vmem>>, vector<128x128xf32>
      tpu.vector_store %arg10[%c0_10, %c0_11], %15 {strides = array<i32>} : memref<128x128xf32, #tpu.memory_space<vmem>>, vector<128x128xf32>,
    } else {
    }
    %c0 = arith.constant 0 : index
    %c0_1 = arith.constant 0 : index
    %3 = vector.load %arg2[%c0, %c0_1] : memref<128x256xi8, #tpu.memory_space<vmem>>, vector<128x256xi8>
    %4 = arith.sitofp %3 : vector<128x256xi8> to vector<128x256xf32>
    %5 = arith.truncf %4 : vector<128x256xf32> to vector<128x256xbf16>
    %c0_2 = arith.constant 0 : index
    %c0_3 = arith.constant 0 : index
    %6 = vector.load %arg3[%c0_2, %c0_3] : memref<256x128xf32, #tpu.memory_space<vmem>>, vector<256x128xf32>
    %7 = arith.truncf %6 : vector<256x128xf32> to vector<256x128xbf16>
    %c0_4 = arith.constant 0 : index
    %c0_5 = arith.constant 0 : index
    %8 = vector.load %arg10[%c0_4, %c0_5] : memref<128x128xf32, #tpu.memory_space<vmem>>, vector<128x128xf32>
    %cst = arith.constant dense<0.000000e+00> : vector<128x128xf32>
    %9 = tpu.matmul %5, %7, %cst {dimension_numbers = #tpu.dot_dimension_numbers<[1], [0], [0], [1], [0, 0, 1, 1], [], []>} : vector<128x256xbf16>, vector<256x128xbf16>, vector<128x128xf32> -> vector<128x128xf32>
    %10 = arith.addf %8, %9 : vector<128x128xf32>
    %c0_6 = arith.constant 0 : index
    %c0_7 = arith.constant 0 : index
    %11 = vector.load %arg10[%c0_6, %c0_7] : memref<128x128xf32, #tpu.memory_space<vmem>>, vector<128x128xf32>
    tpu.vector_store %arg10[%c0_6, %c0_7], %10 {strides = array<i32>} : memref<128x128xf32, #tpu.memory_space<vmem>>, vector<128x128xf32>,
    %c1_i32 = arith.constant 1 : i32
    %12 = arith.cmpi eq, %arg1, %c1_i32 : i32
    %13 = arith.extui %12 : i1 to i32
    %c0_i32_8 = arith.constant 0 : i32
    %14 = arith.cmpi ne, %13, %c0_i32_8 : i32
    scf.if %14 {
      %c0_9 = arith.constant 0 : index
      %c0_10 = arith.constant 0 : index
      %15 = vector.load %arg10[%c0_9, %c0_10] : memref<128x128xf32, #tpu.memory_space<vmem>>, vector<128x128xf32>
      %c0_11 = arith.constant 0 : index
      %c0_12 = arith.constant 0 : index
      %16 = vector.load %arg5[%c0_11, %c0_12] : memref<128x1xf32, #tpu.memory_space<vmem>>, vector<128x1xf32>
      %17 = vector.broadcast %16 : vector<128x1xf32> to vector<128x128xf32>
      %18 = arith.mulf %15, %17 : vector<128x128xf32>
      %c0_13 = arith.constant 0 : index
      %c0_14 = arith.constant 0 : index
      %19 = vector.load %arg4[%c0_13, %c0_14] : memref<128x128xf32, #tpu.memory_space<vmem>>, vector<128x128xf32>
      %20 = arith.truncf %19 : vector<128x128xf32> to vector<128x128xbf16>
      %c0_15 = arith.constant 0 : index
      %c0_16 = arith.constant 0 : index
      %21 = vector.load %arg6[%c0_15, %c0_16] : memref<128x128xbf16, #tpu.memory_space<vmem>>, vector<128x128xbf16>
      %cst_17 = arith.constant dense<0.000000e+00> : vector<128x128xf32>
      %22 = tpu.matmul %20, %21, %cst_17 {dimension_numbers = #tpu.dot_dimension_numbers<[1], [0], [0], [1], [0, 0, 1, 1], [], []>} : vector<128x128xbf16>, vector<128x128xbf16>, vector<128x128xf32> -> vector<128x128xf32>
      %23 = arith.truncf %18 : vector<128x128xf32> to vector<128x128xbf16>
      %c0_18 = arith.constant 0 : index
      %c0_19 = arith.constant 0 : index
      %24 = vector.load %arg7[%c0_18, %c0_19] : memref<128x128xbf16, #tpu.memory_space<vmem>>, vector<128x128xbf16>
      %cst_20 = arith.constant dense<0.000000e+00> : vector<128x128xf32>
      %25 = tpu.matmul %23, %24, %cst_20 {dimension_numbers = #tpu.dot_dimension_numbers<[1], [0], [0], [1], [0, 0, 1, 1], [], []>} : vector<128x128xbf16>, vector<128x128xbf16>, vector<128x128xf32> -> vector<128x128xf32>
      %26 = arith.addf %22, %25 : vector<128x128xf32>
      %c0_21 = arith.constant 0 : index
      %c0_22 = arith.constant 0 : index
      %27 = vector.load %arg8[%c0_21, %c0_22] : memref<1x128xf32, #tpu.memory_space<vmem>>, vector<1x128xf32>
      %28 = vector.broadcast %27 : vector<1x128xf32> to vector<128x128xf32>
      %29 = arith.addf %26, %28 : vector<128x128xf32>
      %cst_23 = arith.constant 0.000000e+00 : f32
      %30 = vector.broadcast %cst_23 : f32 to vector<128x128xf32>
      %31 = arith.maximumf %29, %30 : vector<128x128xf32>
      %c0_24 = arith.constant 0 : index
      %c0_25 = arith.constant 0 : index
      %32 = vector.load %arg9[%c0_24, %c0_25] : memref<128x128xf32, #tpu.memory_space<vmem>>, vector<128x128xf32>
      tpu.vector_store %arg9[%c0_24, %c0_25], %31 {strides = array<i32>} : memref<128x128xf32, #tpu.memory_space<vmem>>, vector<128x128xf32>,
    } else {
    }
    return
  }
  func.func @transform_0(%arg0: i32, %arg1: i32) -> (i32, i32) {
    %c0_i32 = arith.constant 0 : i32
    return %arg0, %arg1 : i32, i32
  }
  func.func @transform_1(%arg0: i32, %arg1: i32) -> (i32, i32) {
    %c0_i32 = arith.constant 0 : i32
    %c0_i32_0 = arith.constant 0 : i32
    return %arg1, %c0_i32 : i32, i32
  }
  func.func @transform_2(%arg0: i32, %arg1: i32) -> (i32, i32) {
    %c0_i32 = arith.constant 0 : i32
    %c0_i32_0 = arith.constant 0 : i32
    return %arg0, %c0_i32 : i32, i32
  }
  func.func @transform_3(%arg0: i32, %arg1: i32) -> (i32, i32) {
    %c0_i32 = arith.constant 0 : i32
    %c0_i32_0 = arith.constant 0 : i32
    return %arg0, %c0_i32 : i32, i32
  }
  func.func @transform_4(%arg0: i32, %arg1: i32) -> (i32, i32) {
    %c0_i32 = arith.constant 0 : i32
    %c0_i32_0 = arith.constant 0 : i32
    %c0_i32_1 = arith.constant 0 : i32
    return %c0_i32, %c0_i32_0 : i32, i32
  }
  func.func @transform_5(%arg0: i32, %arg1: i32) -> (i32, i32) {
    %c0_i32 = arith.constant 0 : i32
    %c0_i32_0 = arith.constant 0 : i32
    %c0_i32_1 = arith.constant 0 : i32
    return %c0_i32, %c0_i32_0 : i32, i32
  }
  func.func @transform_6(%arg0: i32, %arg1: i32) -> (i32, i32) {
    %c0_i32 = arith.constant 0 : i32
    %c0_i32_0 = arith.constant 0 : i32
    %c0_i32_1 = arith.constant 0 : i32
    return %c0_i32, %c0_i32_0 : i32, i32
  }
  func.func @transform_7(%arg0: i32, %arg1: i32) -> (i32, i32) {
    %c0_i32 = arith.constant 0 : i32
    %c0_i32_0 = arith.constant 0 : i32
    return %arg0, %c0_i32 : i32, i32
  }
}

module attributes {stable_mosaic.version = 11 : i64} {
  func.func @_sage_conv_kernel(%arg0: i32, %arg1: i32, %arg2: memref<128x256xi8, #tpu.memory_space<vmem>>, %arg3: memref<256x128xf32, #tpu.memory_space<vmem>>, %arg4: memref<128x128xf32, #tpu.memory_space<vmem>>, %arg5: memref<128x1xf32, #tpu.memory_space<vmem>>, %arg6: memref<128x32xbf16, #tpu.memory_space<vmem>>, %arg7: memref<128x32xbf16, #tpu.memory_space<vmem>>, %arg8: memref<1x32xf32, #tpu.memory_space<vmem>>, %arg9: memref<128x32xf32, #tpu.memory_space<vmem>>, %arg10: memref<128x128xf32, #tpu.memory_space<vmem>>) attributes {dimension_semantics = [#tpu.dimension_semantics<parallel>, #tpu.dimension_semantics<arbitrary>], iteration_bounds = array<i64: 2, 1>, scalar_prefetch = 0 : i64, scratch_operands = 1 : i64, tpu.core_type = #tpu.core_type<tc>, window_params = [{transform_indices = @transform_0, window_bounds = array<i64: 128, 256>}, {transform_indices = @transform_1, window_bounds = array<i64: 256, 128>}, {transform_indices = @transform_2, window_bounds = array<i64: 128, 128>}, {transform_indices = @transform_3, window_bounds = array<i64: 128, 1>}, {pipeline_mode = #tpu.pipeline_mode<synchronous>, transform_indices = @transform_4, window_bounds = array<i64: 128, 32>}, {pipeline_mode = #tpu.pipeline_mode<synchronous>, transform_indices = @transform_5, window_bounds = array<i64: 128, 32>}, {pipeline_mode = #tpu.pipeline_mode<synchronous>, transform_indices = @transform_6, window_bounds = array<i64: 1, 32>}, {transform_indices = @transform_7, window_bounds = array<i64: 128, 32>}]} {
    %c0_i32 = arith.constant 0 : i32
    %0 = arith.cmpi eq, %arg1, %c0_i32 : i32
    %1 = arith.extui %0 : i1 to i32
    %c0_i32_0 = arith.constant 0 : i32
    %2 = arith.cmpi ne, %1, %c0_i32_0 : i32
    scf.if %2 {
      %cst_10 = arith.constant 0.000000e+00 : f32
      %15 = vector.broadcast %cst_10 : f32 to vector<128x128xf32>
      %c0_11 = arith.constant 0 : index
      %c0_12 = arith.constant 0 : index
      %16 = vector.load %arg10[%c0_11, %c0_12] : memref<128x128xf32, #tpu.memory_space<vmem>>, vector<128x128xf32>
      tpu.vector_store %arg10[%c0_11, %c0_12], %15 {strides = array<i32>} : memref<128x128xf32, #tpu.memory_space<vmem>>, vector<128x128xf32>,
    } else {
    }
    %c0 = arith.constant 0 : index
    %c0_1 = arith.constant 0 : index
    %3 = vector.load %arg2[%c0, %c0_1] : memref<128x256xi8, #tpu.memory_space<vmem>>, vector<128x256xi8>
    %4 = arith.sitofp %3 : vector<128x256xi8> to vector<128x256xf32>
    %5 = arith.truncf %4 : vector<128x256xf32> to vector<128x256xbf16>
    %c0_2 = arith.constant 0 : index
    %c0_3 = arith.constant 0 : index
    %6 = vector.load %arg3[%c0_2, %c0_3] : memref<256x128xf32, #tpu.memory_space<vmem>>, vector<256x128xf32>
    %7 = arith.truncf %6 : vector<256x128xf32> to vector<256x128xbf16>
    %c0_4 = arith.constant 0 : index
    %c0_5 = arith.constant 0 : index
    %8 = vector.load %arg10[%c0_4, %c0_5] : memref<128x128xf32, #tpu.memory_space<vmem>>, vector<128x128xf32>
    %cst = arith.constant dense<0.000000e+00> : vector<128x128xf32>
    %9 = tpu.matmul %5, %7, %cst {dimension_numbers = #tpu.dot_dimension_numbers<[1], [0], [0], [1], [0, 0, 1, 1], [], []>} : vector<128x256xbf16>, vector<256x128xbf16>, vector<128x128xf32> -> vector<128x128xf32>
    %10 = arith.addf %8, %9 : vector<128x128xf32>
    %c0_6 = arith.constant 0 : index
    %c0_7 = arith.constant 0 : index
    %11 = vector.load %arg10[%c0_6, %c0_7] : memref<128x128xf32, #tpu.memory_space<vmem>>, vector<128x128xf32>
    tpu.vector_store %arg10[%c0_6, %c0_7], %10 {strides = array<i32>} : memref<128x128xf32, #tpu.memory_space<vmem>>, vector<128x128xf32>,
    %c0_i32_8 = arith.constant 0 : i32
    %12 = arith.cmpi eq, %arg1, %c0_i32_8 : i32
    %13 = arith.extui %12 : i1 to i32
    %c0_i32_9 = arith.constant 0 : i32
    %14 = arith.cmpi ne, %13, %c0_i32_9 : i32
    scf.if %14 {
      %c0_10 = arith.constant 0 : index
      %c0_11 = arith.constant 0 : index
      %15 = vector.load %arg10[%c0_10, %c0_11] : memref<128x128xf32, #tpu.memory_space<vmem>>, vector<128x128xf32>
      %c0_12 = arith.constant 0 : index
      %c0_13 = arith.constant 0 : index
      %16 = vector.load %arg5[%c0_12, %c0_13] : memref<128x1xf32, #tpu.memory_space<vmem>>, vector<128x1xf32>
      %17 = vector.broadcast %16 : vector<128x1xf32> to vector<128x128xf32>
      %18 = arith.mulf %15, %17 : vector<128x128xf32>
      %c0_14 = arith.constant 0 : index
      %c0_15 = arith.constant 0 : index
      %19 = vector.load %arg4[%c0_14, %c0_15] : memref<128x128xf32, #tpu.memory_space<vmem>>, vector<128x128xf32>
      %20 = arith.truncf %19 : vector<128x128xf32> to vector<128x128xbf16>
      %c0_16 = arith.constant 0 : index
      %c0_17 = arith.constant 0 : index
      %21 = vector.load %arg6[%c0_16, %c0_17] : memref<128x32xbf16, #tpu.memory_space<vmem>>, vector<128x32xbf16>
      %cst_18 = arith.constant dense<0.000000e+00> : vector<128x32xf32>
      %22 = tpu.matmul %20, %21, %cst_18 {dimension_numbers = #tpu.dot_dimension_numbers<[1], [0], [0], [1], [0, 0, 1, 1], [], []>} : vector<128x128xbf16>, vector<128x32xbf16>, vector<128x32xf32> -> vector<128x32xf32>
      %23 = arith.truncf %18 : vector<128x128xf32> to vector<128x128xbf16>
      %c0_19 = arith.constant 0 : index
      %c0_20 = arith.constant 0 : index
      %24 = vector.load %arg7[%c0_19, %c0_20] : memref<128x32xbf16, #tpu.memory_space<vmem>>, vector<128x32xbf16>
      %cst_21 = arith.constant dense<0.000000e+00> : vector<128x32xf32>
      %25 = tpu.matmul %23, %24, %cst_21 {dimension_numbers = #tpu.dot_dimension_numbers<[1], [0], [0], [1], [0, 0, 1, 1], [], []>} : vector<128x128xbf16>, vector<128x32xbf16>, vector<128x32xf32> -> vector<128x32xf32>
      %26 = arith.addf %22, %25 : vector<128x32xf32>
      %c0_22 = arith.constant 0 : index
      %c0_23 = arith.constant 0 : index
      %27 = vector.load %arg8[%c0_22, %c0_23] : memref<1x32xf32, #tpu.memory_space<vmem>>, vector<1x32xf32>
      %28 = vector.broadcast %27 : vector<1x32xf32> to vector<128x32xf32>
      %29 = arith.addf %26, %28 : vector<128x32xf32>
      %c0_24 = arith.constant 0 : index
      %c0_25 = arith.constant 0 : index
      %30 = vector.load %arg9[%c0_24, %c0_25] : memref<128x32xf32, #tpu.memory_space<vmem>>, vector<128x32xf32>
      tpu.vector_store %arg9[%c0_24, %c0_25], %29 {strides = array<i32>} : memref<128x32xf32, #tpu.memory_space<vmem>>, vector<128x32xf32>,
    } else {
    }
    return
  }
  func.func @transform_0(%arg0: i32, %arg1: i32) -> (i32, i32) {
    %c0_i32 = arith.constant 0 : i32
    return %arg0, %arg1 : i32, i32
  }
  func.func @transform_1(%arg0: i32, %arg1: i32) -> (i32, i32) {
    %c0_i32 = arith.constant 0 : i32
    %c0_i32_0 = arith.constant 0 : i32
    return %arg1, %c0_i32 : i32, i32
  }
  func.func @transform_2(%arg0: i32, %arg1: i32) -> (i32, i32) {
    %c0_i32 = arith.constant 0 : i32
    %c0_i32_0 = arith.constant 0 : i32
    return %arg0, %c0_i32 : i32, i32
  }
  func.func @transform_3(%arg0: i32, %arg1: i32) -> (i32, i32) {
    %c0_i32 = arith.constant 0 : i32
    %c0_i32_0 = arith.constant 0 : i32
    return %arg0, %c0_i32 : i32, i32
  }
  func.func @transform_4(%arg0: i32, %arg1: i32) -> (i32, i32) {
    %c0_i32 = arith.constant 0 : i32
    %c0_i32_0 = arith.constant 0 : i32
    %c0_i32_1 = arith.constant 0 : i32
    return %c0_i32, %c0_i32_0 : i32, i32
  }
  func.func @transform_5(%arg0: i32, %arg1: i32) -> (i32, i32) {
    %c0_i32 = arith.constant 0 : i32
    %c0_i32_0 = arith.constant 0 : i32
    %c0_i32_1 = arith.constant 0 : i32
    return %c0_i32, %c0_i32_0 : i32, i32
  }
  func.func @transform_6(%arg0: i32, %arg1: i32) -> (i32, i32) {
    %c0_i32 = arith.constant 0 : i32
    %c0_i32_0 = arith.constant 0 : i32
    %c0_i32_1 = arith.constant 0 : i32
    return %c0_i32, %c0_i32_0 : i32, i32
  }
  func.func @transform_7(%arg0: i32, %arg1: i32) -> (i32, i32) {
    %c0_i32 = arith.constant 0 : i32
    %c0_i32_0 = arith.constant 0 : i32
    return %arg0, %c0_i32 : i32, i32
  }
}

</mosaic_0001>

<llo_original>
// kernel: _sage_forward_impl.3
$region0: #{_sage_forward_impl.3}
  #allocation0 [shape = 'u32[]', space=smem, size = 0x4, offset = 0x4, fixed_abs, tag = 'smem constant byte address 0x4 - core index']
  #allocation1 [shape = 'u32[144,128]{1,0:T(1,128)}', space=vmem, size = 0x12000, scoped, tag = 'internal scratch']
  #allocation2 [shape = 'f32[128,64]{1,0:T(8,128)}', space=vmem, size = 0x10000, scoped, tag = 'scratch operand']
  %s0 = inlined_call_operand.vmem [shape: s8[512,1024], index: 0, kind: input, shape index: {}]
  %s1 = inlined_call_operand.vmem [shape: f32[1024,64], index: 1, kind: input, shape index: {}, may-alias: {1,2}]
  %s2 = inlined_call_operand.vmem [shape: f32[1024,64], index: 2, kind: input, shape index: {}, may-alias: {1,2}]
  %s3 = inlined_call_operand.vmem [shape: f32[512,1], index: 3, kind: input, shape index: {}]
  %s4 = inlined_call_operand.vmem [shape: bf16[64,128], index: 4, kind: input, shape index: {}]
  %s5 = inlined_call_operand.vmem [shape: bf16[64,128], index: 5, kind: input, shape index: {}]
  %s6 = inlined_call_operand.vmem [shape: f32[1,128], index: 6, kind: input, shape index: {}]
  %s7 = inlined_call_operand.vmem [shape: f32[512,128], index: 7, kind: output, shape index: {}]
  %s8 = sld [smem:[#allocation0]]
  $region92: #{_sage_forward_impl.3} parent=0
    _
  %s10 = ssub.s32 1, %s8
  %s11 = scalar_select 0, %s10, %s8
  $region1: #{_sage_forward_impl.3} parent=0
    #allocation3 [shape = 'u8[65536]{0}', space=vmem, size = 0x10000, scoped, tag = 'input window, operand 0']
    loop: start=0, step=1, limit=18
    $region2: #{_sage_forward_impl.3} parent=1 // loop_pre_header
      _
    $region3: #{_sage_forward_impl.3} parent=1 // loop_header
      %s13 = sphi 0, %s17
      %p14 = scmp.ge.s32.totalorder %s13, 18
      %s20 = sphi 0, %s32
      %s21 = sphi 0, %s28
      %s22 = sphi 0, %s20
      %s23 = sphi 0, %s21
      %s24 = sphi 0, %s22
      %s25 = sphi 0, %s23
      %s37 = sphi 0, %s39
      %s40 = sphi 0, %s37
      %s41 = sphi 0, %s40
      %s57 = sphi 0, %s41
      %s63 = sphi 0, %s65
      %s66 = sphi 0, %s63
      %s67 = sphi 0, %s66
      %s83 = sphi 0, %s67
      %s89 = sphi 0, %s91
      %s92 = sphi 0, %s89
      %s93 = sphi 0, %s92
      %s109 = sphi 0, %s93
      %s115 = sphi 0, %s117
      %s118 = sphi 0, %s115
      %s119 = sphi 0, %s118
      %s135 = sphi 0, %s119
      %s139 = sphi 0, %s139
      %s141 = sphi 0, %s139
      %s142 = sphi 0, %s141
      %s156 = sphi 0, %s142
      %s160 = sphi 0, %s160
      %s162 = sphi 0, %s160
      %s163 = sphi 0, %s162
      %s177 = sphi 0, %s163
      %s181 = sphi 0, %s181
      %s183 = sphi 0, %s181
      %s184 = sphi 0, %s183
      %s198 = sphi 0, %s184
      %s204 = sphi 0, %s206
      %s207 = sphi 0, %s204
      %s208 = sphi 0, %s207
      %s224 = sphi 0, %s208
    $region4: #{_sage_forward_impl.3} parent=1 // loop_header_branch
      %16 = sbr.rel (%p14) target = $region8
    $region5: #{_sage_forward_impl.3} parent=1 // loop_body
      %s18 = ssub.s32 %s13, 1
      %s19 = ssub.s32 %s13, 2
      %s26 = sadd.s32 1, %s21
      %p27 = scmp.ge.s32.totalorder %s26, 4
      %s28 = scalar_select %p27, 0, %s26
      %s29 = sadd.s32 1, %s20
      %s30 = scalar_select %p27, %s29, %s20
      %p31 = scmp.ge.s32.totalorder %s30, 4
      %s32 = scalar_select %p31, 0, %s30
      %s33 = ssub.s32 %s20, %s32
      %s34 = ssub.s32 %s21, %s28
      %s35 = sor.u32 %s33, %s34
      %p36 = scmp.eq.s32.totalorder %s35, 0
      %s38 = sadd.s32 %s37, 1
      %s39 = scalar_select %p36, %s37, %s38
      %p42 = pneg %p36
      %p43 = scmp.eq.s32.totalorder %s13, 15
      %p44 = por %p42, %p43
      %p45 = scmp.ne.s32.totalorder %s37, %s40
      %p46 = scmp.eq.s32.totalorder %s13, 0
      %p47 = por %p45, %p46
      %p48 = scmp.ne.s32.totalorder %s37, %s40
      %p49 = scmp.eq.s32.totalorder %s18, 15
      %p50 = por %p48, %p49
      %p51 = scmp.ne.s32.totalorder %s40, %s41
      %p52 = scmp.eq.s32.totalorder %s18, 0
      %p53 = por %p51, %p52
      %p54 = scmp.ne.s32.totalorder %s40, %s41
      %p55 = scmp.eq.s32.totalorder %s19, 15
      %p56 = por %p54, %p55
      %p58 = scmp.ne.s32.totalorder %s41, %s57
      %p59 = scmp.eq.s32.totalorder %s19, 0
      %p60 = por %p58, %p59
      %s61 = ssub.s32 %s21, %s28
      %p62 = scmp.eq.s32.totalorder %s61, 0
      %s64 = sadd.s32 %s63, 1
      %s65 = scalar_select %p62, %s63, %s64
      %p68 = pneg %p62
      %p69 = scmp.eq.s32.totalorder %s13, 15
      %p70 = por %p68, %p69
      %p71 = scmp.ne.s32.totalorder %s63, %s66
      %p72 = scmp.eq.s32.totalorder %s13, 0
      %p73 = por %p71, %p72
      %p74 = scmp.ne.s32.totalorder %s63, %s66
      %p75 = scmp.eq.s32.totalorder %s18, 15
      %p76 = por %p74, %p75
      %p77 = scmp.ne.s32.totalorder %s66, %s67
      %p78 = scmp.eq.s32.totalorder %s18, 0
      %p79 = por %p77, %p78
      %p80 = scmp.ne.s32.totalorder %s66, %s67
      %p81 = scmp.eq.s32.totalorder %s19, 15
      %p82 = por %p80, %p81
      %p84 = scmp.ne.s32.totalorder %s67, %s83
      %p85 = scmp.eq.s32.totalorder %s19, 0
      %p86 = por %p84, %p85
      %s87 = ssub.s32 %s20, %s32
      %p88 = scmp.eq.s32.totalorder %s87, 0
      %s90 = sadd.s32 %s89, 1
      %s91 = scalar_select %p88, %s89, %s90
      %p94 = pneg %p88
      %p95 = scmp.eq.s32.totalorder %s13, 15
      %p96 = por %p94, %p95
      %p97 = scmp.ne.s32.totalorder %s89, %s92
      %p98 = scmp.eq.s32.totalorder %s13, 0
      %p99 = por %p97, %p98
      %p100 = scmp.ne.s32.totalorder %s89, %s92
      %p101 = scmp.eq.s32.totalorder %s18, 15
      %p102 = por %p100, %p101
      %p103 = scmp.ne.s32.totalorder %s92, %s93
      %p104 = scmp.eq.s32.totalorder %s18, 0
      %p105 = por %p103, %p104
      %p106 = scmp.ne.s32.totalorder %s92, %s93
      %p107 = scmp.eq.s32.totalorder %s19, 15
      %p108 = por %p106, %p107
      %p110 = scmp.ne.s32.totalorder %s93, %s109
      %p111 = scmp.eq.s32.totalorder %s19, 0
      %p112 = por %p110, %p111
      %s113 = ssub.s32 %s20, %s32
      %p114 = scmp.eq.s32.totalorder %s113, 0
      %s116 = sadd.s32 %s115, 1
      %s117 = scalar_select %p114, %s115, %s116
      %p120 = pneg %p114
      %p121 = scmp.eq.s32.totalorder %s13, 15
      %p122 = por %p120, %p121
      %p123 = scmp.ne.s32.totalorder %s115, %s118
      %p124 = scmp.eq.s32.totalorder %s13, 0
      %p125 = por %p123, %p124
      %p126 = scmp.ne.s32.totalorder %s115, %s118
      %p127 = scmp.eq.s32.totalorder %s18, 15
      %p128 = por %p126, %p127
      %p129 = scmp.ne.s32.totalorder %s118, %s119
      %p130 = scmp.eq.s32.totalorder %s18, 0
      %p131 = por %p129, %p130
      %p132 = scmp.ne.s32.totalorder %s118, %s119
      %p133 = scmp.eq.s32.totalorder %s19, 15
      %p134 = por %p132, %p133
      %p136 = scmp.ne.s32.totalorder %s119, %s135
      %p137 = scmp.eq.s32.totalorder %s19, 0
      %p138 = por %p136, %p137
      %s140 = sadd.s32 %s139, 1
      %p143 = scmp.eq.s32.totalorder %s13, 15
      %p144 = scmp.ne.s32.totalorder %s139, %s141
      %p145 = scmp.eq.s32.totalorder %s13, 0
      %p146 = por %p144, %p145
      %p147 = scmp.ne.s32.totalorder %s139, %s141
      %p148 = scmp.eq.s32.totalorder %s18, 15
      %p149 = por %p147, %p148
      %p150 = scmp.ne.s32.totalorder %s141, %s142
      %p151 = scmp.eq.s32.totalorder %s18, 0
      %p152 = por %p150, %p151
      %p153 = scmp.ne.s32.totalorder %s141, %s142
      %p154 = scmp.eq.s32.totalorder %s19, 15
      %p155 = por %p153, %p154
      %p157 = scmp.ne.s32.totalorder %s142, %s156
      %p158 = scmp.eq.s32.totalorder %s19, 0
      %p159 = por %p157, %p158
      %s161 = sadd.s32 %s160, 1
      %p164 = scmp.eq.s32.totalorder %s13, 15
      %p165 = scmp.ne.s32.totalorder %s160, %s162
      %p166 = scmp.eq.s32.totalorder %s13, 0
      %p167 = por %p165, %p166
      %p168 = scmp.ne.s32.totalorder %s160, %s162
      %p169 = scmp.eq.s32.totalorder %s18, 15
      %p170 = por %p168, %p169
      %p171 = scmp.ne.s32.totalorder %s162, %s163
      %p172 = scmp.eq.s32.totalorder %s18, 0
      %p173 = por %p171, %p172
      %p174 = scmp.ne.s32.totalorder %s162, %s163
      %p175 = scmp.eq.s32.totalorder %s19, 15
      %p176 = por %p174, %p175
      %p178 = scmp.ne.s32.totalorder %s163, %s177
      %p179 = scmp.eq.s32.totalorder %s19, 0
      %p180 = por %p178, %p179
      %s182 = sadd.s32 %s181, 1
      %p185 = scmp.eq.s32.totalorder %s13, 15
      %p186 = scmp.ne.s32.totalorder %s181, %s183
      %p187 = scmp.eq.s32.totalorder %s13, 0
      %p188 = por %p186, %p187
      %p189 = scmp.ne.s32.totalorder %s181, %s183
      %p190 = scmp.eq.s32.totalorder %s18, 15
      %p191 = por %p189, %p190
      %p192 = scmp.ne.s32.totalorder %s183, %s184
      %p193 = scmp.eq.s32.totalorder %s18, 0
      %p194 = por %p192, %p193
      %p195 = scmp.ne.s32.totalorder %s183, %s184
      %p196 = scmp.eq.s32.totalorder %s19, 15
      %p197 = por %p195, %p196
      %p199 = scmp.ne.s32.totalorder %s184, %s198
      %p200 = scmp.eq.s32.totalorder %s19, 0
      %p201 = por %p199, %p200
      %s202 = ssub.s32 %s20, %s32
      %p203 = scmp.eq.s32.totalorder %s202, 0
      %s205 = sadd.s32 %s204, 1
      %s206 = scalar_select %p203, %s204, %s205
      %p209 = pneg %p203
      %p210 = scmp.eq.s32.totalorder %s13, 15
      %p211 = por %p209, %p210
      %p212 = scmp.ne.s32.totalorder %s204, %s207
      %p213 = scmp.eq.s32.totalorder %s13, 0
      %p214 = por %p212, %p213
      %p215 = scmp.ne.s32.totalorder %s204, %s207
      %p216 = scmp.eq.s32.totalorder %s18, 15
      %p217 = por %p215, %p216
      %p218 = scmp.ne.s32.totalorder %s207, %s208
      %p219 = scmp.eq.s32.totalorder %s18, 0
      %p220 = por %p218, %p219
      %p221 = scmp.ne.s32.totalorder %s207, %s208
      %p222 = scmp.eq.s32.totalorder %s19, 15
      %p223 = por %p221, %p222
      %p225 = scmp.ne.s32.totalorder %s208, %s224
      %p226 = scmp.eq.s32.totalorder %s19, 0
      %p227 = por %p225, %p226
      %p228 = scmp.le.s32.totalorder 1, %s13
      %p229 = scmp.lt.s32.totalorder %s13, 17
      %p230 = pnand %p228, %p229
      %p231 = pneg %p230
      // Predicated region
      $region9: #{_sage_forward_impl.3} parent=5 // pred_check
        _
      $region10: #{_sage_forward_impl.3} parent=5 // pred_check_branch
        %233 = sbr.rel (%p230) target = $region12
      $region11: #{_sage_forward_impl.3} parent=5 // pred_region
        %s234 = ssub.s32 %s13, 1
        // Predicated region
        $region13: #{_sage_forward_impl.3} parent=11 // pred_check
          %p235 = pneg %p152
        $region14: #{_sage_forward_impl.3} parent=11 // pred_check_branch
          %237 = sbr.rel (%p235) target = $region16
        $region15: #{_sage_forward_impl.3} parent=11 // pred_region
          _
        $region16: #{_sage_forward_impl.3} parent=11 // pred_fallthru
          _
        // Predicated region
        $region17: #{_sage_forward_impl.3} parent=11 // pred_check
          %p238 = pneg %p173
        $region18: #{_sage_forward_impl.3} parent=11 // pred_check_branch
          %240 = sbr.rel (%p238) target = $region20
        $region19: #{_sage_forward_impl.3} parent=11 // pred_region
          _
        $region20: #{_sage_forward_impl.3} parent=11 // pred_fallthru
          _
        // Predicated region
        $region21: #{_sage_forward_impl.3} parent=11 // pred_check
          %p241 = pneg %p194
        $region22: #{_sage_forward_impl.3} parent=11 // pred_check_branch
          %243 = sbr.rel (%p241) target = $region24
        $region23: #{_sage_forward_impl.3} parent=11 // pred_region
          _
        $region24: #{_sage_forward_impl.3} parent=11 // pred_fallthru
          _
      $region12: #{_sage_forward_impl.3} parent=5 // pred_fallthru
        _
      %p244 = scmp.lt.s32.totalorder %s13, 16
      // Predicated region
      $region25: #{_sage_forward_impl.3} parent=5 // pred_check
        %p245 = pneg %p244
      $region26: #{_sage_forward_impl.3} parent=5 // pred_check_branch
        %247 = sbr.rel (%p245) target = $region28
      $region27: #{_sage_forward_impl.3} parent=5 // pred_region
        // Predicated region
        $region29: #{_sage_forward_impl.3} parent=27 // pred_check
          %p248 = pneg %p47
        $region30: #{_sage_forward_impl.3} parent=27 // pred_check_branch
          %250 = sbr.rel (%p248) target = $region32
        $region31: #{_sage_forward_impl.3} parent=27 // pred_region
          %s251 = sand.u32 %s37, 1
          %s252 = sand.u32 %s37, 1
          %s253 = smul.addr %s252, 64
          %s254 = scalar_lea.vmem [#allocation3], %s253
          %s255 = smul.u32 4, %s20
          %s256 = smul.u32 2, %s21
          %s257 = smul.addr %s255, 8
          %s258 = sadd.s32 %s256, %s257
          %s259 = smul.addr %s258, 8
          %s260 = scalar_lea.vmem %s0, %s259
          // Predicated region
          $region33: #{_sage_forward_impl.3} parent=31 // pred_check
            _
          $region34: #{_sage_forward_impl.3} parent=31 // pred_check_branch
            %262 = sbr.rel (0) target = $region36
          $region35: #{_sage_forward_impl.3} parent=31 // pred_region
            // Predicated region
            $region37: #{_sage_forward_impl.3} parent=35 // pred_check
              _
            $region38: #{_sage_forward_impl.3} parent=35 // pred_check_branch
              %264 = sbr.rel (0) target = $region40
            $region39: #{_sage_forward_impl.3} parent=35 // pred_region
              loop: start=0, step=1, limit=1
              $region41: #{_sage_forward_impl.3} parent=39 // loop_pre_header
                _
              $region42: #{_sage_forward_impl.3} parent=39 // loop_header
                %s266 = sphi 0, %s270
                %p267 = scmp.ge.s32.totalorder %s266, 1
                %s271 = sphi %s260, %s260
                %s272 = sphi %s254, %s254
              $region43: #{_sage_forward_impl.3} parent=39 // loop_header_branch
                %269 = sbr.rel (%p267) target = $region47
              $region44: #{_sage_forward_impl.3} parent=39 // loop_body
                %v273 = vld [vmem:[%s271] sm:$0xff]
                %274 = vst [vmem:[%s272] sm:$0xff] %v273
                %v275 = vld [vmem:[%s271 + $0x8] sm:$0xff]
                %276 = vst [vmem:[%s272 + $0x8] sm:$0xff] %v275
                %v277 = vld [vmem:[%s271 + $0x40] sm:$0xff]
                %278 = vst [vmem:[%s272 + $0x10] sm:$0xff] %v277
                %v279 = vld [vmem:[%s271 + $0x48] sm:$0xff]
                %280 = vst [vmem:[%s272 + $0x18] sm:$0xff] %v279
                %v281 = vld [vmem:[%s271 + $0x80] sm:$0xff]
                %282 = vst [vmem:[%s272 + $0x20] sm:$0xff] %v281
                %v283 = vld [vmem:[%s271 + $0x88] sm:$0xff]
                %284 = vst [vmem:[%s272 + $0x28] sm:$0xff] %v283
                %v285 = vld [vmem:[%s271 + $0xc0] sm:$0xff]
                %286 = vst [vmem:[%s272 + $0x30] sm:$0xff] %v285
                %v287 = vld [vmem:[%s271 + $0xc8] sm:$0xff]
                %288 = vst [vmem:[%s272 + $0x38] sm:$0xff] %v287
              $region45: #{_sage_forward_impl.3} parent=39 // loop_footer
                %s270 = sadd.s32 1, %s266
              $region46: #{_sage_forward_impl.3} parent=39 // loop_footer_branch
                %265 = sbr.rel target = $region42
              $region47: #{_sage_forward_impl.3} parent=39 // loop_exit
                _
            $region40: #{_sage_forward_impl.3} parent=35 // pred_fallthru
              _
            // Predicated region
            $region48: #{_sage_forward_impl.3} parent=35 // pred_check
              _
            $region49: #{_sage_forward_impl.3} parent=35 // pred_check_branch
              %290 = sbr.rel target = $region51
            $region50: #{_sage_forward_impl.3} parent=35 // pred_region
              _
            $region51: #{_sage_forward_impl.3} parent=35 // pred_fallthru
              _
          $region36: #{_sage_forward_impl.3} parent=31 // pred_fallthru
            _
          %291 = vnop
        $region32: #{_sage_forward_impl.3} parent=27 // pred_fallthru
          _
        // Predicated region
        $region52: #{_sage_forward_impl.3} parent=27 // pred_check
          %p292 = pneg %p73
        $region53: #{_sage_forward_impl.3} parent=27 // pred_check_branch
          %294 = sbr.rel (%p292) target = $region55
        $region54: #{_sage_forward_impl.3} parent=27 // pred_region
          %s295 = smul.u32 32, %s21
          %p296 = scmp.lt.s32.totalorder %s295, 127
          %s297 = scalar_select %p296, %s295, 127
          %s298 = smul.addr %s297, 8
          %s299 = scalar_lea.vmem %s1, %s298
          %s300 = smul.u32 32, %s21
        $region55: #{_sage_forward_impl.3} parent=27 // pred_fallthru
          _
        // Predicated region
        $region56: #{_sage_forward_impl.3} parent=27 // pred_check
          %p301 = pneg %p99
        $region57: #{_sage_forward_impl.3} parent=27 // pred_check_branch
          %303 = sbr.rel (%p301) target = $region59
        $region58: #{_sage_forward_impl.3} parent=27 // pred_region
          %s304 = smul.u32 16, %s20
          %p305 = scmp.lt.s32.totalorder %s304, 127
          %s306 = scalar_select %p305, %s304, 127
          %s307 = smul.addr %s306, 8
          %s308 = scalar_lea.vmem %s2, %s307
          %s309 = smul.u32 16, %s20
        $region59: #{_sage_forward_impl.3} parent=27 // pred_fallthru
          _
        // Predicated region
        $region60: #{_sage_forward_impl.3} parent=27 // pred_check
          %p310 = pneg %p125
        $region61: #{_sage_forward_impl.3} parent=27 // pred_check_branch
          %312 = sbr.rel (%p310) target = $region63
        $region62: #{_sage_forward_impl.3} parent=27 // pred_region
          %s313 = smul.u32 16, %s20
          %p314 = scmp.lt.s32.totalorder %s313, 63
          %s315 = scalar_select %p314, %s313, 63
          %s316 = smul.addr %s315, 8
          %s317 = scalar_lea.vmem %s3, %s316
          %s318 = smul.u32 16, %s20
        $region63: #{_sage_forward_impl.3} parent=27 // pred_fallthru
          _
      $region28: #{_sage_forward_impl.3} parent=5 // pred_fallthru
        _
      %p319 = scmp.le.s32.totalorder 1, %s13
      %p320 = scmp.lt.s32.totalorder %s13, 17
      %p321 = pnand %p319, %p320
      %p322 = pneg %p321
      // Predicated region
      $region64: #{_sage_forward_impl.3} parent=5 // pred_check
        _
      $region65: #{_sage_forward_impl.3} parent=5 // pred_check_branch
        %324 = sbr.rel (%p321) target = $region67
      $region66: #{_sage_forward_impl.3} parent=5 // pred_region
        %s325 = ssub.s32 %s13, 1
        %s326 = sand.u32 %s40, 1
        %s327 = sand.u32 %s40, 1
        %s328 = smul.addr %s327, 64
        %s329 = scalar_lea.vmem [#allocation3], %s328
        // Predicated region
        $region68: #{_sage_forward_impl.3} parent=66 // pred_check
          %p330 = pneg %p53
        $region69: #{_sage_forward_impl.3} parent=66 // pred_check_branch
          %332 = sbr.rel (%p330) target = $region71
        $region70: #{_sage_forward_impl.3} parent=66 // pred_region
          _
        $region71: #{_sage_forward_impl.3} parent=66 // pred_fallthru
          _
        %s333 = sand.u32 %s40, 1
        %s334 = sand.u32 %s40, 1
        %s335 = smul.addr %s334, 64
        %s336 = scalar_lea.vmem [#allocation3], %s335
        %p337 = pneg %p53
        %p338 = pneg %p50
        %s339 = smul.u32 32, %s23
        %p340 = scmp.lt.s32.totalorder %s339, 127
        %s341 = scalar_select %p340, %s339, 127
        %s342 = smul.addr %s341, 8
        %s343 = scalar_lea.vmem %s1, %s342
        %p344 = pneg %p79
        %p345 = pneg %p76
        %s346 = smul.u32 16, %s22
        %p347 = scmp.lt.s32.totalorder %s346, 127
        %s348 = scalar_select %p347, %s346, 127
        %s349 = smul.addr %s348, 8
        %s350 = scalar_lea.vmem %s2, %s349
        %p351 = pneg %p105
        %p352 = pneg %p102
        %s353 = smul.u32 16, %s22
        %p354 = scmp.lt.s32.totalorder %s353, 63
        %s355 = scalar_select %p354, %s353, 63
        %s356 = smul.addr %s355, 8
        %s357 = scalar_lea.vmem %s3, %s356
        %p358 = pneg %p131
        %p359 = pneg %p128
        %p360 = pneg %p152
        %p361 = pneg %p149
        %p362 = pneg %p173
        %p363 = pneg %p170
        %p364 = pneg %p194
        %p365 = pneg %p191
        %p366 = pneg %p220
        %p367 = pneg %p217
        %s368 = smul.u32 16, %s22
        %p369 = scmp.lt.s32.totalorder %s368, 63
        %s370 = scalar_select %p369, %s368, 63
        %s371 = smul.addr %s370, 8
        %s372 = scalar_lea.vmem %s7, %s371
        %s373 = smul.u32 4, %s22
        %s374 = smul.u32 2, %s23
        %s375 = smul.u32 32, %s23
        %p376 = scmp.lt.s32.totalorder %s375, 127
        %s377 = scalar_select %p376, %s375, 127
        %s378 = smul.addr %s377, 8
        %s379 = scalar_lea.vmem %s1, %s378
        %s380 = smul.u32 32, %s23
        %s381 = smul.u32 16, %s22
        %p382 = scmp.lt.s32.totalorder %s381, 127
        %s383 = scalar_select %p382, %s381, 127
        %s384 = smul.addr %s383, 8
        %s385 = scalar_lea.vmem %s2, %s384
        %s386 = smul.u32 16, %s22
        %s387 = smul.u32 16, %s22
        %p388 = scmp.lt.s32.totalorder %s387, 63
        %s389 = scalar_select %p388, %s387, 63
        %s390 = smul.addr %s389, 8
        %s391 = scalar_lea.vmem %s3, %s390
        %s392 = smul.u32 16, %s22
        %s393 = smul.u32 16, %s22
        %p394 = scmp.lt.s32.totalorder %s393, 63
        %s395 = scalar_select %p394, %s393, 63
        %s396 = smul.addr %s395, 8
        %s397 = scalar_lea.vmem %s7, %s396
        %s398 = smul.u32 16, %s22
        %p400 = scmp.eq.s32.totalorder %s23, 0
        // Predicated region
        $region72: #{_sage_forward_impl.3} parent=66 // pred_check
          %p401 = pneg %p400
        $region73: #{_sage_forward_impl.3} parent=66 // pred_check_branch
          %403 = sbr.rel (%p401) target = $region75
        $region74: #{_sage_forward_impl.3} parent=66 // pred_region
          %vm404 = vcmask 523264
          %405 = vst.msk [vmem:[#allocation2] sm:$0xff] %vm404, 0.0
          %406 = vst.msk [vmem:[#allocation2 + $0x8] sm:$0xff] %vm404, 0.0
          %407 = vst.msk [vmem:[#allocation2 + $0x10] sm:$0xff] %vm404, 0.0
          %408 = vst.msk [vmem:[#allocation2 + $0x18] sm:$0xff] %vm404, 0.0
          %409 = vst.msk [vmem:[#allocation2 + $0x20] sm:$0xff] %vm404, 0.0
          %410 = vst.msk [vmem:[#allocation2 + $0x28] sm:$0xff] %vm404, 0.0
          %411 = vst.msk [vmem:[#allocation2 + $0x30] sm:$0xff] %vm404, 0.0
          %412 = vst.msk [vmem:[#allocation2 + $0x38] sm:$0xff] %vm404, 0.0
          %413 = vst.msk [vmem:[#allocation2 + $0x40] sm:$0xff] %vm404, 0.0
          %414 = vst.msk [vmem:[#allocation2 + $0x48] sm:$0xff] %vm404, 0.0
          %415 = vst.msk [vmem:[#allocation2 + $0x50] sm:$0xff] %vm404, 0.0
          %416 = vst.msk [vmem:[#allocation2 + $0x58] sm:$0xff] %vm404, 0.0
          %417 = vst.msk [vmem:[#allocation2 + $0x60] sm:$0xff] %vm404, 0.0
          %418 = vst.msk [vmem:[#allocation2 + $0x68] sm:$0xff] %vm404, 0.0
          %419 = vst.msk [vmem:[#allocation2 + $0x70] sm:$0xff] %vm404, 0.0
          %420 = vst.msk [vmem:[#allocation2 + $0x78] sm:$0xff] %vm404, 0.0
        $region75: #{_sage_forward_impl.3} parent=66 // pred_fallthru
          _
        %v421 = vld [vmem:[%s329] sm:$0xff]
        %v422 = vld [vmem:[%s329 + $0x8] sm:$0xff]
        %v423 = vld [vmem:[%s329 + $0x10] sm:$0xff]
        %v424 = vld [vmem:[%s329 + $0x18] sm:$0xff]
        %v425 = vld [vmem:[%s329 + $0x20] sm:$0xff]
        %v426 = vld [vmem:[%s329 + $0x28] sm:$0xff]
        %v427 = vld [vmem:[%s329 + $0x30] sm:$0xff]
        %v428 = vld [vmem:[%s329 + $0x38] sm:$0xff]
        %v429 = vunpack.c.l.s8.bf16 %v421
        %v430 = vunpack.c.l.s8.bf16 %v422
        %v431 = vunpack.c.h.s8.bf16 %v421
        %v432 = vunpack.c.h.s8.bf16 %v422
        %v433 = vunpack.c.l.s8.bf16 %v423
        %v434 = vunpack.c.l.s8.bf16 %v424
        %v435 = vunpack.c.h.s8.bf16 %v423
        %v436 = vunpack.c.h.s8.bf16 %v424
        %v437 = vunpack.c.l.s8.bf16 %v425
        %v438 = vunpack.c.l.s8.bf16 %v426
        %v439 = vunpack.c.h.s8.bf16 %v425
        %v440 = vunpack.c.h.s8.bf16 %v426
        %v441 = vunpack.c.l.s8.bf16 %v427
        %v442 = vunpack.c.l.s8.bf16 %v428
        %v443 = vunpack.c.h.s8.bf16 %v427
        %v444 = vunpack.c.h.s8.bf16 %v428
        %v445 = vld [vmem:[%s379] sm:$0xff]
        %v446 = vld [vmem:[%s379 + $0x8] sm:$0xff]
        %v447 = vld [vmem:[%s379 + $0x10] sm:$0xff]
        %v448 = vld [vmem:[%s379 + $0x18] sm:$0xff]
        %v449 = vld [vmem:[%s379 + $0x20] sm:$0xff]
        %v450 = vld [vmem:[%s379 + $0x28] sm:$0xff]
        %v451 = vld [vmem:[%s379 + $0x30] sm:$0xff]
        %v452 = vld [vmem:[%s379 + $0x38] sm:$0xff]
        %v453 = vld [vmem:[%s379 + $0x40] sm:$0xff]
        %v454 = vld [vmem:[%s379 + $0x48] sm:$0xff]
        %v455 = vld [vmem:[%s379 + $0x50] sm:$0xff]
        %v456 = vld [vmem:[%s379 + $0x58] sm:$0xff]
        %v457 = vld [vmem:[%s379 + $0x60] sm:$0xff]
        %v458 = vld [vmem:[%s379 + $0x68] sm:$0xff]
        %v459 = vld [vmem:[%s379 + $0x70] sm:$0xff]
        %v460 = vld [vmem:[%s379 + $0x78] sm:$0xff]
        %v461 = vld [vmem:[%s379 + $0x80] sm:$0xff]
        %v462 = vld [vmem:[%s379 + $0x88] sm:$0xff]
        %v463 = vld [vmem:[%s379 + $0x90] sm:$0xff]
        %v464 = vld [vmem:[%s379 + $0x98] sm:$0xff]
        %v465 = vld [vmem:[%s379 + $0xa0] sm:$0xff]
        %v466 = vld [vmem:[%s379 + $0xa8] sm:$0xff]
        %v467 = vld [vmem:[%s379 + $0xb0] sm:$0xff]
        %v468 = vld [vmem:[%s379 + $0xb8] sm:$0xff]
        %v469 = vld [vmem:[%s379 + $0xc0] sm:$0xff]
        %v470 = vld [vmem:[%s379 + $0xc8] sm:$0xff]
        %v471 = vld [vmem:[%s379 + $0xd0] sm:$0xff]
        %v472 = vld [vmem:[%s379 + $0xd8] sm:$0xff]
        %v473 = vld [vmem:[%s379 + $0xe0] sm:$0xff]
        %v474 = vld [vmem:[%s379 + $0xe8] sm:$0xff]
        %v475 = vld [vmem:[%s379 + $0xf0] sm:$0xff]
        %v476 = vld [vmem:[%s379 + $0xf8] sm:$0xff]
        %v477 = vpack.c.bf16 %v446, %v445
        %v478 = vpack.c.bf16 %v448, %v447
        %v479 = vpack.c.bf16 %v450, %v449
        %v480 = vpack.c.bf16 %v452, %v451
        %v481 = vpack.c.bf16 %v454, %v453
        %v482 = vpack.c.bf16 %v456, %v455
        %v483 = vpack.c.bf16 %v458, %v457
        %v484 = vpack.c.bf16 %v460, %v459
        %v485 = vpack.c.bf16 %v462, %v461
        %v486 = vpack.c.bf16 %v464, %v463
        %v487 = vpack.c.bf16 %v466, %v465
        %v488 = vpack.c.bf16 %v468, %v467
        %v489 = vpack.c.bf16 %v470, %v469
        %v490 = vpack.c.bf16 %v472, %v471
        %v491 = vpack.c.bf16 %v474, %v473
        %v492 = vpack.c.bf16 %v476, %v475
        %v493 = vld [vmem:[#allocation2] sm:$0xff]
        %v494 = vld [vmem:[#allocation2 + $0x8] sm:$0xff]
        %v495 = vld [vmem:[#allocation2 + $0x10] sm:$0xff]
        %v496 = vld [vmem:[#allocation2 + $0x18] sm:$0xff]
        %v497 = vld [vmem:[#allocation2 + $0x20] sm:$0xff]
        %v498 = vld [vmem:[#allocation2 + $0x28] sm:$0xff]
        %v499 = vld [vmem:[#allocation2 + $0x30] sm:$0xff]
        %v500 = vld [vmem:[#allocation2 + $0x38] sm:$0xff]
        %v501 = vld [vmem:[#allocation2 + $0x40] sm:$0xff]
        %v502 = vld [vmem:[#allocation2 + $0x48] sm:$0xff]
        %v503 = vld [vmem:[#allocation2 + $0x50] sm:$0xff]
        %v504 = vld [vmem:[#allocation2 + $0x58] sm:$0xff]
        %v505 = vld [vmem:[#allocation2 + $0x60] sm:$0xff]
        %v506 = vld [vmem:[#allocation2 + $0x68] sm:$0xff]
        %v507 = vld [vmem:[#allocation2 + $0x70] sm:$0xff]
        %v508 = vld [vmem:[#allocation2 + $0x78] sm:$0xff]
        %509 = vmatprep.subr.bf16.mxu0 0
        %510 = vmatpush1.bf16.msra.mxu0 %v477
        %511 = vmatprep.subr.bf16.mxu0 0
        %512 = vmatpush1.bf16.msra.mxu0 %v478
        %513 = vmatprep.subr.bf16.mxu0 0
        %514 = vmatpush1.bf16.msra.mxu0 %v479
        %515 = vmatprep.subr.bf16.mxu0 0
        %516 = vmatpush1.bf16.msra.mxu0 %v480
        %517 = vmatprep.subr.bf16.mxu0 0
        %518 = vmatpush1.bf16.msra.mxu0 %v481
        %519 = vmatprep.subr.bf16.mxu0 0
        %520 = vmatpush1.bf16.msra.mxu0 %v482
        %521 = vmatprep.subr.bf16.mxu0 0
        %522 = vmatpush1.bf16.msra.mxu0 %v483
        %523 = vmatprep.subr.bf16.mxu0 0
        %524 = vmatpush1.bf16.msra.mxu0 %v484
        %525 = vmatprep.subr.bf16.mxu0 0
        %526 = vmatpush1.bf16.msra.mxu0 %v485
        %527 = vmatprep.subr.bf16.mxu0 0
        %528 = vmatpush1.bf16.msra.mxu0 %v486
        %529 = vmatprep.subr.bf16.mxu0 0
        %530 = vmatpush1.bf16.msra.mxu0 %v487
        %531 = vmatprep.subr.bf16.mxu0 0
        %532 = vmatpush1.bf16.msra.mxu0 %v488
        %533 = vmatprep.subr.bf16.mxu0 0
        %534 = vmatpush1.bf16.msra.mxu0 %v489
        %535 = vmatprep.subr.bf16.mxu0 0
        %536 = vmatpush1.bf16.msra.mxu0 %v490
        %537 = vmatprep.subr.bf16.mxu0 0
        %538 = vmatpush1.bf16.msra.mxu0 %v491
        %539 = vmatprep.subr.bf16.mxu0 0
        %540 = vmatpush1.bf16.msra.mxu0 %v492
        %541 = vmatprep.mubr.bf16.mxu0 %v430
        %542 = vmatmul.mubr.bf16.gmra.mrb[0].mxu0 %v429
        %v543 = vpop.f32.mrb[0].mxu0
        %v544 = vadd.f32 0.0, %v543
        %v545 = vpop.f32.mrb[0].mxu0
        %v546 = vpop.f32.mrb[0].mxu0
        %v547 = vadd.f32 0.0, %v546
        %v548 = vpop.f32.mrb[0].mxu0
        %549 = vmatprep.mubr.bf16.mxu0 %v432
        %550 = vmatmul.mubr.bf16.gmra.mrb[0].mxu0 %v431
        %v551 = vpop.f32.mrb[0].mxu0
        %v552 = vadd.f32 0.0, %v551
        %v553 = vpop.f32.mrb[0].mxu0
        %v554 = vpop.f32.mrb[0].mxu0
        %v555 = vadd.f32 0.0, %v554
        %v556 = vpop.f32.mrb[0].mxu0
        %557 = vmatprep.mubr.bf16.mxu0 %v434
        %558 = vmatmul.mubr.bf16.gmra.mrb[0].mxu0 %v433
        %v559 = vpop.f32.mrb[0].mxu0
        %v560 = vadd.f32 0.0, %v559
        %v561 = vpop.f32.mrb[0].mxu0
        %v562 = vpop.f32.mrb[0].mxu0
        %v563 = vadd.f32 0.0, %v562
        %v564 = vpop.f32.mrb[0].mxu0
        %565 = vmatprep.mubr.bf16.mxu0 %v436
        %566 = vmatmul.mubr.bf16.gmra.mrb[0].mxu0 %v435
        %v567 = vpop.f32.mrb[0].mxu0
        %v568 = vadd.f32 0.0, %v567
        %v569 = vpop.f32.mrb[0].mxu0
        %v570 = vpop.f32.mrb[0].mxu0
        %v571 = vadd.f32 0.0, %v570
        %v572 = vpop.f32.mrb[0].mxu0
        %573 = vmatprep.mubr.bf16.mxu0 %v438
        %574 = vmatmul.mubr.bf16.gmra.mrb[0].mxu0 %v437
        %v575 = vpop.f32.mrb[0].mxu0
        %v576 = vadd.f32 0.0, %v575
        %v577 = vpop.f32.mrb[0].mxu0
        %v578 = vpop.f32.mrb[0].mxu0
        %v579 = vadd.f32 0.0, %v578
        %v580 = vpop.f32.mrb[0].mxu0
        %581 = vmatprep.mubr.bf16.mxu0 %v440
        %582 = vmatmul.mubr.bf16.gmra.mrb[0].mxu0 %v439
        %v583 = vpop.f32.mrb[0].mxu0
        %v584 = vadd.f32 0.0, %v583
        %v585 = vpop.f32.mrb[0].mxu0
        %v586 = vpop.f32.mrb[0].mxu0
        %v587 = vadd.f32 0.0, %v586
        %v588 = vpop.f32.mrb[0].mxu0
        %589 = vmatprep.mubr.bf16.mxu0 %v442
        %590 = vmatmul.mubr.bf16.gmra.mrb[0].mxu0 %v441
        %v591 = vpop.f32.mrb[0].mxu0
        %v592 = vadd.f32 0.0, %v591
        %v593 = vpop.f32.mrb[0].mxu0
        %v594 = vpop.f32.mrb[0].mxu0
        %v595 = vadd.f32 0.0, %v594
        %v596 = vpop.f32.mrb[0].mxu0
        %597 = vmatprep.mubr.bf16.mxu0 %v444
        %598 = vmatmul.mubr.bf16.gmra.mrb[0].mxu0 %v443
        %v599 = vpop.f32.mrb[0].mxu0
        %v600 = vadd.f32 0.0, %v599
        %v601 = vpop.f32.mrb[0].mxu0
        %v602 = vpop.f32.mrb[0].mxu0
        %v603 = vadd.f32 0.0, %v602
        %v604 = vpop.f32.mrb[0].mxu0
        %605 = vdwg.mxu0
        %v606 = vadd.f32 %v493, %v544
        %v607 = vadd.f32 %v494, %v547
        %v608 = vadd.f32 %v495, %v552
        %v609 = vadd.f32 %v496, %v555
        %v610 = vadd.f32 %v497, %v560
        %v611 = vadd.f32 %v498, %v563
        %v612 = vadd.f32 %v499, %v568
        %v613 = vadd.f32 %v500, %v571
        %v614 = vadd.f32 %v501, %v576
        %v615 = vadd.f32 %v502, %v579
        %v616 = vadd.f32 %v503, %v584
        %v617 = vadd.f32 %v504, %v587
        %v618 = vadd.f32 %v505, %v592
        %v619 = vadd.f32 %v506, %v595
        %v620 = vadd.f32 %v507, %v600
        %v621 = vadd.f32 %v508, %v603
        %vm622 = vcmask 523264
        %623 = vst.msk [vmem:[#allocation2] sm:$0xff] %vm622, %v606
        %624 = vst.msk [vmem:[#allocation2 + $0x8] sm:$0xff] %vm622, %v607
        %625 = vst.msk [vmem:[#allocation2 + $0x10] sm:$0xff] %vm622, %v608
        %626 = vst.msk [vmem:[#allocation2 + $0x18] sm:$0xff] %vm622, %v609
        %627 = vst.msk [vmem:[#allocation2 + $0x20] sm:$0xff] %vm622, %v610
        %628 = vst.msk [vmem:[#allocation2 + $0x28] sm:$0xff] %vm622, %v611
        %629 = vst.msk [vmem:[#allocation2 + $0x30] sm:$0xff] %vm622, %v612
        %630 = vst.msk [vmem:[#allocation2 + $0x38] sm:$0xff] %vm622, %v613
        %631 = vst.msk [vmem:[#allocation2 + $0x40] sm:$0xff] %vm622, %v614
        %632 = vst.msk [vmem:[#allocation2 + $0x48] sm:$0xff] %vm622, %v615
        %633 = vst.msk [vmem:[#allocation2 + $0x50] sm:$0xff] %vm622, %v616
        %634 = vst.msk [vmem:[#allocation2 + $0x58] sm:$0xff] %vm622, %v617
        %635 = vst.msk [vmem:[#allocation2 + $0x60] sm:$0xff] %vm622, %v618
        %636 = vst.msk [vmem:[#allocation2 + $0x68] sm:$0xff] %vm622, %v619
        %637 = vst.msk [vmem:[#allocation2 + $0x70] sm:$0xff] %vm622, %v620
        %638 = vst.msk [vmem:[#allocation2 + $0x78] sm:$0xff] %vm622, %v621
        %p639 = scmp.eq.s32.totalorder %s23, 3
        // Predicated region
        $region76: #{_sage_forward_impl.3} parent=66 // pred_check
          %p640 = pneg %p639
        $region77: #{_sage_forward_impl.3} parent=66 // pred_check_branch
          %642 = sbr.rel (%p640) target = $region79
        $region78: #{_sage_forward_impl.3} parent=66 // pred_region
          %v643 = vld [vmem:[#allocation2] sm:$0xff]
          %v644 = vld [vmem:[#allocation2 + $0x8] sm:$0xff]
          %v645 = vld [vmem:[#allocation2 + $0x10] sm:$0xff]
          %v646 = vld [vmem:[#allocation2 + $0x18] sm:$0xff]
          %v647 = vld [vmem:[#allocation2 + $0x20] sm:$0xff]
          %v648 = vld [vmem:[#allocation2 + $0x28] sm:$0xff]
          %v649 = vld [vmem:[#allocation2 + $0x30] sm:$0xff]
          %v650 = vld [vmem:[#allocation2 + $0x38] sm:$0xff]
          %v651 = vld [vmem:[#allocation2 + $0x40] sm:$0xff]
          %v652 = vld [vmem:[#allocation2 + $0x48] sm:$0xff]
          %v653 = vld [vmem:[#allocation2 + $0x50] sm:$0xff]
          %v654 = vld [vmem:[#allocation2 + $0x58] sm:$0xff]
          %v655 = vld [vmem:[#allocation2 + $0x60] sm:$0xff]
          %v656 = vld [vmem:[#allocation2 + $0x68] sm:$0xff]
          %v657 = vld [vmem:[#allocation2 + $0x70] sm:$0xff]
          %v658 = vld [vmem:[#allocation2 + $0x78] sm:$0xff]
          %v659 = vld [vmem:[%s391] sm:$0xff]
          %v660 = vld [vmem:[%s391 + $0x8] sm:$0xff]
          %v661 = vld [vmem:[%s391 + $0x10] sm:$0xff]
          %v662 = vld [vmem:[%s391 + $0x18] sm:$0xff]
          %v663 = vld [vmem:[%s391 + $0x20] sm:$0xff]
          %v664 = vld [vmem:[%s391 + $0x28] sm:$0xff]
          %v665 = vld [vmem:[%s391 + $0x30] sm:$0xff]
          %v666 = vld [vmem:[%s391 + $0x38] sm:$0xff]
          %v667 = vld [vmem:[%s391 + $0x40] sm:$0xff]
          %v668 = vld [vmem:[%s391 + $0x48] sm:$0xff]
          %v669 = vld [vmem:[%s391 + $0x50] sm:$0xff]
          %v670 = vld [vmem:[%s391 + $0x58] sm:$0xff]
          %v671 = vld [vmem:[%s391 + $0x60] sm:$0xff]
          %v672 = vld [vmem:[%s391 + $0x68] sm:$0xff]
          %v673 = vld [vmem:[%s391 + $0x70] sm:$0xff]
          %v674 = vld [vmem:[%s391 + $0x78] sm:$0xff]
          %676 = vset.pattern.permute.xlu0 0
          %677 = vperm.xlu0 %676, %v659
          %v678 = vpop.permute.xlu0 %677
          %681 = vset.pattern.permute.xlu0 0
          %682 = vperm.xlu0 %681, %v660
          %v683 = vpop.permute.xlu0 %682
          %686 = vset.pattern.permute.xlu0 0
          %687 = vperm.xlu0 %686, %v661
          %v688 = vpop.permute.xlu0 %687
          %691 = vset.pattern.permute.xlu0 0
          %692 = vperm.xlu0 %691, %v662
          %v693 = vpop.permute.xlu0 %692
          %696 = vset.pattern.permute.xlu0 0
          %697 = vperm.xlu0 %696, %v663
          %v698 = vpop.permute.xlu0 %697
          %701 = vset.pattern.permute.xlu0 0
          %702 = vperm.xlu0 %701, %v664
          %v703 = vpop.permute.xlu0 %702
          %706 = vset.pattern.permute.xlu0 0
          %707 = vperm.xlu0 %706, %v665
          %v708 = vpop.permute.xlu0 %707
          %711 = vset.pattern.permute.xlu0 0
          %712 = vperm.xlu0 %711, %v666
          %v713 = vpop.permute.xlu0 %712
          %716 = vset.pattern.permute.xlu0 0
          %717 = vperm.xlu0 %716, %v667
          %v718 = vpop.permute.xlu0 %717
          %721 = vset.pattern.permute.xlu0 0
          %722 = vperm.xlu0 %721, %v668
          %v723 = vpop.permute.xlu0 %722
          %726 = vset.pattern.permute.xlu0 0
          %727 = vperm.xlu0 %726, %v669
          %v728 = vpop.permute.xlu0 %727
          %731 = vset.pattern.permute.xlu0 0
          %732 = vperm.xlu0 %731, %v670
          %v733 = vpop.permute.xlu0 %732
          %736 = vset.pattern.permute.xlu0 0
          %737 = vperm.xlu0 %736, %v671
          %v738 = vpop.permute.xlu0 %737
          %741 = vset.pattern.permute.xlu0 0
          %742 = vperm.xlu0 %741, %v672
          %v743 = vpop.permute.xlu0 %742
          %746 = vset.pattern.permute.xlu0 0
          %747 = vperm.xlu0 %746, %v673
          %v748 = vpop.permute.xlu0 %747
          %751 = vset.pattern.permute.xlu0 0
          %752 = vperm.xlu0 %751, %v674
          %v753 = vpop.permute.xlu0 %752
          %v755 = vmul.f32 %v643, %v678
          %v756 = vmul.f32 %v644, %v683
          %v757 = vmul.f32 %v645, %v688
          %v758 = vmul.f32 %v646, %v693
          %v759 = vmul.f32 %v647, %v698
          %v760 = vmul.f32 %v648, %v703
          %v761 = vmul.f32 %v649, %v708
          %v762 = vmul.f32 %v650, %v713
          %v763 = vmul.f32 %v651, %v718
          %v764 = vmul.f32 %v652, %v723
          %v765 = vmul.f32 %v653, %v728
          %v766 = vmul.f32 %v654, %v733
          %v767 = vmul.f32 %v655, %v738
          %v768 = vmul.f32 %v656, %v743
          %v769 = vmul.f32 %v657, %v748
          %v770 = vmul.f32 %v658, %v753
          %v771 = vld [vmem:[%s385] sm:$0xff]
          %v772 = vld [vmem:[%s385 + $0x8] sm:$0xff]
          %v773 = vld [vmem:[%s385 + $0x10] sm:$0xff]
          %v774 = vld [vmem:[%s385 + $0x18] sm:$0xff]
          %v775 = vld [vmem:[%s385 + $0x20] sm:$0xff]
          %v776 = vld [vmem:[%s385 + $0x28] sm:$0xff]
          %v777 = vld [vmem:[%s385 + $0x30] sm:$0xff]
          %v778 = vld [vmem:[%s385 + $0x38] sm:$0xff]
          %v779 = vld [vmem:[%s385 + $0x40] sm:$0xff]
          %v780 = vld [vmem:[%s385 + $0x48] sm:$0xff]
          %v781 = vld [vmem:[%s385 + $0x50] sm:$0xff]
          %v782 = vld [vmem:[%s385 + $0x58] sm:$0xff]
          %v783 = vld [vmem:[%s385 + $0x60] sm:$0xff]
          %v784 = vld [vmem:[%s385 + $0x68] sm:$0xff]
          %v785 = vld [vmem:[%s385 + $0x70] sm:$0xff]
          %v786 = vld [vmem:[%s385 + $0x78] sm:$0xff]
          %v787 = vpack.c.bf16 %v772, %v771
          %v788 = vpack.c.bf16 %v774, %v773
          %v789 = vpack.c.bf16 %v776, %v775
          %v790 = vpack.c.bf16 %v778, %v777
          %v791 = vpack.c.bf16 %v780, %v779
          %v792 = vpack.c.bf16 %v782, %v781
          %v793 = vpack.c.bf16 %v784, %v783
          %v794 = vpack.c.bf16 %v786, %v785
          %v795 = vld [vmem:[%s4] sm:$0xf]
          %v796 = vld [vmem:[%s4 + $0x4] sm:$0xf]
          %v797 = vld [vmem:[%s4 + $0x8] sm:$0xf]
          %v798 = vld [vmem:[%s4 + $0xc] sm:$0xf]
          %v799 = vld [vmem:[%s4 + $0x10] sm:$0xf]
          %v800 = vld [vmem:[%s4 + $0x14] sm:$0xf]
          %v801 = vld [vmem:[%s4 + $0x18] sm:$0xf]
          %v802 = vld [vmem:[%s4 + $0x1c] sm:$0xf]
          %v803 = vpack.c.bf16 %v756, %v755
          %v804 = vpack.c.bf16 %v758, %v757
          %v805 = vpack.c.bf16 %v760, %v759
          %v806 = vpack.c.bf16 %v762, %v761
          %v807 = vpack.c.bf16 %v764, %v763
          %v808 = vpack.c.bf16 %v766, %v765
          %v809 = vpack.c.bf16 %v768, %v767
          %v810 = vpack.c.bf16 %v770, %v769
          %v811 = vld [vmem:[%s5] sm:$0xf]
          %v812 = vld [vmem:[%s5 + $0x4] sm:$0xf]
          %v813 = vld [vmem:[%s5 + $0x8] sm:$0xf]
          %v814 = vld [vmem:[%s5 + $0xc] sm:$0xf]
          %v815 = vld [vmem:[%s5 + $0x10] sm:$0xf]
          %v816 = vld [vmem:[%s5 + $0x14] sm:$0xf]
          %v817 = vld [vmem:[%s5 + $0x18] sm:$0xf]
          %v818 = vld [vmem:[%s5 + $0x1c] sm:$0xf]
          %v827 = vunpack.c.l.b16 %v811
          %v828 = vunpack.c.l.b16 %v812
          %v829 = vunpack.c.l.b16 %v813
          %v830 = vunpack.c.l.b16 %v814
          %v831 = vunpack.c.l.b16 %v815
          %v832 = vunpack.c.l.b16 %v816
          %v833 = vunpack.c.l.b16 %v817
          %v834 = vunpack.c.l.b16 %v818
          %v835 = vpack.c.b16 %v828, %v827
          %v836 = vpack.c.b16 %v830, %v829
          %v837 = vpack.c.b16 %v832, %v831
          %v838 = vpack.c.b16 %v834, %v833
          %v844 = vsel %vm622, %v803, 0
          %v847 = vsel %vm622, %v804, 0
          %v850 = vsel %vm622, %v805, 0
          %v853 = vsel %vm622, %v806, 0
          %v856 = vsel %vm622, %v807, 0
          %v859 = vsel %vm622, %v808, 0
          %v862 = vsel %vm622, %v809, 0
          %v865 = vsel %vm622, %v810, 0
          %867 = vmatprep.subr.bf16.mxu0 0
          %868 = vmatpush1.bf16.msra.mxu0 %v835
          %869 = vmatprep.subr.bf16.mxu0 0
          %870 = vmatpush1.bf16.msra.mxu0 %v836
          %871 = vmatprep.subr.bf16.mxu0 0
          %872 = vmatpush1.bf16.msra.mxu0 %v837
          %873 = vmatprep.subr.bf16.mxu0 0
          %874 = vmatpush1.bf16.msra.mxu0 %v838
          %875 = vmatprep.subr.bf16.mxu0 0
          %876 = vmatpush1.bf16.msra.mxu0 0
          %877 = vmatprep.subr.bf16.mxu0 0
          %878 = vmatpush1.bf16.msra.mxu0 0
          %879 = vmatprep.subr.bf16.mxu0 0
          %880 = vmatpush1.bf16.msra.mxu0 0
          %881 = vmatprep.subr.bf16.mxu0 0
          %882 = vmatpush1.bf16.msra.mxu0 0
          %883 = vmatprep.subr.bf16.mxu0 0
          %884 = vmatpush1.bf16.msra.mxu0 0
          %885 = vmatprep.subr.bf16.mxu0 0
          %886 = vmatpush1.bf16.msra.mxu0 0
          %887 = vmatprep.subr.bf16.mxu0 0
          %888 = vmatpush1.bf16.msra.mxu0 0
          %889 = vmatprep.subr.bf16.mxu0 0
          %890 = vmatpush1.bf16.msra.mxu0 0
          %891 = vmatprep.subr.bf16.mxu0 0
          %892 = vmatpush1.bf16.msra.mxu0 0
          %893 = vmatprep.subr.bf16.mxu0 0
          %894 = vmatpush1.bf16.msra.mxu0 0
          %895 = vmatprep.subr.bf16.mxu0 0
          %896 = vmatpush1.bf16.msra.mxu0 0
          %897 = vmatprep.subr.bf16.mxu0 0
          %898 = vmatpush1.bf16.msra.mxu0 0
          %899 = vmatprep.mubr.bf16.mxu0 0
          %900 = vmatmul.mubr.bf16.gmra.mrb[0].mxu0 %v844
          %v901 = vpop.f32.mrb[0].mxu0
          %v902 = vadd.f32 0.0, %v901
          %v903 = vpop.f32.mrb[0].mxu0
          %v904 = vpop.f32.mrb[0].mxu0
          %v905 = vadd.f32 0.0, %v904
          %v906 = vpop.f32.mrb[0].mxu0
          %907 = vmatprep.mubr.bf16.mxu0 0
          %908 = vmatmul.mubr.bf16.gmra.mrb[0].mxu0 %v847
          %v909 = vpop.f32.mrb[0].mxu0
          %v910 = vadd.f32 0.0, %v909
          %v911 = vpop.f32.mrb[0].mxu0
          %v912 = vpop.f32.mrb[0].mxu0
          %v913 = vadd.f32 0.0, %v912
          %v914 = vpop.f32.mrb[0].mxu0
          %915 = vmatprep.mubr.bf16.mxu0 0
          %916 = vmatmul.mubr.bf16.gmra.mrb[0].mxu0 %v850
          %v917 = vpop.f32.mrb[0].mxu0
          %v918 = vadd.f32 0.0, %v917
          %v919 = vpop.f32.mrb[0].mxu0
          %v920 = vpop.f32.mrb[0].mxu0
          %v921 = vadd.f32 0.0, %v920
          %v922 = vpop.f32.mrb[0].mxu0
          %923 = vmatprep.mubr.bf16.mxu0 0
          %924 = vmatmul.mubr.bf16.gmra.mrb[0].mxu0 %v853
          %v925 = vpop.f32.mrb[0].mxu0
          %v926 = vadd.f32 0.0, %v925
          %v927 = vpop.f32.mrb[0].mxu0
          %v928 = vpop.f32.mrb[0].mxu0
          %v929 = vadd.f32 0.0, %v928
          %v930 = vpop.f32.mrb[0].mxu0
          %931 = vmatprep.mubr.bf16.mxu0 0
          %932 = vmatmul.mubr.bf16.gmra.mrb[0].mxu0 %v856
          %v933 = vpop.f32.mrb[0].mxu0
          %v934 = vadd.f32 0.0, %v933
          %v935 = vpop.f32.mrb[0].mxu0
          %v936 = vpop.f32.mrb[0].mxu0
          %v937 = vadd.f32 0.0, %v936
          %v938 = vpop.f32.mrb[0].mxu0
          %939 = vmatprep.mubr.bf16.mxu0 0
          %940 = vmatmul.mubr.bf16.gmra.mrb[0].mxu0 %v859
          %v941 = vpop.f32.mrb[0].mxu0
          %v942 = vadd.f32 0.0, %v941
          %v943 = vpop.f32.mrb[0].mxu0
          %v944 = vpop.f32.mrb[0].mxu0
          %v945 = vadd.f32 0.0, %v944
          %v946 = vpop.f32.mrb[0].mxu0
          %947 = vmatprep.mubr.bf16.mxu0 0
          %948 = vmatmul.mubr.bf16.gmra.mrb[0].mxu0 %v862
          %v949 = vpop.f32.mrb[0].mxu0
          %v950 = vadd.f32 0.0, %v949
          %v951 = vpop.f32.mrb[0].mxu0
          %v952 = vpop.f32.mrb[0].mxu0
          %v953 = vadd.f32 0.0, %v952
          %v954 = vpop.f32.mrb[0].mxu0
          %955 = vmatprep.mubr.bf16.mxu0 0
          %956 = vmatmul.mubr.bf16.gmra.mrb[0].mxu0 %v865
          %v957 = vpop.f32.mrb[0].mxu0
          %v958 = vadd.f32 0.0, %v957
          %v959 = vpop.f32.mrb[0].mxu0
          %v960 = vpop.f32.mrb[0].mxu0
          %v961 = vadd.f32 0.0, %v960
          %v962 = vpop.f32.mrb[0].mxu0
          %963 = vdwg.mxu0
          %v972 = vunpack.c.l.b16 %v795
          %v973 = vunpack.c.l.b16 %v796
          %v974 = vunpack.c.l.b16 %v797
          %v975 = vunpack.c.l.b16 %v798
          %v976 = vunpack.c.l.b16 %v799
          %v977 = vunpack.c.l.b16 %v800
          %v978 = vunpack.c.l.b16 %v801
          %v979 = vunpack.c.l.b16 %v802
          %v980 = vpack.c.b16 %v973, %v972
          %v981 = vpack.c.b16 %v975, %v974
          %v982 = vpack.c.b16 %v977, %v976
          %v983 = vpack.c.b16 %v979, %v978
          %v989 = vsel %vm622, %v787, 0
          %v992 = vsel %vm622, %v788, 0
          %v995 = vsel %vm622, %v789, 0
          %v998 = vsel %vm622, %v790, 0
          %v1001 = vsel %vm622, %v791, 0
          %v1004 = vsel %vm622, %v792, 0
          %v1007 = vsel %vm622, %v793, 0
          %v1010 = vsel %vm622, %v794, 0
          %1012 = vmatprep.subr.bf16.mxu0 0
          %1013 = vmatpush1.bf16.msra.mxu0 %v980
          %1014 = vmatprep.subr.bf16.mxu0 0
          %1015 = vmatpush1.bf16.msra.mxu0 %v981
          %1016 = vmatprep.subr.bf16.mxu0 0
          %1017 = vmatpush1.bf16.msra.mxu0 %v982
          %1018 = vmatprep.subr.bf16.mxu0 0
          %1019 = vmatpush1.bf16.msra.mxu0 %v983
          %1020 = vmatprep.subr.bf16.mxu0 0
          %1021 = vmatpush1.bf16.msra.mxu0 0
          %1022 = vmatprep.subr.bf16.mxu0 0
          %1023 = vmatpush1.bf16.msra.mxu0 0
          %1024 = vmatprep.subr.bf16.mxu0 0
          %1025 = vmatpush1.bf16.msra.mxu0 0
          %1026 = vmatprep.subr.bf16.mxu0 0
          %1027 = vmatpush1.bf16.msra.mxu0 0
          %1028 = vmatprep.subr.bf16.mxu0 0
          %1029 = vmatpush1.bf16.msra.mxu0 0
          %1030 = vmatprep.subr.bf16.mxu0 0
          %1031 = vmatpush1.bf16.msra.mxu0 0
          %1032 = vmatprep.subr.bf16.mxu0 0
          %1033 = vmatpush1.bf16.msra.mxu0 0
          %1034 = vmatprep.subr.bf16.mxu0 0
          %1035 = vmatpush1.bf16.msra.mxu0 0
          %1036 = vmatprep.subr.bf16.mxu0 0
          %1037 = vmatpush1.bf16.msra.mxu0 0
          %1038 = vmatprep.subr.bf16.mxu0 0
          %1039 = vmatpush1.bf16.msra.mxu0 0
          %1040 = vmatprep.subr.bf16.mxu0 0
          %1041 = vmatpush1.bf16.msra.mxu0 0
          %1042 = vmatprep.subr.bf16.mxu0 0
          %1043 = vmatpush1.bf16.msra.mxu0 0
          %1044 = vmatprep.mubr.bf16.mxu0 0
          %1045 = vmatmul.mubr.bf16.gmra.mrb[0].mxu0 %v989
          %v1046 = vpop.f32.mrb[0].mxu0
          %v1047 = vadd.f32 %v902, %v1046
          %v1048 = vpop.f32.mrb[0].mxu0
          %v1049 = vpop.f32.mrb[0].mxu0
          %v1050 = vadd.f32 %v905, %v1049
          %v1051 = vpop.f32.mrb[0].mxu0
          %1052 = vmatprep.mubr.bf16.mxu0 0
          %1053 = vmatmul.mubr.bf16.gmra.mrb[0].mxu0 %v992
          %v1054 = vpop.f32.mrb[0].mxu0
          %v1055 = vadd.f32 %v910, %v1054
          %v1056 = vpop.f32.mrb[0].mxu0
          %v1057 = vpop.f32.mrb[0].mxu0
          %v1058 = vadd.f32 %v913, %v1057
          %v1059 = vpop.f32.mrb[0].mxu0
          %1060 = vmatprep.mubr.bf16.mxu0 0
          %1061 = vmatmul.mubr.bf16.gmra.mrb[0].mxu0 %v995
          %v1062 = vpop.f32.mrb[0].mxu0
          %v1063 = vadd.f32 %v918, %v1062
          %v1064 = vpop.f32.mrb[0].mxu0
          %v1065 = vpop.f32.mrb[0].mxu0
          %v1066 = vadd.f32 %v921, %v1065
          %v1067 = vpop.f32.mrb[0].mxu0
          %1068 = vmatprep.mubr.bf16.mxu0 0
          %1069 = vmatmul.mubr.bf16.gmra.mrb[0].mxu0 %v998
          %v1070 = vpop.f32.mrb[0].mxu0
          %v1071 = vadd.f32 %v926, %v1070
          %v1072 = vpop.f32.mrb[0].mxu0
          %v1073 = vpop.f32.mrb[0].mxu0
          %v1074 = vadd.f32 %v929, %v1073
          %v1075 = vpop.f32.mrb[0].mxu0
          %1076 = vmatprep.mubr.bf16.mxu0 0
          %1077 = vmatmul.mubr.bf16.gmra.mrb[0].mxu0 %v1001
          %v1078 = vpop.f32.mrb[0].mxu0
          %v1079 = vadd.f32 %v934, %v1078
          %v1080 = vpop.f32.mrb[0].mxu0
          %v1081 = vpop.f32.mrb[0].mxu0
          %v1082 = vadd.f32 %v937, %v1081
          %v1083 = vpop.f32.mrb[0].mxu0
          %1084 = vmatprep.mubr.bf16.mxu0 0
          %1085 = vmatmul.mubr.bf16.gmra.mrb[0].mxu0 %v1004
          %v1086 = vpop.f32.mrb[0].mxu0
          %v1087 = vadd.f32 %v942, %v1086
          %v1088 = vpop.f32.mrb[0].mxu0
          %v1089 = vpop.f32.mrb[0].mxu0
          %v1090 = vadd.f32 %v945, %v1089
          %v1091 = vpop.f32.mrb[0].mxu0
          %1092 = vmatprep.mubr.bf16.mxu0 0
          %1093 = vmatmul.mubr.bf16.gmra.mrb[0].mxu0 %v1007
          %v1094 = vpop.f32.mrb[0].mxu0
          %v1095 = vadd.f32 %v950, %v1094
          %v1096 = vpop.f32.mrb[0].mxu0
          %v1097 = vpop.f32.mrb[0].mxu0
          %v1098 = vadd.f32 %v953, %v1097
          %v1099 = vpop.f32.mrb[0].mxu0
          %1100 = vmatprep.mubr.bf16.mxu0 0
          %1101 = vmatmul.mubr.bf16.gmra.mrb[0].mxu0 %v1010
          %v1102 = vpop.f32.mrb[0].mxu0
          %v1103 = vadd.f32 %v958, %v1102
          %v1104 = vpop.f32.mrb[0].mxu0
          %v1105 = vpop.f32.mrb[0].mxu0
          %v1106 = vadd.f32 %v961, %v1105
          %v1107 = vpop.f32.mrb[0].mxu0
          %1108 = vdwg.mxu0
          %v1109 = vld [vmem:[%s6] sm:$0x1]
          %v1111 = vlaneseq
          %v1112 = vshrl.u32 %v1111, 7
          %v1113 = vsub.s32 0, %v1112
          %v1114 = vrot.slane %v1109, %v1113
          %v1116 = vadd.f32 %v1047, %v1114
          %v1117 = vadd.f32 %v1050, %v1114
          %v1118 = vadd.f32 %v1055, %v1114
          %v1119 = vadd.f32 %v1058, %v1114
          %v1120 = vadd.f32 %v1063, %v1114
          %v1121 = vadd.f32 %v1066, %v1114
          %v1122 = vadd.f32 %v1071, %v1114
          %v1123 = vadd.f32 %v1074, %v1114
          %v1124 = vadd.f32 %v1079, %v1114
          %v1125 = vadd.f32 %v1082, %v1114
          %v1126 = vadd.f32 %v1087, %v1114
          %v1127 = vadd.f32 %v1090, %v1114
          %v1128 = vadd.f32 %v1095, %v1114
          %v1129 = vadd.f32 %v1098, %v1114
          %v1130 = vadd.f32 %v1103, %v1114
          %v1131 = vadd.f32 %v1106, %v1114
          %v1132 = vmax.f32 %v1116, 0.0
          %v1133 = vmax.f32 %v1117, 0.0
          %v1134 = vmax.f32 %v1118, 0.0
          %v1135 = vmax.f32 %v1119, 0.0
          %v1136 = vmax.f32 %v1120, 0.0
          %v1137 = vmax.f32 %v1121, 0.0
          %v1138 = vmax.f32 %v1122, 0.0
          %v1139 = vmax.f32 %v1123, 0.0
          %v1140 = vmax.f32 %v1124, 0.0
          %v1141 = vmax.f32 %v1125, 0.0
          %v1142 = vmax.f32 %v1126, 0.0
          %v1143 = vmax.f32 %v1127, 0.0
          %v1144 = vmax.f32 %v1128, 0.0
          %v1145 = vmax.f32 %v1129, 0.0
          %v1146 = vmax.f32 %v1130, 0.0
          %v1147 = vmax.f32 %v1131, 0.0
          %1148 = vst [vmem:[%s397] sm:$0xff] %v1132
          %1149 = vst [vmem:[%s397 + $0x8] sm:$0xff] %v1133
          %1150 = vst [vmem:[%s397 + $0x10] sm:$0xff] %v1134
          %1151 = vst [vmem:[%s397 + $0x18] sm:$0xff] %v1135
          %1152 = vst [vmem:[%s397 + $0x20] sm:$0xff] %v1136
          %1153 = vst [vmem:[%s397 + $0x28] sm:$0xff] %v1137
          %1154 = vst [vmem:[%s397 + $0x30] sm:$0xff] %v1138
          %1155 = vst [vmem:[%s397 + $0x38] sm:$0xff] %v1139
          %1156 = vst [vmem:[%s397 + $0x40] sm:$0xff] %v1140
          %1157 = vst [vmem:[%s397 + $0x48] sm:$0xff] %v1141
          %1158 = vst [vmem:[%s397 + $0x50] sm:$0xff] %v1142
          %1159 = vst [vmem:[%s397 + $0x58] sm:$0xff] %v1143
          %1160 = vst [vmem:[%s397 + $0x60] sm:$0xff] %v1144
          %1161 = vst [vmem:[%s397 + $0x68] sm:$0xff] %v1145
          %1162 = vst [vmem:[%s397 + $0x70] sm:$0xff] %v1146
          %1163 = vst [vmem:[%s397 + $0x78] sm:$0xff] %v1147
        $region79: #{_sage_forward_impl.3} parent=66 // pred_fallthru
          _
        %s1164 = smul.u32 16, %s22
        %p1165 = scmp.lt.s32.totalorder %s1164, 63
        %s1166 = scalar_select %p1165, %s1164, 63
        %s1167 = smul.addr %s1166, 8
        %s1168 = scalar_lea.vmem %s7, %s1167
        // Predicated region
        $region80: #{_sage_forward_impl.3} parent=66 // pred_check
          %p1169 = pneg %p217
        $region81: #{_sage_forward_impl.3} parent=66 // pred_check_branch
          %1171 = sbr.rel (%p1169) target = $region83
        $region82: #{_sage_forward_impl.3} parent=66 // pred_region
          %s1172 = smul.u32 16, %s22
        $region83: #{_sage_forward_impl.3} parent=66 // pred_fallthru
          _
      $region67: #{_sage_forward_impl.3} parent=5 // pred_fallthru
        _
      %p1173 = scmp.le.s32.totalorder 2, %s13
      // Predicated region
      $region84: #{_sage_forward_impl.3} parent=5 // pred_check
        %p1174 = pneg %p1173
      $region85: #{_sage_forward_impl.3} parent=5 // pred_check_branch
        %1176 = sbr.rel (%p1174) target = $region87
      $region86: #{_sage_forward_impl.3} parent=5 // pred_region
        %s1177 = ssub.s32 %s13, 2
        // Predicated region
        $region88: #{_sage_forward_impl.3} parent=86 // pred_check
          %p1178 = pneg %p223
        $region89: #{_sage_forward_impl.3} parent=86 // pred_check_branch
          %1180 = sbr.rel (%p1178) target = $region91
        $region90: #{_sage_forward_impl.3} parent=86 // pred_region
          %s1181 = smul.u32 16, %s24
          %p1182 = scmp.lt.s32.totalorder %s1181, 63
          %s1183 = scalar_select %p1182, %s1181, 63
          %s1184 = smul.addr %s1183, 8
          %s1185 = scalar_lea.vmem %s7, %s1184
        $region91: #{_sage_forward_impl.3} parent=86 // pred_fallthru
          _
      $region87: #{_sage_forward_impl.3} parent=5 // pred_fallthru
        _
    $region6: #{_sage_forward_impl.3} parent=1 // loop_footer
      %s17 = sadd.s32 1, %s13
    $region7: #{_sage_forward_impl.3} parent=1 // loop_footer_branch
      %12 = sbr.rel target = $region3
    $region8: #{_sage_forward_impl.3} parent=1 // loop_exit
      _

// kernel: _sage_forward_impl.4
$region0: #{_sage_forward_impl.4}
  #allocation0 [shape = 'u32[]', space=smem, size = 0x4, offset = 0x4, fixed_abs, tag = 'smem constant byte address 0x4 - core index']
  #allocation1 [shape = 'u32[144,128]{1,0:T(1,128)}', space=vmem, size = 0x12000, scoped, tag = 'internal scratch']
  #allocation2 [shape = 'f32[128,128]{1,0:T(8,128)}', space=vmem, size = 0x10000, scoped, tag = 'scratch operand']
  %s0 = inlined_call_operand.vmem [shape: s8[256,512], index: 0, kind: input, shape index: {}]
  %s1 = inlined_call_operand.vmem [shape: f32[512,128], index: 1, kind: input, shape index: {}, may-alias: {1,2}]
  %s2 = inlined_call_operand.vmem [shape: f32[512,128], index: 2, kind: input, shape index: {}, may-alias: {1,2}]
  %s3 = inlined_call_operand.vmem [shape: f32[256,1], index: 3, kind: input, shape index: {}]
  %s4 = inlined_call_operand.vmem [shape: bf16[128,128], index: 4, kind: input, shape index: {}]
  %s5 = inlined_call_operand.vmem [shape: bf16[128,128], index: 5, kind: input, shape index: {}]
  %s6 = inlined_call_operand.vmem [shape: f32[1,128], index: 6, kind: input, shape index: {}]
  %s7 = inlined_call_operand.vmem [shape: f32[256,128], index: 7, kind: output, shape index: {}]
  %s8 = sld [smem:[#allocation0]]
  $region92: #{_sage_forward_impl.4} parent=0
    _
  %s10 = ssub.s32 1, %s8
  %s11 = scalar_select 0, %s10, %s8
  $region1: #{_sage_forward_impl.4} parent=0
    #allocation3 [shape = 'u8[65536]{0}', space=vmem, size = 0x10000, scoped, tag = 'input window, operand 0']
    loop: start=0, step=1, limit=6
    $region2: #{_sage_forward_impl.4} parent=1 // loop_pre_header
      _
    $region3: #{_sage_forward_impl.4} parent=1 // loop_header
      %s13 = sphi 0, %s17
      %p14 = scmp.ge.s32.totalorder %s13, 6
      %s20 = sphi 0, %s32
      %s21 = sphi 0, %s28
      %s22 = sphi 0, %s20
      %s23 = sphi 0, %s21
      %s24 = sphi 0, %s22
      %s25 = sphi 0, %s23
      %s37 = sphi 0, %s39
      %s40 = sphi 0, %s37
      %s41 = sphi 0, %s40
      %s57 = sphi 0, %s41
      %s63 = sphi 0, %s65
      %s66 = sphi 0, %s63
      %s67 = sphi 0, %s66
      %s83 = sphi 0, %s67
      %s89 = sphi 0, %s91
      %s92 = sphi 0, %s89
      %s93 = sphi 0, %s92
      %s109 = sphi 0, %s93
      %s115 = sphi 0, %s117
      %s118 = sphi 0, %s115
      %s119 = sphi 0, %s118
      %s135 = sphi 0, %s119
      %s139 = sphi 0, %s139
      %s141 = sphi 0, %s139
      %s142 = sphi 0, %s141
      %s156 = sphi 0, %s142
      %s160 = sphi 0, %s160
      %s162 = sphi 0, %s160
      %s163 = sphi 0, %s162
      %s177 = sphi 0, %s163
      %s181 = sphi 0, %s181
      %s183 = sphi 0, %s181
      %s184 = sphi 0, %s183
      %s198 = sphi 0, %s184
      %s204 = sphi 0, %s206
      %s207 = sphi 0, %s204
      %s208 = sphi 0, %s207
      %s224 = sphi 0, %s208
    $region4: #{_sage_forward_impl.4} parent=1 // loop_header_branch
      %16 = sbr.rel (%p14) target = $region8
    $region5: #{_sage_forward_impl.4} parent=1 // loop_body
      %s18 = ssub.s32 %s13, 1
      %s19 = ssub.s32 %s13, 2
      %s26 = sadd.s32 1, %s21
      %p27 = scmp.ge.s32.totalorder %s26, 2
      %s28 = scalar_select %p27, 0, %s26
      %s29 = sadd.s32 1, %s20
      %s30 = scalar_select %p27, %s29, %s20
      %p31 = scmp.ge.s32.totalorder %s30, 2
      %s32 = scalar_select %p31, 0, %s30
      %s33 = ssub.s32 %s20, %s32
      %s34 = ssub.s32 %s21, %s28
      %s35 = sor.u32 %s33, %s34
      %p36 = scmp.eq.s32.totalorder %s35, 0
      %s38 = sadd.s32 %s37, 1
      %s39 = scalar_select %p36, %s37, %s38
      %p42 = pneg %p36
      %p43 = scmp.eq.s32.totalorder %s13, 3
      %p44 = por %p42, %p43
      %p45 = scmp.ne.s32.totalorder %s37, %s40
      %p46 = scmp.eq.s32.totalorder %s13, 0
      %p47 = por %p45, %p46
      %p48 = scmp.ne.s32.totalorder %s37, %s40
      %p49 = scmp.eq.s32.totalorder %s18, 3
      %p50 = por %p48, %p49
      %p51 = scmp.ne.s32.totalorder %s40, %s41
      %p52 = scmp.eq.s32.totalorder %s18, 0
      %p53 = por %p51, %p52
      %p54 = scmp.ne.s32.totalorder %s40, %s41
      %p55 = scmp.eq.s32.totalorder %s19, 3
      %p56 = por %p54, %p55
      %p58 = scmp.ne.s32.totalorder %s41, %s57
      %p59 = scmp.eq.s32.totalorder %s19, 0
      %p60 = por %p58, %p59
      %s61 = ssub.s32 %s21, %s28
      %p62 = scmp.eq.s32.totalorder %s61, 0
      %s64 = sadd.s32 %s63, 1
      %s65 = scalar_select %p62, %s63, %s64
      %p68 = pneg %p62
      %p69 = scmp.eq.s32.totalorder %s13, 3
      %p70 = por %p68, %p69
      %p71 = scmp.ne.s32.totalorder %s63, %s66
      %p72 = scmp.eq.s32.totalorder %s13, 0
      %p73 = por %p71, %p72
      %p74 = scmp.ne.s32.totalorder %s63, %s66
      %p75 = scmp.eq.s32.totalorder %s18, 3
      %p76 = por %p74, %p75
      %p77 = scmp.ne.s32.totalorder %s66, %s67
      %p78 = scmp.eq.s32.totalorder %s18, 0
      %p79 = por %p77, %p78
      %p80 = scmp.ne.s32.totalorder %s66, %s67
      %p81 = scmp.eq.s32.totalorder %s19, 3
      %p82 = por %p80, %p81
      %p84 = scmp.ne.s32.totalorder %s67, %s83
      %p85 = scmp.eq.s32.totalorder %s19, 0
      %p86 = por %p84, %p85
      %s87 = ssub.s32 %s20, %s32
      %p88 = scmp.eq.s32.totalorder %s87, 0
      %s90 = sadd.s32 %s89, 1
      %s91 = scalar_select %p88, %s89, %s90
      %p94 = pneg %p88
      %p95 = scmp.eq.s32.totalorder %s13, 3
      %p96 = por %p94, %p95
      %p97 = scmp.ne.s32.totalorder %s89, %s92
      %p98 = scmp.eq.s32.totalorder %s13, 0
      %p99 = por %p97, %p98
      %p100 = scmp.ne.s32.totalorder %s89, %s92
      %p101 = scmp.eq.s32.totalorder %s18, 3
      %p102 = por %p100, %p101
      %p103 = scmp.ne.s32.totalorder %s92, %s93
      %p104 = scmp.eq.s32.totalorder %s18, 0
      %p105 = por %p103, %p104
      %p106 = scmp.ne.s32.totalorder %s92, %s93
      %p107 = scmp.eq.s32.totalorder %s19, 3
      %p108 = por %p106, %p107
      %p110 = scmp.ne.s32.totalorder %s93, %s109
      %p111 = scmp.eq.s32.totalorder %s19, 0
      %p112 = por %p110, %p111
      %s113 = ssub.s32 %s20, %s32
      %p114 = scmp.eq.s32.totalorder %s113, 0
      %s116 = sadd.s32 %s115, 1
      %s117 = scalar_select %p114, %s115, %s116
      %p120 = pneg %p114
      %p121 = scmp.eq.s32.totalorder %s13, 3
      %p122 = por %p120, %p121
      %p123 = scmp.ne.s32.totalorder %s115, %s118
      %p124 = scmp.eq.s32.totalorder %s13, 0
      %p125 = por %p123, %p124
      %p126 = scmp.ne.s32.totalorder %s115, %s118
      %p127 = scmp.eq.s32.totalorder %s18, 3
      %p128 = por %p126, %p127
      %p129 = scmp.ne.s32.totalorder %s118, %s119
      %p130 = scmp.eq.s32.totalorder %s18, 0
      %p131 = por %p129, %p130
      %p132 = scmp.ne.s32.totalorder %s118, %s119
      %p133 = scmp.eq.s32.totalorder %s19, 3
      %p134 = por %p132, %p133
      %p136 = scmp.ne.s32.totalorder %s119, %s135
      %p137 = scmp.eq.s32.totalorder %s19, 0
      %p138 = por %p136, %p137
      %s140 = sadd.s32 %s139, 1
      %p143 = scmp.eq.s32.totalorder %s13, 3
      %p144 = scmp.ne.s32.totalorder %s139, %s141
      %p145 = scmp.eq.s32.totalorder %s13, 0
      %p146 = por %p144, %p145
      %p147 = scmp.ne.s32.totalorder %s139, %s141
      %p148 = scmp.eq.s32.totalorder %s18, 3
      %p149 = por %p147, %p148
      %p150 = scmp.ne.s32.totalorder %s141, %s142
      %p151 = scmp.eq.s32.totalorder %s18, 0
      %p152 = por %p150, %p151
      %p153 = scmp.ne.s32.totalorder %s141, %s142
      %p154 = scmp.eq.s32.totalorder %s19, 3
      %p155 = por %p153, %p154
      %p157 = scmp.ne.s32.totalorder %s142, %s156
      %p158 = scmp.eq.s32.totalorder %s19, 0
      %p159 = por %p157, %p158
      %s161 = sadd.s32 %s160, 1
      %p164 = scmp.eq.s32.totalorder %s13, 3
      %p165 = scmp.ne.s32.totalorder %s160, %s162
      %p166 = scmp.eq.s32.totalorder %s13, 0
      %p167 = por %p165, %p166
      %p168 = scmp.ne.s32.totalorder %s160, %s162
      %p169 = scmp.eq.s32.totalorder %s18, 3
      %p170 = por %p168, %p169
      %p171 = scmp.ne.s32.totalorder %s162, %s163
      %p172 = scmp.eq.s32.totalorder %s18, 0
      %p173 = por %p171, %p172
      %p174 = scmp.ne.s32.totalorder %s162, %s163
      %p175 = scmp.eq.s32.totalorder %s19, 3
      %p176 = por %p174, %p175
      %p178 = scmp.ne.s32.totalorder %s163, %s177
      %p179 = scmp.eq.s32.totalorder %s19, 0
      %p180 = por %p178, %p179
      %s182 = sadd.s32 %s181, 1
      %p185 = scmp.eq.s32.totalorder %s13, 3
      %p186 = scmp.ne.s32.totalorder %s181, %s183
      %p187 = scmp.eq.s32.totalorder %s13, 0
      %p188 = por %p186, %p187
      %p189 = scmp.ne.s32.totalorder %s181, %s183
      %p190 = scmp.eq.s32.totalorder %s18, 3
      %p191 = por %p189, %p190
      %p192 = scmp.ne.s32.totalorder %s183, %s184
      %p193 = scmp.eq.s32.totalorder %s18, 0
      %p194 = por %p192, %p193
      %p195 = scmp.ne.s32.totalorder %s183, %s184
      %p196 = scmp.eq.s32.totalorder %s19, 3
      %p197 = por %p195, %p196
      %p199 = scmp.ne.s32.totalorder %s184, %s198
      %p200 = scmp.eq.s32.totalorder %s19, 0
      %p201 = por %p199, %p200
      %s202 = ssub.s32 %s20, %s32
      %p203 = scmp.eq.s32.totalorder %s202, 0
      %s205 = sadd.s32 %s204, 1
      %s206 = scalar_select %p203, %s204, %s205
      %p209 = pneg %p203
      %p210 = scmp.eq.s32.totalorder %s13, 3
      %p211 = por %p209, %p210
      %p212 = scmp.ne.s32.totalorder %s204, %s207
      %p213 = scmp.eq.s32.totalorder %s13, 0
      %p214 = por %p212, %p213
      %p215 = scmp.ne.s32.totalorder %s204, %s207
      %p216 = scmp.eq.s32.totalorder %s18, 3
      %p217 = por %p215, %p216
      %p218 = scmp.ne.s32.totalorder %s207, %s208
      %p219 = scmp.eq.s32.totalorder %s18, 0
      %p220 = por %p218, %p219
      %p221 = scmp.ne.s32.totalorder %s207, %s208
      %p222 = scmp.eq.s32.totalorder %s19, 3
      %p223 = por %p221, %p222
      %p225 = scmp.ne.s32.totalorder %s208, %s224
      %p226 = scmp.eq.s32.totalorder %s19, 0
      %p227 = por %p225, %p226
      %p228 = scmp.le.s32.totalorder 1, %s13
      %p229 = scmp.lt.s32.totalorder %s13, 5
      %p230 = pnand %p228, %p229
      %p231 = pneg %p230
      // Predicated region
      $region9: #{_sage_forward_impl.4} parent=5 // pred_check
        _
      $region10: #{_sage_forward_impl.4} parent=5 // pred_check_branch
        %233 = sbr.rel (%p230) target = $region12
      $region11: #{_sage_forward_impl.4} parent=5 // pred_region
        %s234 = ssub.s32 %s13, 1
        // Predicated region
        $region13: #{_sage_forward_impl.4} parent=11 // pred_check
          %p235 = pneg %p152
        $region14: #{_sage_forward_impl.4} parent=11 // pred_check_branch
          %237 = sbr.rel (%p235) target = $region16
        $region15: #{_sage_forward_impl.4} parent=11 // pred_region
          _
        $region16: #{_sage_forward_impl.4} parent=11 // pred_fallthru
          _
        // Predicated region
        $region17: #{_sage_forward_impl.4} parent=11 // pred_check
          %p238 = pneg %p173
        $region18: #{_sage_forward_impl.4} parent=11 // pred_check_branch
          %240 = sbr.rel (%p238) target = $region20
        $region19: #{_sage_forward_impl.4} parent=11 // pred_region
          _
        $region20: #{_sage_forward_impl.4} parent=11 // pred_fallthru
          _
        // Predicated region
        $region21: #{_sage_forward_impl.4} parent=11 // pred_check
          %p241 = pneg %p194
        $region22: #{_sage_forward_impl.4} parent=11 // pred_check_branch
          %243 = sbr.rel (%p241) target = $region24
        $region23: #{_sage_forward_impl.4} parent=11 // pred_region
          _
        $region24: #{_sage_forward_impl.4} parent=11 // pred_fallthru
          _
      $region12: #{_sage_forward_impl.4} parent=5 // pred_fallthru
        _
      %p244 = scmp.lt.s32.totalorder %s13, 4
      // Predicated region
      $region25: #{_sage_forward_impl.4} parent=5 // pred_check
        %p245 = pneg %p244
      $region26: #{_sage_forward_impl.4} parent=5 // pred_check_branch
        %247 = sbr.rel (%p245) target = $region28
      $region27: #{_sage_forward_impl.4} parent=5 // pred_region
        // Predicated region
        $region29: #{_sage_forward_impl.4} parent=27 // pred_check
          %p248 = pneg %p47
        $region30: #{_sage_forward_impl.4} parent=27 // pred_check_branch
          %250 = sbr.rel (%p248) target = $region32
        $region31: #{_sage_forward_impl.4} parent=27 // pred_region
          %s251 = sand.u32 %s37, 1
          %s252 = sand.u32 %s37, 1
          %s253 = smul.addr %s252, 64
          %s254 = scalar_lea.vmem [#allocation3], %s253
          %s255 = smul.u32 4, %s20
          %s256 = smul.u32 2, %s21
          %s257 = smul.addr %s255, 4
          %s258 = sadd.s32 %s256, %s257
          %s259 = smul.addr %s258, 8
          %s260 = scalar_lea.vmem %s0, %s259
          // Predicated region
          $region33: #{_sage_forward_impl.4} parent=31 // pred_check
            _
          $region34: #{_sage_forward_impl.4} parent=31 // pred_check_branch
            %262 = sbr.rel (0) target = $region36
          $region35: #{_sage_forward_impl.4} parent=31 // pred_region
            // Predicated region
            $region37: #{_sage_forward_impl.4} parent=35 // pred_check
              _
            $region38: #{_sage_forward_impl.4} parent=35 // pred_check_branch
              %264 = sbr.rel (0) target = $region40
            $region39: #{_sage_forward_impl.4} parent=35 // pred_region
              loop: start=0, step=1, limit=1
              $region41: #{_sage_forward_impl.4} parent=39 // loop_pre_header
                _
              $region42: #{_sage_forward_impl.4} parent=39 // loop_header
                %s266 = sphi 0, %s270
                %p267 = scmp.ge.s32.totalorder %s266, 1
                %s271 = sphi %s260, %s260
                %s272 = sphi %s254, %s254
              $region43: #{_sage_forward_impl.4} parent=39 // loop_header_branch
                %269 = sbr.rel (%p267) target = $region47
              $region44: #{_sage_forward_impl.4} parent=39 // loop_body
                %v273 = vld [vmem:[%s271] sm:$0xff]
                %274 = vst [vmem:[%s272] sm:$0xff] %v273
                %v275 = vld [vmem:[%s271 + $0x8] sm:$0xff]
                %276 = vst [vmem:[%s272 + $0x8] sm:$0xff] %v275
                %v277 = vld [vmem:[%s271 + $0x20] sm:$0xff]
                %278 = vst [vmem:[%s272 + $0x10] sm:$0xff] %v277
                %v279 = vld [vmem:[%s271 + $0x28] sm:$0xff]
                %280 = vst [vmem:[%s272 + $0x18] sm:$0xff] %v279
                %v281 = vld [vmem:[%s271 + $0x40] sm:$0xff]
                %282 = vst [vmem:[%s272 + $0x20] sm:$0xff] %v281
                %v283 = vld [vmem:[%s271 + $0x48] sm:$0xff]
                %284 = vst [vmem:[%s272 + $0x28] sm:$0xff] %v283
                %v285 = vld [vmem:[%s271 + $0x60] sm:$0xff]
                %286 = vst [vmem:[%s272 + $0x30] sm:$0xff] %v285
                %v287 = vld [vmem:[%s271 + $0x68] sm:$0xff]
                %288 = vst [vmem:[%s272 + $0x38] sm:$0xff] %v287
              $region45: #{_sage_forward_impl.4} parent=39 // loop_footer
                %s270 = sadd.s32 1, %s266
              $region46: #{_sage_forward_impl.4} parent=39 // loop_footer_branch
                %265 = sbr.rel target = $region42
              $region47: #{_sage_forward_impl.4} parent=39 // loop_exit
                _
            $region40: #{_sage_forward_impl.4} parent=35 // pred_fallthru
              _
            // Predicated region
            $region48: #{_sage_forward_impl.4} parent=35 // pred_check
              _
            $region49: #{_sage_forward_impl.4} parent=35 // pred_check_branch
              %290 = sbr.rel target = $region51
            $region50: #{_sage_forward_impl.4} parent=35 // pred_region
              _
            $region51: #{_sage_forward_impl.4} parent=35 // pred_fallthru
              _
          $region36: #{_sage_forward_impl.4} parent=31 // pred_fallthru
            _
          %291 = vnop
        $region32: #{_sage_forward_impl.4} parent=27 // pred_fallthru
          _
        // Predicated region
        $region52: #{_sage_forward_impl.4} parent=27 // pred_check
          %p292 = pneg %p73
        $region53: #{_sage_forward_impl.4} parent=27 // pred_check_branch
          %294 = sbr.rel (%p292) target = $region55
        $region54: #{_sage_forward_impl.4} parent=27 // pred_region
          %s295 = smul.u32 32, %s21
          %p296 = scmp.lt.s32.totalorder %s295, 63
          %s297 = scalar_select %p296, %s295, 63
          %s298 = smul.addr %s297, 8
          %s299 = scalar_lea.vmem %s1, %s298
          %s300 = smul.u32 32, %s21
        $region55: #{_sage_forward_impl.4} parent=27 // pred_fallthru
          _
        // Predicated region
        $region56: #{_sage_forward_impl.4} parent=27 // pred_check
          %p301 = pneg %p99
        $region57: #{_sage_forward_impl.4} parent=27 // pred_check_branch
          %303 = sbr.rel (%p301) target = $region59
        $region58: #{_sage_forward_impl.4} parent=27 // pred_region
          %s304 = smul.u32 16, %s20
          %p305 = scmp.lt.s32.totalorder %s304, 63
          %s306 = scalar_select %p305, %s304, 63
          %s307 = smul.addr %s306, 8
          %s308 = scalar_lea.vmem %s2, %s307
          %s309 = smul.u32 16, %s20
        $region59: #{_sage_forward_impl.4} parent=27 // pred_fallthru
          _
        // Predicated region
        $region60: #{_sage_forward_impl.4} parent=27 // pred_check
          %p310 = pneg %p125
        $region61: #{_sage_forward_impl.4} parent=27 // pred_check_branch
          %312 = sbr.rel (%p310) target = $region63
        $region62: #{_sage_forward_impl.4} parent=27 // pred_region
          %s313 = smul.u32 16, %s20
          %p314 = scmp.lt.s32.totalorder %s313, 31
          %s315 = scalar_select %p314, %s313, 31
          %s316 = smul.addr %s315, 8
          %s317 = scalar_lea.vmem %s3, %s316
          %s318 = smul.u32 16, %s20
        $region63: #{_sage_forward_impl.4} parent=27 // pred_fallthru
          _
      $region28: #{_sage_forward_impl.4} parent=5 // pred_fallthru
        _
      %p319 = scmp.le.s32.totalorder 1, %s13
      %p320 = scmp.lt.s32.totalorder %s13, 5
      %p321 = pnand %p319, %p320
      %p322 = pneg %p321
      // Predicated region
      $region64: #{_sage_forward_impl.4} parent=5 // pred_check
        _
      $region65: #{_sage_forward_impl.4} parent=5 // pred_check_branch
        %324 = sbr.rel (%p321) target = $region67
      $region66: #{_sage_forward_impl.4} parent=5 // pred_region
        %s325 = ssub.s32 %s13, 1
        %s326 = sand.u32 %s40, 1
        %s327 = sand.u32 %s40, 1
        %s328 = smul.addr %s327, 64
        %s329 = scalar_lea.vmem [#allocation3], %s328
        // Predicated region
        $region68: #{_sage_forward_impl.4} parent=66 // pred_check
          %p330 = pneg %p53
        $region69: #{_sage_forward_impl.4} parent=66 // pred_check_branch
          %332 = sbr.rel (%p330) target = $region71
        $region70: #{_sage_forward_impl.4} parent=66 // pred_region
          _
        $region71: #{_sage_forward_impl.4} parent=66 // pred_fallthru
          _
        %s333 = sand.u32 %s40, 1
        %s334 = sand.u32 %s40, 1
        %s335 = smul.addr %s334, 64
        %s336 = scalar_lea.vmem [#allocation3], %s335
        %p337 = pneg %p53
        %p338 = pneg %p50
        %s339 = smul.u32 32, %s23
        %p340 = scmp.lt.s32.totalorder %s339, 63
        %s341 = scalar_select %p340, %s339, 63
        %s342 = smul.addr %s341, 8
        %s343 = scalar_lea.vmem %s1, %s342
        %p344 = pneg %p79
        %p345 = pneg %p76
        %s346 = smul.u32 16, %s22
        %p347 = scmp.lt.s32.totalorder %s346, 63
        %s348 = scalar_select %p347, %s346, 63
        %s349 = smul.addr %s348, 8
        %s350 = scalar_lea.vmem %s2, %s349
        %p351 = pneg %p105
        %p352 = pneg %p102
        %s353 = smul.u32 16, %s22
        %p354 = scmp.lt.s32.totalorder %s353, 31
        %s355 = scalar_select %p354, %s353, 31
        %s356 = smul.addr %s355, 8
        %s357 = scalar_lea.vmem %s3, %s356
        %p358 = pneg %p131
        %p359 = pneg %p128
        %p360 = pneg %p152
        %p361 = pneg %p149
        %p362 = pneg %p173
        %p363 = pneg %p170
        %p364 = pneg %p194
        %p365 = pneg %p191
        %p366 = pneg %p220
        %p367 = pneg %p217
        %s368 = smul.u32 16, %s22
        %p369 = scmp.lt.s32.totalorder %s368, 31
        %s370 = scalar_select %p369, %s368, 31
        %s371 = smul.addr %s370, 8
        %s372 = scalar_lea.vmem %s7, %s371
        %s373 = smul.u32 4, %s22
        %s374 = smul.u32 2, %s23
        %s375 = smul.u32 32, %s23
        %p376 = scmp.lt.s32.totalorder %s375, 63
        %s377 = scalar_select %p376, %s375, 63
        %s378 = smul.addr %s377, 8
        %s379 = scalar_lea.vmem %s1, %s378
        %s380 = smul.u32 32, %s23
        %s381 = smul.u32 16, %s22
        %p382 = scmp.lt.s32.totalorder %s381, 63
        %s383 = scalar_select %p382, %s381, 63
        %s384 = smul.addr %s383, 8
        %s385 = scalar_lea.vmem %s2, %s384
        %s386 = smul.u32 16, %s22
        %s387 = smul.u32 16, %s22
        %p388 = scmp.lt.s32.totalorder %s387, 31
        %s389 = scalar_select %p388, %s387, 31
        %s390 = smul.addr %s389, 8
        %s391 = scalar_lea.vmem %s3, %s390
        %s392 = smul.u32 16, %s22
        %s393 = smul.u32 16, %s22
        %p394 = scmp.lt.s32.totalorder %s393, 31
        %s395 = scalar_select %p394, %s393, 31
        %s396 = smul.addr %s395, 8
        %s397 = scalar_lea.vmem %s7, %s396
        %s398 = smul.u32 16, %s22
        %p400 = scmp.eq.s32.totalorder %s23, 0
        // Predicated region
        $region72: #{_sage_forward_impl.4} parent=66 // pred_check
          %p401 = pneg %p400
        $region73: #{_sage_forward_impl.4} parent=66 // pred_check_branch
          %403 = sbr.rel (%p401) target = $region75
        $region74: #{_sage_forward_impl.4} parent=66 // pred_region
          %404 = vst [vmem:[#allocation2] sm:$0xff] 0.0
          %405 = vst [vmem:[#allocation2 + $0x8] sm:$0xff] 0.0
          %406 = vst [vmem:[#allocation2 + $0x10] sm:$0xff] 0.0
          %407 = vst [vmem:[#allocation2 + $0x18] sm:$0xff] 0.0
          %408 = vst [vmem:[#allocation2 + $0x20] sm:$0xff] 0.0
          %409 = vst [vmem:[#allocation2 + $0x28] sm:$0xff] 0.0
          %410 = vst [vmem:[#allocation2 + $0x30] sm:$0xff] 0.0
          %411 = vst [vmem:[#allocation2 + $0x38] sm:$0xff] 0.0
          %412 = vst [vmem:[#allocation2 + $0x40] sm:$0xff] 0.0
          %413 = vst [vmem:[#allocation2 + $0x48] sm:$0xff] 0.0
          %414 = vst [vmem:[#allocation2 + $0x50] sm:$0xff] 0.0
          %415 = vst [vmem:[#allocation2 + $0x58] sm:$0xff] 0.0
          %416 = vst [vmem:[#allocation2 + $0x60] sm:$0xff] 0.0
          %417 = vst [vmem:[#allocation2 + $0x68] sm:$0xff] 0.0
          %418 = vst [vmem:[#allocation2 + $0x70] sm:$0xff] 0.0
          %419 = vst [vmem:[#allocation2 + $0x78] sm:$0xff] 0.0
        $region75: #{_sage_forward_impl.4} parent=66 // pred_fallthru
          _
        %v420 = vld [vmem:[%s329] sm:$0xff]
        %v421 = vld [vmem:[%s329 + $0x8] sm:$0xff]
        %v422 = vld [vmem:[%s329 + $0x10] sm:$0xff]
        %v423 = vld [vmem:[%s329 + $0x18] sm:$0xff]
        %v424 = vld [vmem:[%s329 + $0x20] sm:$0xff]
        %v425 = vld [vmem:[%s329 + $0x28] sm:$0xff]
        %v426 = vld [vmem:[%s329 + $0x30] sm:$0xff]
        %v427 = vld [vmem:[%s329 + $0x38] sm:$0xff]
        %v428 = vunpack.c.l.s8.bf16 %v420
        %v429 = vunpack.c.l.s8.bf16 %v421
        %v430 = vunpack.c.h.s8.bf16 %v420
        %v431 = vunpack.c.h.s8.bf16 %v421
        %v432 = vunpack.c.l.s8.bf16 %v422
        %v433 = vunpack.c.l.s8.bf16 %v423
        %v434 = vunpack.c.h.s8.bf16 %v422
        %v435 = vunpack.c.h.s8.bf16 %v423
        %v436 = vunpack.c.l.s8.bf16 %v424
        %v437 = vunpack.c.l.s8.bf16 %v425
        %v438 = vunpack.c.h.s8.bf16 %v424
        %v439 = vunpack.c.h.s8.bf16 %v425
        %v440 = vunpack.c.l.s8.bf16 %v426
        %v441 = vunpack.c.l.s8.bf16 %v427
        %v442 = vunpack.c.h.s8.bf16 %v426
        %v443 = vunpack.c.h.s8.bf16 %v427
        %v444 = vld [vmem:[%s379] sm:$0xff]
        %v445 = vld [vmem:[%s379 + $0x8] sm:$0xff]
        %v446 = vld [vmem:[%s379 + $0x10] sm:$0xff]
        %v447 = vld [vmem:[%s379 + $0x18] sm:$0xff]
        %v448 = vld [vmem:[%s379 + $0x20] sm:$0xff]
        %v449 = vld [vmem:[%s379 + $0x28] sm:$0xff]
        %v450 = vld [vmem:[%s379 + $0x30] sm:$0xff]
        %v451 = vld [vmem:[%s379 + $0x38] sm:$0xff]
        %v452 = vld [vmem:[%s379 + $0x40] sm:$0xff]
        %v453 = vld [vmem:[%s379 + $0x48] sm:$0xff]
        %v454 = vld [vmem:[%s379 + $0x50] sm:$0xff]
        %v455 = vld [vmem:[%s379 + $0x58] sm:$0xff]
        %v456 = vld [vmem:[%s379 + $0x60] sm:$0xff]
        %v457 = vld [vmem:[%s379 + $0x68] sm:$0xff]
        %v458 = vld [vmem:[%s379 + $0x70] sm:$0xff]
        %v459 = vld [vmem:[%s379 + $0x78] sm:$0xff]
        %v460 = vld [vmem:[%s379 + $0x80] sm:$0xff]
        %v461 = vld [vmem:[%s379 + $0x88] sm:$0xff]
        %v462 = vld [vmem:[%s379 + $0x90] sm:$0xff]
        %v463 = vld [vmem:[%s379 + $0x98] sm:$0xff]
        %v464 = vld [vmem:[%s379 + $0xa0] sm:$0xff]
        %v465 = vld [vmem:[%s379 + $0xa8] sm:$0xff]
        %v466 = vld [vmem:[%s379 + $0xb0] sm:$0xff]
        %v467 = vld [vmem:[%s379 + $0xb8] sm:$0xff]
        %v468 = vld [vmem:[%s379 + $0xc0] sm:$0xff]
        %v469 = vld [vmem:[%s379 + $0xc8] sm:$0xff]
        %v470 = vld [vmem:[%s379 + $0xd0] sm:$0xff]
        %v471 = vld [vmem:[%s379 + $0xd8] sm:$0xff]
        %v472 = vld [vmem:[%s379 + $0xe0] sm:$0xff]
        %v473 = vld [vmem:[%s379 + $0xe8] sm:$0xff]
        %v474 = vld [vmem:[%s379 + $0xf0] sm:$0xff]
        %v475 = vld [vmem:[%s379 + $0xf8] sm:$0xff]
        %v476 = vpack.c.bf16 %v445, %v444
        %v477 = vpack.c.bf16 %v447, %v446
        %v478 = vpack.c.bf16 %v449, %v448
        %v479 = vpack.c.bf16 %v451, %v450
        %v480 = vpack.c.bf16 %v453, %v452
        %v481 = vpack.c.bf16 %v455, %v454
        %v482 = vpack.c.bf16 %v457, %v456
        %v483 = vpack.c.bf16 %v459, %v458
        %v484 = vpack.c.bf16 %v461, %v460
        %v485 = vpack.c.bf16 %v463, %v462
        %v486 = vpack.c.bf16 %v465, %v464
        %v487 = vpack.c.bf16 %v467, %v466
        %v488 = vpack.c.bf16 %v469, %v468
        %v489 = vpack.c.bf16 %v471, %v470
        %v490 = vpack.c.bf16 %v473, %v472
        %v491 = vpack.c.bf16 %v475, %v474
        %v492 = vld [vmem:[#allocation2] sm:$0xff]
        %v493 = vld [vmem:[#allocation2 + $0x8] sm:$0xff]
        %v494 = vld [vmem:[#allocation2 + $0x10] sm:$0xff]
        %v495 = vld [vmem:[#allocation2 + $0x18] sm:$0xff]
        %v496 = vld [vmem:[#allocation2 + $0x20] sm:$0xff]
        %v497 = vld [vmem:[#allocation2 + $0x28] sm:$0xff]
        %v498 = vld [vmem:[#allocation2 + $0x30] sm:$0xff]
        %v499 = vld [vmem:[#allocation2 + $0x38] sm:$0xff]
        %v500 = vld [vmem:[#allocation2 + $0x40] sm:$0xff]
        %v501 = vld [vmem:[#allocation2 + $0x48] sm:$0xff]
        %v502 = vld [vmem:[#allocation2 + $0x50] sm:$0xff]
        %v503 = vld [vmem:[#allocation2 + $0x58] sm:$0xff]
        %v504 = vld [vmem:[#allocation2 + $0x60] sm:$0xff]
        %v505 = vld [vmem:[#allocation2 + $0x68] sm:$0xff]
        %v506 = vld [vmem:[#allocation2 + $0x70] sm:$0xff]
        %v507 = vld [vmem:[#allocation2 + $0x78] sm:$0xff]
        %508 = vmatprep.subr.bf16.mxu0 0
        %509 = vmatpush1.bf16.msra.mxu0 %v476
        %510 = vmatprep.subr.bf16.mxu0 0
        %511 = vmatpush1.bf16.msra.mxu0 %v477
        %512 = vmatprep.subr.bf16.mxu0 0
        %513 = vmatpush1.bf16.msra.mxu0 %v478
        %514 = vmatprep.subr.bf16.mxu0 0
        %515 = vmatpush1.bf16.msra.mxu0 %v479
        %516 = vmatprep.subr.bf16.mxu0 0
        %517 = vmatpush1.bf16.msra.mxu0 %v480
        %518 = vmatprep.subr.bf16.mxu0 0
        %519 = vmatpush1.bf16.msra.mxu0 %v481
        %520 = vmatprep.subr.bf16.mxu0 0
        %521 = vmatpush1.bf16.msra.mxu0 %v482
        %522 = vmatprep.subr.bf16.mxu0 0
        %523 = vmatpush1.bf16.msra.mxu0 %v483
        %524 = vmatprep.subr.bf16.mxu0 0
        %525 = vmatpush1.bf16.msra.mxu0 %v484
        %526 = vmatprep.subr.bf16.mxu0 0
        %527 = vmatpush1.bf16.msra.mxu0 %v485
        %528 = vmatprep.subr.bf16.mxu0 0
        %529 = vmatpush1.bf16.msra.mxu0 %v486
        %530 = vmatprep.subr.bf16.mxu0 0
        %531 = vmatpush1.bf16.msra.mxu0 %v487
        %532 = vmatprep.subr.bf16.mxu0 0
        %533 = vmatpush1.bf16.msra.mxu0 %v488
        %534 = vmatprep.subr.bf16.mxu0 0
        %535 = vmatpush1.bf16.msra.mxu0 %v489
        %536 = vmatprep.subr.bf16.mxu0 0
        %537 = vmatpush1.bf16.msra.mxu0 %v490
        %538 = vmatprep.subr.bf16.mxu0 0
        %539 = vmatpush1.bf16.msra.mxu0 %v491
        %540 = vmatprep.mubr.bf16.mxu0 %v429
        %541 = vmatmul.mubr.bf16.gmra.mrb[0].mxu0 %v428
        %v542 = vpop.f32.mrb[0].mxu0
        %v543 = vadd.f32 0.0, %v542
        %v544 = vpop.f32.mrb[0].mxu0
        %v545 = vpop.f32.mrb[0].mxu0
        %v546 = vadd.f32 0.0, %v545
        %v547 = vpop.f32.mrb[0].mxu0
        %548 = vmatprep.mubr.bf16.mxu0 %v431
        %549 = vmatmul.mubr.bf16.gmra.mrb[0].mxu0 %v430
        %v550 = vpop.f32.mrb[0].mxu0
        %v551 = vadd.f32 0.0, %v550
        %v552 = vpop.f32.mrb[0].mxu0
        %v553 = vpop.f32.mrb[0].mxu0
        %v554 = vadd.f32 0.0, %v553
        %v555 = vpop.f32.mrb[0].mxu0
        %556 = vmatprep.mubr.bf16.mxu0 %v433
        %557 = vmatmul.mubr.bf16.gmra.mrb[0].mxu0 %v432
        %v558 = vpop.f32.mrb[0].mxu0
        %v559 = vadd.f32 0.0, %v558
        %v560 = vpop.f32.mrb[0].mxu0
        %v561 = vpop.f32.mrb[0].mxu0
        %v562 = vadd.f32 0.0, %v561
        %v563 = vpop.f32.mrb[0].mxu0
        %564 = vmatprep.mubr.bf16.mxu0 %v435
        %565 = vmatmul.mubr.bf16.gmra.mrb[0].mxu0 %v434
        %v566 = vpop.f32.mrb[0].mxu0
        %v567 = vadd.f32 0.0, %v566
        %v568 = vpop.f32.mrb[0].mxu0
        %v569 = vpop.f32.mrb[0].mxu0
        %v570 = vadd.f32 0.0, %v569
        %v571 = vpop.f32.mrb[0].mxu0
        %572 = vmatprep.mubr.bf16.mxu0 %v437
        %573 = vmatmul.mubr.bf16.gmra.mrb[0].mxu0 %v436
        %v574 = vpop.f32.mrb[0].mxu0
        %v575 = vadd.f32 0.0, %v574
        %v576 = vpop.f32.mrb[0].mxu0
        %v577 = vpop.f32.mrb[0].mxu0
        %v578 = vadd.f32 0.0, %v577
        %v579 = vpop.f32.mrb[0].mxu0
        %580 = vmatprep.mubr.bf16.mxu0 %v439
        %581 = vmatmul.mubr.bf16.gmra.mrb[0].mxu0 %v438
        %v582 = vpop.f32.mrb[0].mxu0
        %v583 = vadd.f32 0.0, %v582
        %v584 = vpop.f32.mrb[0].mxu0
        %v585 = vpop.f32.mrb[0].mxu0
        %v586 = vadd.f32 0.0, %v585
        %v587 = vpop.f32.mrb[0].mxu0
        %588 = vmatprep.mubr.bf16.mxu0 %v441
        %589 = vmatmul.mubr.bf16.gmra.mrb[0].mxu0 %v440
        %v590 = vpop.f32.mrb[0].mxu0
        %v591 = vadd.f32 0.0, %v590
        %v592 = vpop.f32.mrb[0].mxu0
        %v593 = vpop.f32.mrb[0].mxu0
        %v594 = vadd.f32 0.0, %v593
        %v595 = vpop.f32.mrb[0].mxu0
        %596 = vmatprep.mubr.bf16.mxu0 %v443
        %597 = vmatmul.mubr.bf16.gmra.mrb[0].mxu0 %v442
        %v598 = vpop.f32.mrb[0].mxu0
        %v599 = vadd.f32 0.0, %v598
        %v600 = vpop.f32.mrb[0].mxu0
        %v601 = vpop.f32.mrb[0].mxu0
        %v602 = vadd.f32 0.0, %v601
        %v603 = vpop.f32.mrb[0].mxu0
        %604 = vdwg.mxu0
        %v605 = vadd.f32 %v492, %v543
        %v606 = vadd.f32 %v493, %v546
        %v607 = vadd.f32 %v494, %v551
        %v608 = vadd.f32 %v495, %v554
        %v609 = vadd.f32 %v496, %v559
        %v610 = vadd.f32 %v497, %v562
        %v611 = vadd.f32 %v498, %v567
        %v612 = vadd.f32 %v499, %v570
        %v613 = vadd.f32 %v500, %v575
        %v614 = vadd.f32 %v501, %v578
        %v615 = vadd.f32 %v502, %v583
        %v616 = vadd.f32 %v503, %v586
        %v617 = vadd.f32 %v504, %v591
        %v618 = vadd.f32 %v505, %v594
        %v619 = vadd.f32 %v506, %v599
        %v620 = vadd.f32 %v507, %v602
        %621 = vst [vmem:[#allocation2] sm:$0xff] %v605
        %622 = vst [vmem:[#allocation2 + $0x8] sm:$0xff] %v606
        %623 = vst [vmem:[#allocation2 + $0x10] sm:$0xff] %v607
        %624 = vst [vmem:[#allocation2 + $0x18] sm:$0xff] %v608
        %625 = vst [vmem:[#allocation2 + $0x20] sm:$0xff] %v609
        %626 = vst [vmem:[#allocation2 + $0x28] sm:$0xff] %v610
        %627 = vst [vmem:[#allocation2 + $0x30] sm:$0xff] %v611
        %628 = vst [vmem:[#allocation2 + $0x38] sm:$0xff] %v612
        %629 = vst [vmem:[#allocation2 + $0x40] sm:$0xff] %v613
        %630 = vst [vmem:[#allocation2 + $0x48] sm:$0xff] %v614
        %631 = vst [vmem:[#allocation2 + $0x50] sm:$0xff] %v615
        %632 = vst [vmem:[#allocation2 + $0x58] sm:$0xff] %v616
        %633 = vst [vmem:[#allocation2 + $0x60] sm:$0xff] %v617
        %634 = vst [vmem:[#allocation2 + $0x68] sm:$0xff] %v618
        %635 = vst [vmem:[#allocation2 + $0x70] sm:$0xff] %v619
        %636 = vst [vmem:[#allocation2 + $0x78] sm:$0xff] %v620
        %p637 = scmp.eq.s32.totalorder %s23, 1
        // Predicated region
        $region76: #{_sage_forward_impl.4} parent=66 // pred_check
          %p638 = pneg %p637
        $region77: #{_sage_forward_impl.4} parent=66 // pred_check_branch
          %640 = sbr.rel (%p638) target = $region79
        $region78: #{_sage_forward_impl.4} parent=66 // pred_region
          %v641 = vld [vmem:[#allocation2] sm:$0xff]
          %v642 = vld [vmem:[#allocation2 + $0x8] sm:$0xff]
          %v643 = vld [vmem:[#allocation2 + $0x10] sm:$0xff]
          %v644 = vld [vmem:[#allocation2 + $0x18] sm:$0xff]
          %v645 = vld [vmem:[#allocation2 + $0x20] sm:$0xff]
          %v646 = vld [vmem:[#allocation2 + $0x28] sm:$0xff]
          %v647 = vld [vmem:[#allocation2 + $0x30] sm:$0xff]
          %v648 = vld [vmem:[#allocation2 + $0x38] sm:$0xff]
          %v649 = vld [vmem:[#allocation2 + $0x40] sm:$0xff]
          %v650 = vld [vmem:[#allocation2 + $0x48] sm:$0xff]
          %v651 = vld [vmem:[#allocation2 + $0x50] sm:$0xff]
          %v652 = vld [vmem:[#allocation2 + $0x58] sm:$0xff]
          %v653 = vld [vmem:[#allocation2 + $0x60] sm:$0xff]
          %v654 = vld [vmem:[#allocation2 + $0x68] sm:$0xff]
          %v655 = vld [vmem:[#allocation2 + $0x70] sm:$0xff]
          %v656 = vld [vmem:[#allocation2 + $0x78] sm:$0xff]
          %v657 = vld [vmem:[%s391] sm:$0xff]
          %v658 = vld [vmem:[%s391 + $0x8] sm:$0xff]
          %v659 = vld [vmem:[%s391 + $0x10] sm:$0xff]
          %v660 = vld [vmem:[%s391 + $0x18] sm:$0xff]
          %v661 = vld [vmem:[%s391 + $0x20] sm:$0xff]
          %v662 = vld [vmem:[%s391 + $0x28] sm:$0xff]
          %v663 = vld [vmem:[%s391 + $0x30] sm:$0xff]
          %v664 = vld [vmem:[%s391 + $0x38] sm:$0xff]
          %v665 = vld [vmem:[%s391 + $0x40] sm:$0xff]
          %v666 = vld [vmem:[%s391 + $0x48] sm:$0xff]
          %v667 = vld [vmem:[%s391 + $0x50] sm:$0xff]
          %v668 = vld [vmem:[%s391 + $0x58] sm:$0xff]
          %v669 = vld [vmem:[%s391 + $0x60] sm:$0xff]
          %v670 = vld [vmem:[%s391 + $0x68] sm:$0xff]
          %v671 = vld [vmem:[%s391 + $0x70] sm:$0xff]
          %v672 = vld [vmem:[%s391 + $0x78] sm:$0xff]
          %674 = vset.pattern.permute.xlu0 0
          %675 = vperm.xlu0 %674, %v657
          %v676 = vpop.permute.xlu0 %675
          %679 = vset.pattern.permute.xlu0 0
          %680 = vperm.xlu0 %679, %v658
          %v681 = vpop.permute.xlu0 %680
          %684 = vset.pattern.permute.xlu0 0
          %685 = vperm.xlu0 %684, %v659
          %v686 = vpop.permute.xlu0 %685
          %689 = vset.pattern.permute.xlu0 0
          %690 = vperm.xlu0 %689, %v660
          %v691 = vpop.permute.xlu0 %690
          %694 = vset.pattern.permute.xlu0 0
          %695 = vperm.xlu0 %694, %v661
          %v696 = vpop.permute.xlu0 %695
          %699 = vset.pattern.permute.xlu0 0
          %700 = vperm.xlu0 %699, %v662
          %v701 = vpop.permute.xlu0 %700
          %704 = vset.pattern.permute.xlu0 0
          %705 = vperm.xlu0 %704, %v663
          %v706 = vpop.permute.xlu0 %705
          %709 = vset.pattern.permute.xlu0 0
          %710 = vperm.xlu0 %709, %v664
          %v711 = vpop.permute.xlu0 %710
          %714 = vset.pattern.permute.xlu0 0
          %715 = vperm.xlu0 %714, %v665
          %v716 = vpop.permute.xlu0 %715
          %719 = vset.pattern.permute.xlu0 0
          %720 = vperm.xlu0 %719, %v666
          %v721 = vpop.permute.xlu0 %720
          %724 = vset.pattern.permute.xlu0 0
          %725 = vperm.xlu0 %724, %v667
          %v726 = vpop.permute.xlu0 %725
          %729 = vset.pattern.permute.xlu0 0
          %730 = vperm.xlu0 %729, %v668
          %v731 = vpop.permute.xlu0 %730
          %734 = vset.pattern.permute.xlu0 0
          %735 = vperm.xlu0 %734, %v669
          %v736 = vpop.permute.xlu0 %735
          %739 = vset.pattern.permute.xlu0 0
          %740 = vperm.xlu0 %739, %v670
          %v741 = vpop.permute.xlu0 %740
          %744 = vset.pattern.permute.xlu0 0
          %745 = vperm.xlu0 %744, %v671
          %v746 = vpop.permute.xlu0 %745
          %749 = vset.pattern.permute.xlu0 0
          %750 = vperm.xlu0 %749, %v672
          %v751 = vpop.permute.xlu0 %750
          %v753 = vmul.f32 %v641, %v676
          %v754 = vmul.f32 %v642, %v681
          %v755 = vmul.f32 %v643, %v686
          %v756 = vmul.f32 %v644, %v691
          %v757 = vmul.f32 %v645, %v696
          %v758 = vmul.f32 %v646, %v701
          %v759 = vmul.f32 %v647, %v706
          %v760 = vmul.f32 %v648, %v711
          %v761 = vmul.f32 %v649, %v716
          %v762 = vmul.f32 %v650, %v721
          %v763 = vmul.f32 %v651, %v726
          %v764 = vmul.f32 %v652, %v731
          %v765 = vmul.f32 %v653, %v736
          %v766 = vmul.f32 %v654, %v741
          %v767 = vmul.f32 %v655, %v746
          %v768 = vmul.f32 %v656, %v751
          %v769 = vld [vmem:[%s385] sm:$0xff]
          %v770 = vld [vmem:[%s385 + $0x8] sm:$0xff]
          %v771 = vld [vmem:[%s385 + $0x10] sm:$0xff]
          %v772 = vld [vmem:[%s385 + $0x18] sm:$0xff]
          %v773 = vld [vmem:[%s385 + $0x20] sm:$0xff]
          %v774 = vld [vmem:[%s385 + $0x28] sm:$0xff]
          %v775 = vld [vmem:[%s385 + $0x30] sm:$0xff]
          %v776 = vld [vmem:[%s385 + $0x38] sm:$0xff]
          %v777 = vld [vmem:[%s385 + $0x40] sm:$0xff]
          %v778 = vld [vmem:[%s385 + $0x48] sm:$0xff]
          %v779 = vld [vmem:[%s385 + $0x50] sm:$0xff]
          %v780 = vld [vmem:[%s385 + $0x58] sm:$0xff]
          %v781 = vld [vmem:[%s385 + $0x60] sm:$0xff]
          %v782 = vld [vmem:[%s385 + $0x68] sm:$0xff]
          %v783 = vld [vmem:[%s385 + $0x70] sm:$0xff]
          %v784 = vld [vmem:[%s385 + $0x78] sm:$0xff]
          %v785 = vpack.c.bf16 %v770, %v769
          %v786 = vpack.c.bf16 %v772, %v771
          %v787 = vpack.c.bf16 %v774, %v773
          %v788 = vpack.c.bf16 %v776, %v775
          %v789 = vpack.c.bf16 %v778, %v777
          %v790 = vpack.c.bf16 %v780, %v779
          %v791 = vpack.c.bf16 %v782, %v781
          %v792 = vpack.c.bf16 %v784, %v783
          %v793 = vld [vmem:[%s4] sm:$0xf]
          %v794 = vld [vmem:[%s4 + $0x4] sm:$0xf]
          %v795 = vld [vmem:[%s4 + $0x8] sm:$0xf]
          %v796 = vld [vmem:[%s4 + $0xc] sm:$0xf]
          %v797 = vld [vmem:[%s4 + $0x10] sm:$0xf]
          %v798 = vld [vmem:[%s4 + $0x14] sm:$0xf]
          %v799 = vld [vmem:[%s4 + $0x18] sm:$0xf]
          %v800 = vld [vmem:[%s4 + $0x1c] sm:$0xf]
          %v801 = vld [vmem:[%s4 + $0x20] sm:$0xf]
          %v802 = vld [vmem:[%s4 + $0x24] sm:$0xf]
          %v803 = vld [vmem:[%s4 + $0x28] sm:$0xf]
          %v804 = vld [vmem:[%s4 + $0x2c] sm:$0xf]
          %v805 = vld [vmem:[%s4 + $0x30] sm:$0xf]
          %v806 = vld [vmem:[%s4 + $0x34] sm:$0xf]
          %v807 = vld [vmem:[%s4 + $0x38] sm:$0xf]
          %v808 = vld [vmem:[%s4 + $0x3c] sm:$0xf]
          %v809 = vpack.c.bf16 %v754, %v753
          %v810 = vpack.c.bf16 %v756, %v755
          %v811 = vpack.c.bf16 %v758, %v757
          %v812 = vpack.c.bf16 %v760, %v759
          %v813 = vpack.c.bf16 %v762, %v761
          %v814 = vpack.c.bf16 %v764, %v763
          %v815 = vpack.c.bf16 %v766, %v765
          %v816 = vpack.c.bf16 %v768, %v767
          %v817 = vld [vmem:[%s5] sm:$0xf]
          %v818 = vld [vmem:[%s5 + $0x4] sm:$0xf]
          %v819 = vld [vmem:[%s5 + $0x8] sm:$0xf]
          %v820 = vld [vmem:[%s5 + $0xc] sm:$0xf]
          %v821 = vld [vmem:[%s5 + $0x10] sm:$0xf]
          %v822 = vld [vmem:[%s5 + $0x14] sm:$0xf]
          %v823 = vld [vmem:[%s5 + $0x18] sm:$0xf]
          %v824 = vld [vmem:[%s5 + $0x1c] sm:$0xf]
          %v825 = vld [vmem:[%s5 + $0x20] sm:$0xf]
          %v826 = vld [vmem:[%s5 + $0x24] sm:$0xf]
          %v827 = vld [vmem:[%s5 + $0x28] sm:$0xf]
          %v828 = vld [vmem:[%s5 + $0x2c] sm:$0xf]
          %v829 = vld [vmem:[%s5 + $0x30] sm:$0xf]
          %v830 = vld [vmem:[%s5 + $0x34] sm:$0xf]
          %v831 = vld [vmem:[%s5 + $0x38] sm:$0xf]
          %v832 = vld [vmem:[%s5 + $0x3c] sm:$0xf]
          %v849 = vunpack.c.l.b16 %v817
          %v850 = vunpack.c.l.b16 %v818
          %v851 = vunpack.c.l.b16 %v819
          %v852 = vunpack.c.l.b16 %v820
          %v853 = vunpack.c.l.b16 %v821
          %v854 = vunpack.c.l.b16 %v822
          %v855 = vunpack.c.l.b16 %v823
          %v856 = vunpack.c.l.b16 %v824
          %v857 = vunpack.c.l.b16 %v825
          %v858 = vunpack.c.l.b16 %v826
          %v859 = vunpack.c.l.b16 %v827
          %v860 = vunpack.c.l.b16 %v828
          %v861 = vunpack.c.l.b16 %v829
          %v862 = vunpack.c.l.b16 %v830
          %v863 = vunpack.c.l.b16 %v831
          %v864 = vunpack.c.l.b16 %v832
          %v865 = vpack.c.b16 %v850, %v849
          %v866 = vpack.c.b16 %v852, %v851
          %v867 = vpack.c.b16 %v854, %v853
          %v868 = vpack.c.b16 %v856, %v855
          %v869 = vpack.c.b16 %v858, %v857
          %v870 = vpack.c.b16 %v860, %v859
          %v871 = vpack.c.b16 %v862, %v861
          %v872 = vpack.c.b16 %v864, %v863
          %881 = vmatprep.subr.bf16.mxu0 0
          %882 = vmatpush1.bf16.msra.mxu0 %v865
          %883 = vmatprep.subr.bf16.mxu0 0
          %884 = vmatpush1.bf16.msra.mxu0 %v866
          %885 = vmatprep.subr.bf16.mxu0 0
          %886 = vmatpush1.bf16.msra.mxu0 %v867
          %887 = vmatprep.subr.bf16.mxu0 0
          %888 = vmatpush1.bf16.msra.mxu0 %v868
          %889 = vmatprep.subr.bf16.mxu0 0
          %890 = vmatpush1.bf16.msra.mxu0 %v869
          %891 = vmatprep.subr.bf16.mxu0 0
          %892 = vmatpush1.bf16.msra.mxu0 %v870
          %893 = vmatprep.subr.bf16.mxu0 0
          %894 = vmatpush1.bf16.msra.mxu0 %v871
          %895 = vmatprep.subr.bf16.mxu0 0
          %896 = vmatpush1.bf16.msra.mxu0 %v872
          %897 = vmatprep.subr.bf16.mxu0 0
          %898 = vmatpush1.bf16.msra.mxu0 0
          %899 = vmatprep.subr.bf16.mxu0 0
          %900 = vmatpush1.bf16.msra.mxu0 0
          %901 = vmatprep.subr.bf16.mxu0 0
          %902 = vmatpush1.bf16.msra.mxu0 0
          %903 = vmatprep.subr.bf16.mxu0 0
          %904 = vmatpush1.bf16.msra.mxu0 0
          %905 = vmatprep.subr.bf16.mxu0 0
          %906 = vmatpush1.bf16.msra.mxu0 0
          %907 = vmatprep.subr.bf16.mxu0 0
          %908 = vmatpush1.bf16.msra.mxu0 0
          %909 = vmatprep.subr.bf16.mxu0 0
          %910 = vmatpush1.bf16.msra.mxu0 0
          %911 = vmatprep.subr.bf16.mxu0 0
          %912 = vmatpush1.bf16.msra.mxu0 0
          %913 = vmatprep.mubr.bf16.mxu0 0
          %914 = vmatmul.mubr.bf16.gmra.mrb[0].mxu0 %v809
          %v915 = vpop.f32.mrb[0].mxu0
          %v916 = vadd.f32 0.0, %v915
          %v917 = vpop.f32.mrb[0].mxu0
          %v918 = vpop.f32.mrb[0].mxu0
          %v919 = vadd.f32 0.0, %v918
          %v920 = vpop.f32.mrb[0].mxu0
          %921 = vmatprep.mubr.bf16.mxu0 0
          %922 = vmatmul.mubr.bf16.gmra.mrb[0].mxu0 %v810
          %v923 = vpop.f32.mrb[0].mxu0
          %v924 = vadd.f32 0.0, %v923
          %v925 = vpop.f32.mrb[0].mxu0
          %v926 = vpop.f32.mrb[0].mxu0
          %v927 = vadd.f32 0.0, %v926
          %v928 = vpop.f32.mrb[0].mxu0
          %929 = vmatprep.mubr.bf16.mxu0 0
          %930 = vmatmul.mubr.bf16.gmra.mrb[0].mxu0 %v811
          %v931 = vpop.f32.mrb[0].mxu0
          %v932 = vadd.f32 0.0, %v931
          %v933 = vpop.f32.mrb[0].mxu0
          %v934 = vpop.f32.mrb[0].mxu0
          %v935 = vadd.f32 0.0, %v934
          %v936 = vpop.f32.mrb[0].mxu0
          %937 = vmatprep.mubr.bf16.mxu0 0
          %938 = vmatmul.mubr.bf16.gmra.mrb[0].mxu0 %v812
          %v939 = vpop.f32.mrb[0].mxu0
          %v940 = vadd.f32 0.0, %v939
          %v941 = vpop.f32.mrb[0].mxu0
          %v942 = vpop.f32.mrb[0].mxu0
          %v943 = vadd.f32 0.0, %v942
          %v944 = vpop.f32.mrb[0].mxu0
          %945 = vmatprep.mubr.bf16.mxu0 0
          %946 = vmatmul.mubr.bf16.gmra.mrb[0].mxu0 %v813
          %v947 = vpop.f32.mrb[0].mxu0
          %v948 = vadd.f32 0.0, %v947
          %v949 = vpop.f32.mrb[0].mxu0
          %v950 = vpop.f32.mrb[0].mxu0
          %v951 = vadd.f32 0.0, %v950
          %v952 = vpop.f32.mrb[0].mxu0
          %953 = vmatprep.mubr.bf16.mxu0 0
          %954 = vmatmul.mubr.bf16.gmra.mrb[0].mxu0 %v814
          %v955 = vpop.f32.mrb[0].mxu0
          %v956 = vadd.f32 0.0, %v955
          %v957 = vpop.f32.mrb[0].mxu0
          %v958 = vpop.f32.mrb[0].mxu0
          %v959 = vadd.f32 0.0, %v958
          %v960 = vpop.f32.mrb[0].mxu0
          %961 = vmatprep.mubr.bf16.mxu0 0
          %962 = vmatmul.mubr.bf16.gmra.mrb[0].mxu0 %v815
          %v963 = vpop.f32.mrb[0].mxu0
          %v964 = vadd.f32 0.0, %v963
          %v965 = vpop.f32.mrb[0].mxu0
          %v966 = vpop.f32.mrb[0].mxu0
          %v967 = vadd.f32 0.0, %v966
          %v968 = vpop.f32.mrb[0].mxu0
          %969 = vmatprep.mubr.bf16.mxu0 0
          %970 = vmatmul.mubr.bf16.gmra.mrb[0].mxu0 %v816
          %v971 = vpop.f32.mrb[0].mxu0
          %v972 = vadd.f32 0.0, %v971
          %v973 = vpop.f32.mrb[0].mxu0
          %v974 = vpop.f32.mrb[0].mxu0
          %v975 = vadd.f32 0.0, %v974
          %v976 = vpop.f32.mrb[0].mxu0
          %977 = vdwg.mxu0
          %v994 = vunpack.c.l.b16 %v793
          %v995 = vunpack.c.l.b16 %v794
          %v996 = vunpack.c.l.b16 %v795
          %v997 = vunpack.c.l.b16 %v796
          %v998 = vunpack.c.l.b16 %v797
          %v999 = vunpack.c.l.b16 %v798
          %v1000 = vunpack.c.l.b16 %v799
          %v1001 = vunpack.c.l.b16 %v800
          %v1002 = vunpack.c.l.b16 %v801
          %v1003 = vunpack.c.l.b16 %v802
          %v1004 = vunpack.c.l.b16 %v803
          %v1005 = vunpack.c.l.b16 %v804
          %v1006 = vunpack.c.l.b16 %v805
          %v1007 = vunpack.c.l.b16 %v806
          %v1008 = vunpack.c.l.b16 %v807
          %v1009 = vunpack.c.l.b16 %v808
          %v1010 = vpack.c.b16 %v995, %v994
          %v1011 = vpack.c.b16 %v997, %v996
          %v1012 = vpack.c.b16 %v999, %v998
          %v1013 = vpack.c.b16 %v1001, %v1000
          %v1014 = vpack.c.b16 %v1003, %v1002
          %v1015 = vpack.c.b16 %v1005, %v1004
          %v1016 = vpack.c.b16 %v1007, %v1006
          %v1017 = vpack.c.b16 %v1009, %v1008
          %1026 = vmatprep.subr.bf16.mxu0 0
          %1027 = vmatpush1.bf16.msra.mxu0 %v1010
          %1028 = vmatprep.subr.bf16.mxu0 0
          %1029 = vmatpush1.bf16.msra.mxu0 %v1011
          %1030 = vmatprep.subr.bf16.mxu0 0
          %1031 = vmatpush1.bf16.msra.mxu0 %v1012
          %1032 = vmatprep.subr.bf16.mxu0 0
          %1033 = vmatpush1.bf16.msra.mxu0 %v1013
          %1034 = vmatprep.subr.bf16.mxu0 0
          %1035 = vmatpush1.bf16.msra.mxu0 %v1014
          %1036 = vmatprep.subr.bf16.mxu0 0
          %1037 = vmatpush1.bf16.msra.mxu0 %v1015
          %1038 = vmatprep.subr.bf16.mxu0 0
          %1039 = vmatpush1.bf16.msra.mxu0 %v1016
          %1040 = vmatprep.subr.bf16.mxu0 0
          %1041 = vmatpush1.bf16.msra.mxu0 %v1017
          %1042 = vmatprep.subr.bf16.mxu0 0
          %1043 = vmatpush1.bf16.msra.mxu0 0
          %1044 = vmatprep.subr.bf16.mxu0 0
          %1045 = vmatpush1.bf16.msra.mxu0 0
          %1046 = vmatprep.subr.bf16.mxu0 0
          %1047 = vmatpush1.bf16.msra.mxu0 0
          %1048 = vmatprep.subr.bf16.mxu0 0
          %1049 = vmatpush1.bf16.msra.mxu0 0
          %1050 = vmatprep.subr.bf16.mxu0 0
          %1051 = vmatpush1.bf16.msra.mxu0 0
          %1052 = vmatprep.subr.bf16.mxu0 0
          %1053 = vmatpush1.bf16.msra.mxu0 0
          %1054 = vmatprep.subr.bf16.mxu0 0
          %1055 = vmatpush1.bf16.msra.mxu0 0
          %1056 = vmatprep.subr.bf16.mxu0 0
          %1057 = vmatpush1.bf16.msra.mxu0 0
          %1058 = vmatprep.mubr.bf16.mxu0 0
          %1059 = vmatmul.mubr.bf16.gmra.mrb[0].mxu0 %v785
          %v1060 = vpop.f32.mrb[0].mxu0
          %v1061 = vadd.f32 %v916, %v1060
          %v1062 = vpop.f32.mrb[0].mxu0
          %v1063 = vpop.f32.mrb[0].mxu0
          %v1064 = vadd.f32 %v919, %v1063
          %v1065 = vpop.f32.mrb[0].mxu0
          %1066 = vmatprep.mubr.bf16.mxu0 0
          %1067 = vmatmul.mubr.bf16.gmra.mrb[0].mxu0 %v786
          %v1068 = vpop.f32.mrb[0].mxu0
          %v1069 = vadd.f32 %v924, %v1068
          %v1070 = vpop.f32.mrb[0].mxu0
          %v1071 = vpop.f32.mrb[0].mxu0
          %v1072 = vadd.f32 %v927, %v1071
          %v1073 = vpop.f32.mrb[0].mxu0
          %1074 = vmatprep.mubr.bf16.mxu0 0
          %1075 = vmatmul.mubr.bf16.gmra.mrb[0].mxu0 %v787
          %v1076 = vpop.f32.mrb[0].mxu0
          %v1077 = vadd.f32 %v932, %v1076
          %v1078 = vpop.f32.mrb[0].mxu0
          %v1079 = vpop.f32.mrb[0].mxu0
          %v1080 = vadd.f32 %v935, %v1079
          %v1081 = vpop.f32.mrb[0].mxu0
          %1082 = vmatprep.mubr.bf16.mxu0 0
          %1083 = vmatmul.mubr.bf16.gmra.mrb[0].mxu0 %v788
          %v1084 = vpop.f32.mrb[0].mxu0
          %v1085 = vadd.f32 %v940, %v1084
          %v1086 = vpop.f32.mrb[0].mxu0
          %v1087 = vpop.f32.mrb[0].mxu0
          %v1088 = vadd.f32 %v943, %v1087
          %v1089 = vpop.f32.mrb[0].mxu0
          %1090 = vmatprep.mubr.bf16.mxu0 0
          %1091 = vmatmul.mubr.bf16.gmra.mrb[0].mxu0 %v789
          %v1092 = vpop.f32.mrb[0].mxu0
          %v1093 = vadd.f32 %v948, %v1092
          %v1094 = vpop.f32.mrb[0].mxu0
          %v1095 = vpop.f32.mrb[0].mxu0
          %v1096 = vadd.f32 %v951, %v1095
          %v1097 = vpop.f32.mrb[0].mxu0
          %1098 = vmatprep.mubr.bf16.mxu0 0
          %1099 = vmatmul.mubr.bf16.gmra.mrb[0].mxu0 %v790
          %v1100 = vpop.f32.mrb[0].mxu0
          %v1101 = vadd.f32 %v956, %v1100
          %v1102 = vpop.f32.mrb[0].mxu0
          %v1103 = vpop.f32.mrb[0].mxu0
          %v1104 = vadd.f32 %v959, %v1103
          %v1105 = vpop.f32.mrb[0].mxu0
          %1106 = vmatprep.mubr.bf16.mxu0 0
          %1107 = vmatmul.mubr.bf16.gmra.mrb[0].mxu0 %v791
          %v1108 = vpop.f32.mrb[0].mxu0
          %v1109 = vadd.f32 %v964, %v1108
          %v1110 = vpop.f32.mrb[0].mxu0
          %v1111 = vpop.f32.mrb[0].mxu0
          %v1112 = vadd.f32 %v967, %v1111
          %v1113 = vpop.f32.mrb[0].mxu0
          %1114 = vmatprep.mubr.bf16.mxu0 0
          %1115 = vmatmul.mubr.bf16.gmra.mrb[0].mxu0 %v792
          %v1116 = vpop.f32.mrb[0].mxu0
          %v1117 = vadd.f32 %v972, %v1116
          %v1118 = vpop.f32.mrb[0].mxu0
          %v1119 = vpop.f32.mrb[0].mxu0
          %v1120 = vadd.f32 %v975, %v1119
          %v1121 = vpop.f32.mrb[0].mxu0
          %1122 = vdwg.mxu0
          %v1123 = vld [vmem:[%s6] sm:$0x1]
          %v1125 = vlaneseq
          %v1126 = vshrl.u32 %v1125, 7
          %v1127 = vsub.s32 0, %v1126
          %v1128 = vrot.slane %v1123, %v1127
          %v1130 = vadd.f32 %v1061, %v1128
          %v1131 = vadd.f32 %v1064, %v1128
          %v1132 = vadd.f32 %v1069, %v1128
          %v1133 = vadd.f32 %v1072, %v1128
          %v1134 = vadd.f32 %v1077, %v1128
          %v1135 = vadd.f32 %v1080, %v1128
          %v1136 = vadd.f32 %v1085, %v1128
          %v1137 = vadd.f32 %v1088, %v1128
          %v1138 = vadd.f32 %v1093, %v1128
          %v1139 = vadd.f32 %v1096, %v1128
          %v1140 = vadd.f32 %v1101, %v1128
          %v1141 = vadd.f32 %v1104, %v1128
          %v1142 = vadd.f32 %v1109, %v1128
          %v1143 = vadd.f32 %v1112, %v1128
          %v1144 = vadd.f32 %v1117, %v1128
          %v1145 = vadd.f32 %v1120, %v1128
          %v1146 = vmax.f32 %v1130, 0.0
          %v1147 = vmax.f32 %v1131, 0.0
          %v1148 = vmax.f32 %v1132, 0.0
          %v1149 = vmax.f32 %v1133, 0.0
          %v1150 = vmax.f32 %v1134, 0.0
          %v1151 = vmax.f32 %v1135, 0.0
          %v1152 = vmax.f32 %v1136, 0.0
          %v1153 = vmax.f32 %v1137, 0.0
          %v1154 = vmax.f32 %v1138, 0.0
          %v1155 = vmax.f32 %v1139, 0.0
          %v1156 = vmax.f32 %v1140, 0.0
          %v1157 = vmax.f32 %v1141, 0.0
          %v1158 = vmax.f32 %v1142, 0.0
          %v1159 = vmax.f32 %v1143, 0.0
          %v1160 = vmax.f32 %v1144, 0.0
          %v1161 = vmax.f32 %v1145, 0.0
          %1162 = vst [vmem:[%s397] sm:$0xff] %v1146
          %1163 = vst [vmem:[%s397 + $0x8] sm:$0xff] %v1147
          %1164 = vst [vmem:[%s397 + $0x10] sm:$0xff] %v1148
          %1165 = vst [vmem:[%s397 + $0x18] sm:$0xff] %v1149
          %1166 = vst [vmem:[%s397 + $0x20] sm:$0xff] %v1150
          %1167 = vst [vmem:[%s397 + $0x28] sm:$0xff] %v1151
          %1168 = vst [vmem:[%s397 + $0x30] sm:$0xff] %v1152
          %1169 = vst [vmem:[%s397 + $0x38] sm:$0xff] %v1153
          %1170 = vst [vmem:[%s397 + $0x40] sm:$0xff] %v1154
          %1171 = vst [vmem:[%s397 + $0x48] sm:$0xff] %v1155
          %1172 = vst [vmem:[%s397 + $0x50] sm:$0xff] %v1156
          %1173 = vst [vmem:[%s397 + $0x58] sm:$0xff] %v1157
          %1174 = vst [vmem:[%s397 + $0x60] sm:$0xff] %v1158
          %1175 = vst [vmem:[%s397 + $0x68] sm:$0xff] %v1159
          %1176 = vst [vmem:[%s397 + $0x70] sm:$0xff] %v1160
          %1177 = vst [vmem:[%s397 + $0x78] sm:$0xff] %v1161
        $region79: #{_sage_forward_impl.4} parent=66 // pred_fallthru
          _
        %s1178 = smul.u32 16, %s22
        %p1179 = scmp.lt.s32.totalorder %s1178, 31
        %s1180 = scalar_select %p1179, %s1178, 31
        %s1181 = smul.addr %s1180, 8
        %s1182 = scalar_lea.vmem %s7, %s1181
        // Predicated region
        $region80: #{_sage_forward_impl.4} parent=66 // pred_check
          %p1183 = pneg %p217
        $region81: #{_sage_forward_impl.4} parent=66 // pred_check_branch
          %1185 = sbr.rel (%p1183) target = $region83
        $region82: #{_sage_forward_impl.4} parent=66 // pred_region
          %s1186 = smul.u32 16, %s22
        $region83: #{_sage_forward_impl.4} parent=66 // pred_fallthru
          _
      $region67: #{_sage_forward_impl.4} parent=5 // pred_fallthru
        _
      %p1187 = scmp.le.s32.totalorder 2, %s13
      // Predicated region
      $region84: #{_sage_forward_impl.4} parent=5 // pred_check
        %p1188 = pneg %p1187
      $region85: #{_sage_forward_impl.4} parent=5 // pred_check_branch
        %1190 = sbr.rel (%p1188) target = $region87
      $region86: #{_sage_forward_impl.4} parent=5 // pred_region
        %s1191 = ssub.s32 %s13, 2
        // Predicated region
        $region88: #{_sage_forward_impl.4} parent=86 // pred_check
          %p1192 = pneg %p223
        $region89: #{_sage_forward_impl.4} parent=86 // pred_check_branch
          %1194 = sbr.rel (%p1192) target = $region91
        $region90: #{_sage_forward_impl.4} parent=86 // pred_region
          %s1195 = smul.u32 16, %s24
          %p1196 = scmp.lt.s32.totalorder %s1195, 31
          %s1197 = scalar_select %p1196, %s1195, 31
          %s1198 = smul.addr %s1197, 8
          %s1199 = scalar_lea.vmem %s7, %s1198
        $region91: #{_sage_forward_impl.4} parent=86 // pred_fallthru
          _
      $region87: #{_sage_forward_impl.4} parent=5 // pred_fallthru
        _
    $region6: #{_sage_forward_impl.4} parent=1 // loop_footer
      %s17 = sadd.s32 1, %s13
    $region7: #{_sage_forward_impl.4} parent=1 // loop_footer_branch
      %12 = sbr.rel target = $region3
    $region8: #{_sage_forward_impl.4} parent=1 // loop_exit
      _

// kernel: _sage_forward_impl.5
$region0: #{_sage_forward_impl.5}
  #allocation0 [shape = 'u32[]', space=smem, size = 0x4, offset = 0x4, fixed_abs, tag = 'smem constant byte address 0x4 - core index']
  #allocation1 [shape = 'u32[144,128]{1,0:T(1,128)}', space=vmem, size = 0x12000, scoped, tag = 'internal scratch']
  #allocation2 [shape = 'f32[128,128]{1,0:T(8,128)}', space=vmem, size = 0x10000, scoped, tag = 'scratch operand']
  %s0 = inlined_call_operand.vmem [shape: s8[256,256], index: 0, kind: input, shape index: {}]
  %s1 = inlined_call_operand.vmem [shape: f32[256,128], index: 1, kind: input, shape index: {}, may-alias: {1,2}]
  %s2 = inlined_call_operand.vmem [shape: f32[256,128], index: 2, kind: input, shape index: {}, may-alias: {1,2}]
  %s3 = inlined_call_operand.vmem [shape: f32[256,1], index: 3, kind: input, shape index: {}]
  %s4 = inlined_call_operand.vmem [shape: bf16[128,32], index: 4, kind: input, shape index: {}]
  %s5 = inlined_call_operand.vmem [shape: bf16[128,32], index: 5, kind: input, shape index: {}]
  %s6 = inlined_call_operand.vmem [shape: f32[1,32], index: 6, kind: input, shape index: {}]
  %s7 = inlined_call_operand.vmem [shape: f32[256,32], index: 7, kind: output, shape index: {}]
  %s8 = sld [smem:[#allocation0]]
  $region69: #{_sage_forward_impl.5} parent=0
    _
  %s10 = ssub.s32 1, %s8
  %s11 = scalar_select 0, %s10, %s8
  loop: start=0, step=1, limit=4
  $region2: #{_sage_forward_impl.5} parent=0 // loop_pre_header
    _
  $region3: #{_sage_forward_impl.5} parent=0 // loop_header
    %s13 = sphi 0, %s17
    %p14 = scmp.ge.s32.totalorder %s13, 4
    %s20 = sphi 0, %s32
    %s21 = sphi 0, %s28
    %s22 = sphi 0, %s20
    %s23 = sphi 0, %s21
    %s24 = sphi 0, %s22
    %s25 = sphi 0, %s23
    %s37 = sphi 0, %s39
    %s40 = sphi 0, %s37
    %s41 = sphi 0, %s40
    %s57 = sphi 0, %s41
    %s63 = sphi 0, %s65
    %s66 = sphi 0, %s63
    %s67 = sphi 0, %s66
    %s83 = sphi 0, %s67
    %s89 = sphi 0, %s91
    %s92 = sphi 0, %s89
    %s93 = sphi 0, %s92
    %s109 = sphi 0, %s93
    %s115 = sphi 0, %s117
    %s118 = sphi 0, %s115
    %s119 = sphi 0, %s118
    %s135 = sphi 0, %s119
    %s139 = sphi 0, %s139
    %s141 = sphi 0, %s139
    %s142 = sphi 0, %s141
    %s156 = sphi 0, %s142
    %s160 = sphi 0, %s160
    %s162 = sphi 0, %s160
    %s163 = sphi 0, %s162
    %s177 = sphi 0, %s163
    %s181 = sphi 0, %s181
    %s183 = sphi 0, %s181
    %s184 = sphi 0, %s183
    %s198 = sphi 0, %s184
    %s204 = sphi 0, %s206
    %s207 = sphi 0, %s204
    %s208 = sphi 0, %s207
    %s224 = sphi 0, %s208
  $region4: #{_sage_forward_impl.5} parent=0 // loop_header_branch
    %16 = sbr.rel (%p14) target = $region8
  $region5: #{_sage_forward_impl.5} parent=0 // loop_body
    %s18 = ssub.s32 %s13, 1
    %s19 = ssub.s32 %s13, 2
    %s26 = sadd.s32 1, %s21
    %p27 = scmp.ge.s32.totalorder %s26, 1
    %s28 = scalar_select %p27, 0, %s26
    %s29 = sadd.s32 1, %s20
    %s30 = scalar_select %p27, %s29, %s20
    %p31 = scmp.ge.s32.totalorder %s30, 2
    %s32 = scalar_select %p31, 0, %s30
    %s33 = ssub.s32 %s20, %s32
    %s34 = ssub.s32 %s21, %s28
    %s35 = sor.u32 %s33, %s34
    %p36 = scmp.eq.s32.totalorder %s35, 0
    %s38 = sadd.s32 %s37, 1
    %s39 = scalar_select %p36, %s37, %s38
    %p42 = pneg %p36
    %p43 = scmp.eq.s32.totalorder %s13, 1
    %p44 = por %p42, %p43
    %p45 = scmp.ne.s32.totalorder %s37, %s40
    %p46 = scmp.eq.s32.totalorder %s13, 0
    %p47 = por %p45, %p46
    %p48 = scmp.ne.s32.totalorder %s37, %s40
    %p49 = scmp.eq.s32.totalorder %s18, 1
    %p50 = por %p48, %p49
    %p51 = scmp.ne.s32.totalorder %s40, %s41
    %p52 = scmp.eq.s32.totalorder %s18, 0
    %p53 = por %p51, %p52
    %p54 = scmp.ne.s32.totalorder %s40, %s41
    %p55 = scmp.eq.s32.totalorder %s19, 1
    %p56 = por %p54, %p55
    %p58 = scmp.ne.s32.totalorder %s41, %s57
    %p59 = scmp.eq.s32.totalorder %s19, 0
    %p60 = por %p58, %p59
    %s61 = ssub.s32 %s21, %s28
    %p62 = scmp.eq.s32.totalorder %s61, 0
    %s64 = sadd.s32 %s63, 1
    %s65 = scalar_select %p62, %s63, %s64
    %p68 = pneg %p62
    %p69 = scmp.eq.s32.totalorder %s13, 1
    %p70 = por %p68, %p69
    %p71 = scmp.ne.s32.totalorder %s63, %s66
    %p72 = scmp.eq.s32.totalorder %s13, 0
    %p73 = por %p71, %p72
    %p74 = scmp.ne.s32.totalorder %s63, %s66
    %p75 = scmp.eq.s32.totalorder %s18, 1
    %p76 = por %p74, %p75
    %p77 = scmp.ne.s32.totalorder %s66, %s67
    %p78 = scmp.eq.s32.totalorder %s18, 0
    %p79 = por %p77, %p78
    %p80 = scmp.ne.s32.totalorder %s66, %s67
    %p81 = scmp.eq.s32.totalorder %s19, 1
    %p82 = por %p80, %p81
    %p84 = scmp.ne.s32.totalorder %s67, %s83
    %p85 = scmp.eq.s32.totalorder %s19, 0
    %p86 = por %p84, %p85
    %s87 = ssub.s32 %s20, %s32
    %p88 = scmp.eq.s32.totalorder %s87, 0
    %s90 = sadd.s32 %s89, 1
    %s91 = scalar_select %p88, %s89, %s90
    %p94 = pneg %p88
    %p95 = scmp.eq.s32.totalorder %s13, 1
    %p96 = por %p94, %p95
    %p97 = scmp.ne.s32.totalorder %s89, %s92
    %p98 = scmp.eq.s32.totalorder %s13, 0
    %p99 = por %p97, %p98
    %p100 = scmp.ne.s32.totalorder %s89, %s92
    %p101 = scmp.eq.s32.totalorder %s18, 1
    %p102 = por %p100, %p101
    %p103 = scmp.ne.s32.totalorder %s92, %s93
    %p104 = scmp.eq.s32.totalorder %s18, 0
    %p105 = por %p103, %p104
    %p106 = scmp.ne.s32.totalorder %s92, %s93
    %p107 = scmp.eq.s32.totalorder %s19, 1
    %p108 = por %p106, %p107
    %p110 = scmp.ne.s32.totalorder %s93, %s109
    %p111 = scmp.eq.s32.totalorder %s19, 0
    %p112 = por %p110, %p111
    %s113 = ssub.s32 %s20, %s32
    %p114 = scmp.eq.s32.totalorder %s113, 0
    %s116 = sadd.s32 %s115, 1
    %s117 = scalar_select %p114, %s115, %s116
    %p120 = pneg %p114
    %p121 = scmp.eq.s32.totalorder %s13, 1
    %p122 = por %p120, %p121
    %p123 = scmp.ne.s32.totalorder %s115, %s118
    %p124 = scmp.eq.s32.totalorder %s13, 0
    %p125 = por %p123, %p124
    %p126 = scmp.ne.s32.totalorder %s115, %s118
    %p127 = scmp.eq.s32.totalorder %s18, 1
    %p128 = por %p126, %p127
    %p129 = scmp.ne.s32.totalorder %s118, %s119
    %p130 = scmp.eq.s32.totalorder %s18, 0
    %p131 = por %p129, %p130
    %p132 = scmp.ne.s32.totalorder %s118, %s119
    %p133 = scmp.eq.s32.totalorder %s19, 1
    %p134 = por %p132, %p133
    %p136 = scmp.ne.s32.totalorder %s119, %s135
    %p137 = scmp.eq.s32.totalorder %s19, 0
    %p138 = por %p136, %p137
    %s140 = sadd.s32 %s139, 1
    %p143 = scmp.eq.s32.totalorder %s13, 1
    %p144 = scmp.ne.s32.totalorder %s139, %s141
    %p145 = scmp.eq.s32.totalorder %s13, 0
    %p146 = por %p144, %p145
    %p147 = scmp.ne.s32.totalorder %s139, %s141
    %p148 = scmp.eq.s32.totalorder %s18, 1
    %p149 = por %p147, %p148
    %p150 = scmp.ne.s32.totalorder %s141, %s142
    %p151 = scmp.eq.s32.totalorder %s18, 0
    %p152 = por %p150, %p151
    %p153 = scmp.ne.s32.totalorder %s141, %s142
    %p154 = scmp.eq.s32.totalorder %s19, 1
    %p155 = por %p153, %p154
    %p157 = scmp.ne.s32.totalorder %s142, %s156
    %p158 = scmp.eq.s32.totalorder %s19, 0
    %p159 = por %p157, %p158
    %s161 = sadd.s32 %s160, 1
    %p164 = scmp.eq.s32.totalorder %s13, 1
    %p165 = scmp.ne.s32.totalorder %s160, %s162
    %p166 = scmp.eq.s32.totalorder %s13, 0
    %p167 = por %p165, %p166
    %p168 = scmp.ne.s32.totalorder %s160, %s162
    %p169 = scmp.eq.s32.totalorder %s18, 1
    %p170 = por %p168, %p169
    %p171 = scmp.ne.s32.totalorder %s162, %s163
    %p172 = scmp.eq.s32.totalorder %s18, 0
    %p173 = por %p171, %p172
    %p174 = scmp.ne.s32.totalorder %s162, %s163
    %p175 = scmp.eq.s32.totalorder %s19, 1
    %p176 = por %p174, %p175
    %p178 = scmp.ne.s32.totalorder %s163, %s177
    %p179 = scmp.eq.s32.totalorder %s19, 0
    %p180 = por %p178, %p179
    %s182 = sadd.s32 %s181, 1
    %p185 = scmp.eq.s32.totalorder %s13, 1
    %p186 = scmp.ne.s32.totalorder %s181, %s183
    %p187 = scmp.eq.s32.totalorder %s13, 0
    %p188 = por %p186, %p187
    %p189 = scmp.ne.s32.totalorder %s181, %s183
    %p190 = scmp.eq.s32.totalorder %s18, 1
    %p191 = por %p189, %p190
    %p192 = scmp.ne.s32.totalorder %s183, %s184
    %p193 = scmp.eq.s32.totalorder %s18, 0
    %p194 = por %p192, %p193
    %p195 = scmp.ne.s32.totalorder %s183, %s184
    %p196 = scmp.eq.s32.totalorder %s19, 1
    %p197 = por %p195, %p196
    %p199 = scmp.ne.s32.totalorder %s184, %s198
    %p200 = scmp.eq.s32.totalorder %s19, 0
    %p201 = por %p199, %p200
    %s202 = ssub.s32 %s20, %s32
    %p203 = scmp.eq.s32.totalorder %s202, 0
    %s205 = sadd.s32 %s204, 1
    %s206 = scalar_select %p203, %s204, %s205
    %p209 = pneg %p203
    %p210 = scmp.eq.s32.totalorder %s13, 1
    %p211 = por %p209, %p210
    %p212 = scmp.ne.s32.totalorder %s204, %s207
    %p213 = scmp.eq.s32.totalorder %s13, 0
    %p214 = por %p212, %p213
    %p215 = scmp.ne.s32.totalorder %s204, %s207
    %p216 = scmp.eq.s32.totalorder %s18, 1
    %p217 = por %p215, %p216
    %p218 = scmp.ne.s32.totalorder %s207, %s208
    %p219 = scmp.eq.s32.totalorder %s18, 0
    %p220 = por %p218, %p219
    %p221 = scmp.ne.s32.totalorder %s207, %s208
    %p222 = scmp.eq.s32.totalorder %s19, 1
    %p223 = por %p221, %p222
    %p225 = scmp.ne.s32.totalorder %s208, %s224
    %p226 = scmp.eq.s32.totalorder %s19, 0
    %p227 = por %p225, %p226
    %p228 = scmp.le.s32.totalorder 1, %s13
    %p229 = scmp.lt.s32.totalorder %s13, 3
    %p230 = pnand %p228, %p229
    %p231 = pneg %p230
    // Predicated region
    $region9: #{_sage_forward_impl.5} parent=5 // pred_check
      _
    $region10: #{_sage_forward_impl.5} parent=5 // pred_check_branch
      %233 = sbr.rel (%p230) target = $region12
    $region11: #{_sage_forward_impl.5} parent=5 // pred_region
      %s234 = ssub.s32 %s13, 1
      // Predicated region
      $region13: #{_sage_forward_impl.5} parent=11 // pred_check
        %p235 = pneg %p79
      $region14: #{_sage_forward_impl.5} parent=11 // pred_check_branch
        %237 = sbr.rel (%p235) target = $region16
      $region15: #{_sage_forward_impl.5} parent=11 // pred_region
        %s238 = smul.u32 32, %s23
        %p239 = scmp.lt.s32.totalorder %s238, 31
        %s240 = scalar_select %p239, %s238, 31
        %s241 = smul.addr %s240, 8
        %s242 = scalar_lea.vmem %s1, %s241
        %s243 = smul.u32 32, %s23
      $region16: #{_sage_forward_impl.5} parent=11 // pred_fallthru
        _
      // Predicated region
      $region17: #{_sage_forward_impl.5} parent=11 // pred_check
        %p244 = pneg %p152
      $region18: #{_sage_forward_impl.5} parent=11 // pred_check_branch
        %246 = sbr.rel (%p244) target = $region20
      $region19: #{_sage_forward_impl.5} parent=11 // pred_region
        _
      $region20: #{_sage_forward_impl.5} parent=11 // pred_fallthru
        _
      // Predicated region
      $region21: #{_sage_forward_impl.5} parent=11 // pred_check
        %p247 = pneg %p173
      $region22: #{_sage_forward_impl.5} parent=11 // pred_check_branch
        %249 = sbr.rel (%p247) target = $region24
      $region23: #{_sage_forward_impl.5} parent=11 // pred_region
        _
      $region24: #{_sage_forward_impl.5} parent=11 // pred_fallthru
        _
      // Predicated region
      $region25: #{_sage_forward_impl.5} parent=11 // pred_check
        %p250 = pneg %p194
      $region26: #{_sage_forward_impl.5} parent=11 // pred_check_branch
        %252 = sbr.rel (%p250) target = $region28
      $region27: #{_sage_forward_impl.5} parent=11 // pred_region
        _
      $region28: #{_sage_forward_impl.5} parent=11 // pred_fallthru
        _
    $region12: #{_sage_forward_impl.5} parent=5 // pred_fallthru
      _
    %p253 = scmp.lt.s32.totalorder %s13, 2
    // Predicated region
    $region29: #{_sage_forward_impl.5} parent=5 // pred_check
      %p254 = pneg %p253
    $region30: #{_sage_forward_impl.5} parent=5 // pred_check_branch
      %256 = sbr.rel (%p254) target = $region32
    $region31: #{_sage_forward_impl.5} parent=5 // pred_region
      // Predicated region
      $region33: #{_sage_forward_impl.5} parent=31 // pred_check
        %p257 = pneg %p47
      $region34: #{_sage_forward_impl.5} parent=31 // pred_check_branch
        %259 = sbr.rel (%p257) target = $region36
      $region35: #{_sage_forward_impl.5} parent=31 // pred_region
        %s260 = smul.u32 4, %s20
        %s261 = smul.u32 2, %s21
        %p262 = scmp.lt.s32.totalorder %s260, 7
        %s263 = scalar_select %p262, %s260, 7
        %p264 = scmp.lt.s32.totalorder %s261, 1
        %s265 = scalar_select %p264, %s261, 1
        %s266 = smul.addr %s263, 2
        %s267 = sadd.s32 %s265, %s266
        %s268 = smul.addr %s267, 8
        %s269 = scalar_lea.vmem %s0, %s268
        %s270 = smul.u32 4, %s20
        %s271 = smul.u32 2, %s21
      $region36: #{_sage_forward_impl.5} parent=31 // pred_fallthru
        _
      // Predicated region
      $region37: #{_sage_forward_impl.5} parent=31 // pred_check
        %p272 = pneg %p99
      $region38: #{_sage_forward_impl.5} parent=31 // pred_check_branch
        %274 = sbr.rel (%p272) target = $region40
      $region39: #{_sage_forward_impl.5} parent=31 // pred_region
        %s275 = smul.u32 16, %s20
        %p276 = scmp.lt.s32.totalorder %s275, 31
        %s277 = scalar_select %p276, %s275, 31
        %s278 = smul.addr %s277, 8
        %s279 = scalar_lea.vmem %s2, %s278
        %s280 = smul.u32 16, %s20
      $region40: #{_sage_forward_impl.5} parent=31 // pred_fallthru
        _
      // Predicated region
      $region41: #{_sage_forward_impl.5} parent=31 // pred_check
        %p281 = pneg %p125
      $region42: #{_sage_forward_impl.5} parent=31 // pred_check_branch
        %283 = sbr.rel (%p281) target = $region44
      $region43: #{_sage_forward_impl.5} parent=31 // pred_region
        %s284 = smul.u32 16, %s20
        %p285 = scmp.lt.s32.totalorder %s284, 31
        %s286 = scalar_select %p285, %s284, 31
        %s287 = smul.addr %s286, 8
        %s288 = scalar_lea.vmem %s3, %s287
        %s289 = smul.u32 16, %s20
      $region44: #{_sage_forward_impl.5} parent=31 // pred_fallthru
        _
    $region32: #{_sage_forward_impl.5} parent=5 // pred_fallthru
      _
    %p290 = scmp.le.s32.totalorder 1, %s13
    %p291 = scmp.lt.s32.totalorder %s13, 3
    %p292 = pnand %p290, %p291
    %p293 = pneg %p292
    // Predicated region
    $region45: #{_sage_forward_impl.5} parent=5 // pred_check
      _
    $region46: #{_sage_forward_impl.5} parent=5 // pred_check_branch
      %295 = sbr.rel (%p292) target = $region48
    $region47: #{_sage_forward_impl.5} parent=5 // pred_region
      %s296 = ssub.s32 %s13, 1
      %s297 = smul.u32 4, %s22
      %s298 = smul.u32 2, %s23
      %p299 = scmp.lt.s32.totalorder %s297, 7
      %s300 = scalar_select %p299, %s297, 7
      %p301 = scmp.lt.s32.totalorder %s298, 1
      %s302 = scalar_select %p301, %s298, 1
      %s303 = smul.addr %s300, 2
      %s304 = sadd.s32 %s302, %s303
      %s305 = smul.addr %s304, 8
      %s306 = scalar_lea.vmem %s0, %s305
      %p307 = pneg %p53
      %p308 = pneg %p50
      %s309 = smul.u32 32, %s23
      %p310 = scmp.lt.s32.totalorder %s309, 31
      %s311 = scalar_select %p310, %s309, 31
      %s312 = smul.addr %s311, 8
      %s313 = scalar_lea.vmem %s1, %s312
      %p314 = pneg %p79
      %p315 = pneg %p76
      %s316 = smul.u32 16, %s22
      %p317 = scmp.lt.s32.totalorder %s316, 31
      %s318 = scalar_select %p317, %s316, 31
      %s319 = smul.addr %s318, 8
      %s320 = scalar_lea.vmem %s2, %s319
      %p321 = pneg %p105
      %p322 = pneg %p102
      %s323 = smul.u32 16, %s22
      %p324 = scmp.lt.s32.totalorder %s323, 31
      %s325 = scalar_select %p324, %s323, 31
      %s326 = smul.addr %s325, 8
      %s327 = scalar_lea.vmem %s3, %s326
      %p328 = pneg %p131
      %p329 = pneg %p128
      %p330 = pneg %p152
      %p331 = pneg %p149
      %p332 = pneg %p173
      %p333 = pneg %p170
      %p334 = pneg %p194
      %p335 = pneg %p191
      %p336 = pneg %p220
      %p337 = pneg %p217
      %s338 = smul.u32 16, %s22
      %p339 = scmp.lt.s32.totalorder %s338, 31
      %s340 = scalar_select %p339, %s338, 31
      %s341 = smul.addr %s340, 8
      %s342 = scalar_lea.vmem %s7, %s341
      %s343 = smul.u32 4, %s22
      %s344 = smul.u32 2, %s23
      %p345 = scmp.lt.s32.totalorder %s343, 7
      %s346 = scalar_select %p345, %s343, 7
      %p347 = scmp.lt.s32.totalorder %s344, 1
      %s348 = scalar_select %p347, %s344, 1
      %s349 = smul.addr %s346, 2
      %s350 = sadd.s32 %s348, %s349
      %s351 = smul.addr %s350, 8
      %s352 = scalar_lea.vmem %s0, %s351
      %s353 = smul.u32 4, %s22
      %s354 = smul.u32 2, %s23
      %s355 = smul.u32 32, %s23
      %p356 = scmp.lt.s32.totalorder %s355, 31
      %s357 = scalar_select %p356, %s355, 31
      %s358 = smul.addr %s357, 8
      %s359 = scalar_lea.vmem %s1, %s358
      %s360 = smul.u32 32, %s23
      %s361 = smul.u32 16, %s22
      %p362 = scmp.lt.s32.totalorder %s361, 31
      %s363 = scalar_select %p362, %s361, 31
      %s364 = smul.addr %s363, 8
      %s365 = scalar_lea.vmem %s2, %s364
      %s366 = smul.u32 16, %s22
      %s367 = smul.u32 16, %s22
      %p368 = scmp.lt.s32.totalorder %s367, 31
      %s369 = scalar_select %p368, %s367, 31
      %s370 = smul.addr %s369, 8
      %s371 = scalar_lea.vmem %s3, %s370
      %s372 = smul.u32 16, %s22
      %s373 = smul.u32 16, %s22
      %p374 = scmp.lt.s32.totalorder %s373, 31
      %s375 = scalar_select %p374, %s373, 31
      %s376 = smul.addr %s375, 8
      %s377 = scalar_lea.vmem %s7, %s376
      %s378 = smul.u32 16, %s22
      %p380 = scmp.eq.s32.totalorder %s23, 0
      // Predicated region
      $region49: #{_sage_forward_impl.5} parent=47 // pred_check
        %p381 = pneg %p380
      $region50: #{_sage_forward_impl.5} parent=47 // pred_check_branch
        %383 = sbr.rel (%p381) target = $region52
      $region51: #{_sage_forward_impl.5} parent=47 // pred_region
        %384 = vst [vmem:[#allocation2] sm:$0xff] 0.0
        %385 = vst [vmem:[#allocation2 + $0x8] sm:$0xff] 0.0
        %386 = vst [vmem:[#allocation2 + $0x10] sm:$0xff] 0.0
        %387 = vst [vmem:[#allocation2 + $0x18] sm:$0xff] 0.0
        %388 = vst [vmem:[#allocation2 + $0x20] sm:$0xff] 0.0
        %389 = vst [vmem:[#allocation2 + $0x28] sm:$0xff] 0.0
        %390 = vst [vmem:[#allocation2 + $0x30] sm:$0xff] 0.0
        %391 = vst [vmem:[#allocation2 + $0x38] sm:$0xff] 0.0
        %392 = vst [vmem:[#allocation2 + $0x40] sm:$0xff] 0.0
        %393 = vst [vmem:[#allocation2 + $0x48] sm:$0xff] 0.0
        %394 = vst [vmem:[#allocation2 + $0x50] sm:$0xff] 0.0
        %395 = vst [vmem:[#allocation2 + $0x58] sm:$0xff] 0.0
        %396 = vst [vmem:[#allocation2 + $0x60] sm:$0xff] 0.0
        %397 = vst [vmem:[#allocation2 + $0x68] sm:$0xff] 0.0
        %398 = vst [vmem:[#allocation2 + $0x70] sm:$0xff] 0.0
        %399 = vst [vmem:[#allocation2 + $0x78] sm:$0xff] 0.0
      $region52: #{_sage_forward_impl.5} parent=47 // pred_fallthru
        _
      %v400 = vld [vmem:[%s352] sm:$0xff]
      %v401 = vld [vmem:[%s352 + $0x8] sm:$0xff]
      %v402 = vld [vmem:[%s352 + $0x10] sm:$0xff]
      %v403 = vld [vmem:[%s352 + $0x18] sm:$0xff]
      %v404 = vld [vmem:[%s352 + $0x20] sm:$0xff]
      %v405 = vld [vmem:[%s352 + $0x28] sm:$0xff]
      %v406 = vld [vmem:[%s352 + $0x30] sm:$0xff]
      %v407 = vld [vmem:[%s352 + $0x38] sm:$0xff]
      %v408 = vunpack.c.l.s8.bf16 %v400
      %v409 = vunpack.c.l.s8.bf16 %v401
      %v410 = vunpack.c.h.s8.bf16 %v400
      %v411 = vunpack.c.h.s8.bf16 %v401
      %v412 = vunpack.c.l.s8.bf16 %v402
      %v413 = vunpack.c.l.s8.bf16 %v403
      %v414 = vunpack.c.h.s8.bf16 %v402
      %v415 = vunpack.c.h.s8.bf16 %v403
      %v416 = vunpack.c.l.s8.bf16 %v404
      %v417 = vunpack.c.l.s8.bf16 %v405
      %v418 = vunpack.c.h.s8.bf16 %v404
      %v419 = vunpack.c.h.s8.bf16 %v405
      %v420 = vunpack.c.l.s8.bf16 %v406
      %v421 = vunpack.c.l.s8.bf16 %v407
      %v422 = vunpack.c.h.s8.bf16 %v406
      %v423 = vunpack.c.h.s8.bf16 %v407
      %v424 = vld [vmem:[%s359] sm:$0xff]
      %v425 = vld [vmem:[%s359 + $0x8] sm:$0xff]
      %v426 = vld [vmem:[%s359 + $0x10] sm:$0xff]
      %v427 = vld [vmem:[%s359 + $0x18] sm:$0xff]
      %v428 = vld [vmem:[%s359 + $0x20] sm:$0xff]
      %v429 = vld [vmem:[%s359 + $0x28] sm:$0xff]
      %v430 = vld [vmem:[%s359 + $0x30] sm:$0xff]
      %v431 = vld [vmem:[%s359 + $0x38] sm:$0xff]
      %v432 = vld [vmem:[%s359 + $0x40] sm:$0xff]
      %v433 = vld [vmem:[%s359 + $0x48] sm:$0xff]
      %v434 = vld [vmem:[%s359 + $0x50] sm:$0xff]
      %v435 = vld [vmem:[%s359 + $0x58] sm:$0xff]
      %v436 = vld [vmem:[%s359 + $0x60] sm:$0xff]
      %v437 = vld [vmem:[%s359 + $0x68] sm:$0xff]
      %v438 = vld [vmem:[%s359 + $0x70] sm:$0xff]
      %v439 = vld [vmem:[%s359 + $0x78] sm:$0xff]
      %v440 = vld [vmem:[%s359 + $0x80] sm:$0xff]
      %v441 = vld [vmem:[%s359 + $0x88] sm:$0xff]
      %v442 = vld [vmem:[%s359 + $0x90] sm:$0xff]
      %v443 = vld [vmem:[%s359 + $0x98] sm:$0xff]
      %v444 = vld [vmem:[%s359 + $0xa0] sm:$0xff]
      %v445 = vld [vmem:[%s359 + $0xa8] sm:$0xff]
      %v446 = vld [vmem:[%s359 + $0xb0] sm:$0xff]
      %v447 = vld [vmem:[%s359 + $0xb8] sm:$0xff]
      %v448 = vld [vmem:[%s359 + $0xc0] sm:$0xff]
      %v449 = vld [vmem:[%s359 + $0xc8] sm:$0xff]
      %v450 = vld [vmem:[%s359 + $0xd0] sm:$0xff]
      %v451 = vld [vmem:[%s359 + $0xd8] sm:$0xff]
      %v452 = vld [vmem:[%s359 + $0xe0] sm:$0xff]
      %v453 = vld [vmem:[%s359 + $0xe8] sm:$0xff]
      %v454 = vld [vmem:[%s359 + $0xf0] sm:$0xff]
      %v455 = vld [vmem:[%s359 + $0xf8] sm:$0xff]
      %v456 = vpack.c.bf16 %v425, %v424
      %v457 = vpack.c.bf16 %v427, %v426
      %v458 = vpack.c.bf16 %v429, %v428
      %v459 = vpack.c.bf16 %v431, %v430
      %v460 = vpack.c.bf16 %v433, %v432
      %v461 = vpack.c.bf16 %v435, %v434
      %v462 = vpack.c.bf16 %v437, %v436
      %v463 = vpack.c.bf16 %v439, %v438
      %v464 = vpack.c.bf16 %v441, %v440
      %v465 = vpack.c.bf16 %v443, %v442
      %v466 = vpack.c.bf16 %v445, %v444
      %v467 = vpack.c.bf16 %v447, %v446
      %v468 = vpack.c.bf16 %v449, %v448
      %v469 = vpack.c.bf16 %v451, %v450
      %v470 = vpack.c.bf16 %v453, %v452
      %v471 = vpack.c.bf16 %v455, %v454
      %v472 = vld [vmem:[#allocation2] sm:$0xff]
      %v473 = vld [vmem:[#allocation2 + $0x8] sm:$0xff]
      %v474 = vld [vmem:[#allocation2 + $0x10] sm:$0xff]
      %v475 = vld [vmem:[#allocation2 + $0x18] sm:$0xff]
      %v476 = vld [vmem:[#allocation2 + $0x20] sm:$0xff]
      %v477 = vld [vmem:[#allocation2 + $0x28] sm:$0xff]
      %v478 = vld [vmem:[#allocation2 + $0x30] sm:$0xff]
      %v479 = vld [vmem:[#allocation2 + $0x38] sm:$0xff]
      %v480 = vld [vmem:[#allocation2 + $0x40] sm:$0xff]
      %v481 = vld [vmem:[#allocation2 + $0x48] sm:$0xff]
      %v482 = vld [vmem:[#allocation2 + $0x50] sm:$0xff]
      %v483 = vld [vmem:[#allocation2 + $0x58] sm:$0xff]
      %v484 = vld [vmem:[#allocation2 + $0x60] sm:$0xff]
      %v485 = vld [vmem:[#allocation2 + $0x68] sm:$0xff]
      %v486 = vld [vmem:[#allocation2 + $0x70] sm:$0xff]
      %v487 = vld [vmem:[#allocation2 + $0x78] sm:$0xff]
      %488 = vmatprep.subr.bf16.mxu0 0
      %489 = vmatpush1.bf16.msra.mxu0 %v456
      %490 = vmatprep.subr.bf16.mxu0 0
      %491 = vmatpush1.bf16.msra.mxu0 %v457
      %492 = vmatprep.subr.bf16.mxu0 0
      %493 = vmatpush1.bf16.msra.mxu0 %v458
      %494 = vmatprep.subr.bf16.mxu0 0
      %495 = vmatpush1.bf16.msra.mxu0 %v459
      %496 = vmatprep.subr.bf16.mxu0 0
      %497 = vmatpush1.bf16.msra.mxu0 %v460
      %498 = vmatprep.subr.bf16.mxu0 0
      %499 = vmatpush1.bf16.msra.mxu0 %v461
      %500 = vmatprep.subr.bf16.mxu0 0
      %501 = vmatpush1.bf16.msra.mxu0 %v462
      %502 = vmatprep.subr.bf16.mxu0 0
      %503 = vmatpush1.bf16.msra.mxu0 %v463
      %504 = vmatprep.subr.bf16.mxu0 0
      %505 = vmatpush1.bf16.msra.mxu0 %v464
      %506 = vmatprep.subr.bf16.mxu0 0
      %507 = vmatpush1.bf16.msra.mxu0 %v465
      %508 = vmatprep.subr.bf16.mxu0 0
      %509 = vmatpush1.bf16.msra.mxu0 %v466
      %510 = vmatprep.subr.bf16.mxu0 0
      %511 = vmatpush1.bf16.msra.mxu0 %v467
      %512 = vmatprep.subr.bf16.mxu0 0
      %513 = vmatpush1.bf16.msra.mxu0 %v468
      %514 = vmatprep.subr.bf16.mxu0 0
      %515 = vmatpush1.bf16.msra.mxu0 %v469
      %516 = vmatprep.subr.bf16.mxu0 0
      %517 = vmatpush1.bf16.msra.mxu0 %v470
      %518 = vmatprep.subr.bf16.mxu0 0
      %519 = vmatpush1.bf16.msra.mxu0 %v471
      %520 = vmatprep.mubr.bf16.mxu0 %v409
      %521 = vmatmul.mubr.bf16.gmra.mrb[0].mxu0 %v408
      %v522 = vpop.f32.mrb[0].mxu0
      %v523 = vadd.f32 0.0, %v522
      %v524 = vpop.f32.mrb[0].mxu0
      %v525 = vpop.f32.mrb[0].mxu0
      %v526 = vadd.f32 0.0, %v525
      %v527 = vpop.f32.mrb[0].mxu0
      %528 = vmatprep.mubr.bf16.mxu0 %v411
      %529 = vmatmul.mubr.bf16.gmra.mrb[0].mxu0 %v410
      %v530 = vpop.f32.mrb[0].mxu0
      %v531 = vadd.f32 0.0, %v530
      %v532 = vpop.f32.mrb[0].mxu0
      %v533 = vpop.f32.mrb[0].mxu0
      %v534 = vadd.f32 0.0, %v533
      %v535 = vpop.f32.mrb[0].mxu0
      %536 = vmatprep.mubr.bf16.mxu0 %v413
      %537 = vmatmul.mubr.bf16.gmra.mrb[0].mxu0 %v412
      %v538 = vpop.f32.mrb[0].mxu0
      %v539 = vadd.f32 0.0, %v538
      %v540 = vpop.f32.mrb[0].mxu0
      %v541 = vpop.f32.mrb[0].mxu0
      %v542 = vadd.f32 0.0, %v541
      %v543 = vpop.f32.mrb[0].mxu0
      %544 = vmatprep.mubr.bf16.mxu0 %v415
      %545 = vmatmul.mubr.bf16.gmra.mrb[0].mxu0 %v414
      %v546 = vpop.f32.mrb[0].mxu0
      %v547 = vadd.f32 0.0, %v546
      %v548 = vpop.f32.mrb[0].mxu0
      %v549 = vpop.f32.mrb[0].mxu0
      %v550 = vadd.f32 0.0, %v549
      %v551 = vpop.f32.mrb[0].mxu0
      %552 = vmatprep.mubr.bf16.mxu0 %v417
      %553 = vmatmul.mubr.bf16.gmra.mrb[0].mxu0 %v416
      %v554 = vpop.f32.mrb[0].mxu0
      %v555 = vadd.f32 0.0, %v554
      %v556 = vpop.f32.mrb[0].mxu0
      %v557 = vpop.f32.mrb[0].mxu0
      %v558 = vadd.f32 0.0, %v557
      %v559 = vpop.f32.mrb[0].mxu0
      %560 = vmatprep.mubr.bf16.mxu0 %v419
      %561 = vmatmul.mubr.bf16.gmra.mrb[0].mxu0 %v418
      %v562 = vpop.f32.mrb[0].mxu0
      %v563 = vadd.f32 0.0, %v562
      %v564 = vpop.f32.mrb[0].mxu0
      %v565 = vpop.f32.mrb[0].mxu0
      %v566 = vadd.f32 0.0, %v565
      %v567 = vpop.f32.mrb[0].mxu0
      %568 = vmatprep.mubr.bf16.mxu0 %v421
      %569 = vmatmul.mubr.bf16.gmra.mrb[0].mxu0 %v420
      %v570 = vpop.f32.mrb[0].mxu0
      %v571 = vadd.f32 0.0, %v570
      %v572 = vpop.f32.mrb[0].mxu0
      %v573 = vpop.f32.mrb[0].mxu0
      %v574 = vadd.f32 0.0, %v573
      %v575 = vpop.f32.mrb[0].mxu0
      %576 = vmatprep.mubr.bf16.mxu0 %v423
      %577 = vmatmul.mubr.bf16.gmra.mrb[0].mxu0 %v422
      %v578 = vpop.f32.mrb[0].mxu0
      %v579 = vadd.f32 0.0, %v578
      %v580 = vpop.f32.mrb[0].mxu0
      %v581 = vpop.f32.mrb[0].mxu0
      %v582 = vadd.f32 0.0, %v581
      %v583 = vpop.f32.mrb[0].mxu0
      %584 = vdwg.mxu0
      %v585 = vadd.f32 %v472, %v523
      %v586 = vadd.f32 %v473, %v526
      %v587 = vadd.f32 %v474, %v531
      %v588 = vadd.f32 %v475, %v534
      %v589 = vadd.f32 %v476, %v539
      %v590 = vadd.f32 %v477, %v542
      %v591 = vadd.f32 %v478, %v547
      %v592 = vadd.f32 %v479, %v550
      %v593 = vadd.f32 %v480, %v555
      %v594 = vadd.f32 %v481, %v558
      %v595 = vadd.f32 %v482, %v563
      %v596 = vadd.f32 %v483, %v566
      %v597 = vadd.f32 %v484, %v571
      %v598 = vadd.f32 %v485, %v574
      %v599 = vadd.f32 %v486, %v579
      %v600 = vadd.f32 %v487, %v582
      %601 = vst [vmem:[#allocation2] sm:$0xff] %v585
      %602 = vst [vmem:[#allocation2 + $0x8] sm:$0xff] %v586
      %603 = vst [vmem:[#allocation2 + $0x10] sm:$0xff] %v587
      %604 = vst [vmem:[#allocation2 + $0x18] sm:$0xff] %v588
      %605 = vst [vmem:[#allocation2 + $0x20] sm:$0xff] %v589
      %606 = vst [vmem:[#allocation2 + $0x28] sm:$0xff] %v590
      %607 = vst [vmem:[#allocation2 + $0x30] sm:$0xff] %v591
      %608 = vst [vmem:[#allocation2 + $0x38] sm:$0xff] %v592
      %609 = vst [vmem:[#allocation2 + $0x40] sm:$0xff] %v593
      %610 = vst [vmem:[#allocation2 + $0x48] sm:$0xff] %v594
      %611 = vst [vmem:[#allocation2 + $0x50] sm:$0xff] %v595
      %612 = vst [vmem:[#allocation2 + $0x58] sm:$0xff] %v596
      %613 = vst [vmem:[#allocation2 + $0x60] sm:$0xff] %v597
      %614 = vst [vmem:[#allocation2 + $0x68] sm:$0xff] %v598
      %615 = vst [vmem:[#allocation2 + $0x70] sm:$0xff] %v599
      %616 = vst [vmem:[#allocation2 + $0x78] sm:$0xff] %v600
      // Predicated region
      $region53: #{_sage_forward_impl.5} parent=47 // pred_check
        %p617 = pneg %p380
      $region54: #{_sage_forward_impl.5} parent=47 // pred_check_branch
        %619 = sbr.rel (%p617) target = $region56
      $region55: #{_sage_forward_impl.5} parent=47 // pred_region
        %v620 = vld [vmem:[#allocation2] sm:$0xff]
        %v621 = vld [vmem:[#allocation2 + $0x8] sm:$0xff]
        %v622 = vld [vmem:[#allocation2 + $0x10] sm:$0xff]
        %v623 = vld [vmem:[#allocation2 + $0x18] sm:$0xff]
        %v624 = vld [vmem:[#allocation2 + $0x20] sm:$0xff]
        %v625 = vld [vmem:[#allocation2 + $0x28] sm:$0xff]
        %v626 = vld [vmem:[#allocation2 + $0x30] sm:$0xff]
        %v627 = vld [vmem:[#allocation2 + $0x38] sm:$0xff]
        %v628 = vld [vmem:[#allocation2 + $0x40] sm:$0xff]
        %v629 = vld [vmem:[#allocation2 + $0x48] sm:$0xff]
        %v630 = vld [vmem:[#allocation2 + $0x50] sm:$0xff]
        %v631 = vld [vmem:[#allocation2 + $0x58] sm:$0xff]
        %v632 = vld [vmem:[#allocation2 + $0x60] sm:$0xff]
        %v633 = vld [vmem:[#allocation2 + $0x68] sm:$0xff]
        %v634 = vld [vmem:[#allocation2 + $0x70] sm:$0xff]
        %v635 = vld [vmem:[#allocation2 + $0x78] sm:$0xff]
        %v636 = vld [vmem:[%s371] sm:$0xff]
        %v637 = vld [vmem:[%s371 + $0x8] sm:$0xff]
        %v638 = vld [vmem:[%s371 + $0x10] sm:$0xff]
        %v639 = vld [vmem:[%s371 + $0x18] sm:$0xff]
        %v640 = vld [vmem:[%s371 + $0x20] sm:$0xff]
        %v641 = vld [vmem:[%s371 + $0x28] sm:$0xff]
        %v642 = vld [vmem:[%s371 + $0x30] sm:$0xff]
        %v643 = vld [vmem:[%s371 + $0x38] sm:$0xff]
        %v644 = vld [vmem:[%s371 + $0x40] sm:$0xff]
        %v645 = vld [vmem:[%s371 + $0x48] sm:$0xff]
        %v646 = vld [vmem:[%s371 + $0x50] sm:$0xff]
        %v647 = vld [vmem:[%s371 + $0x58] sm:$0xff]
        %v648 = vld [vmem:[%s371 + $0x60] sm:$0xff]
        %v649 = vld [vmem:[%s371 + $0x68] sm:$0xff]
        %v650 = vld [vmem:[%s371 + $0x70] sm:$0xff]
        %v651 = vld [vmem:[%s371 + $0x78] sm:$0xff]
        %653 = vset.pattern.permute.xlu0 0
        %654 = vperm.xlu0 %653, %v636
        %v655 = vpop.permute.xlu0 %654
        %658 = vset.pattern.permute.xlu0 0
        %659 = vperm.xlu0 %658, %v637
        %v660 = vpop.permute.xlu0 %659
        %663 = vset.pattern.permute.xlu0 0
        %664 = vperm.xlu0 %663, %v638
        %v665 = vpop.permute.xlu0 %664
        %668 = vset.pattern.permute.xlu0 0
        %669 = vperm.xlu0 %668, %v639
        %v670 = vpop.permute.xlu0 %669
        %673 = vset.pattern.permute.xlu0 0
        %674 = vperm.xlu0 %673, %v640
        %v675 = vpop.permute.xlu0 %674
        %678 = vset.pattern.permute.xlu0 0
        %679 = vperm.xlu0 %678, %v641
        %v680 = vpop.permute.xlu0 %679
        %683 = vset.pattern.permute.xlu0 0
        %684 = vperm.xlu0 %683, %v642
        %v685 = vpop.permute.xlu0 %684
        %688 = vset.pattern.permute.xlu0 0
        %689 = vperm.xlu0 %688, %v643
        %v690 = vpop.permute.xlu0 %689
        %693 = vset.pattern.permute.xlu0 0
        %694 = vperm.xlu0 %693, %v644
        %v695 = vpop.permute.xlu0 %694
        %698 = vset.pattern.permute.xlu0 0
        %699 = vperm.xlu0 %698, %v645
        %v700 = vpop.permute.xlu0 %699
        %703 = vset.pattern.permute.xlu0 0
        %704 = vperm.xlu0 %703, %v646
        %v705 = vpop.permute.xlu0 %704
        %708 = vset.pattern.permute.xlu0 0
        %709 = vperm.xlu0 %708, %v647
        %v710 = vpop.permute.xlu0 %709
        %713 = vset.pattern.permute.xlu0 0
        %714 = vperm.xlu0 %713, %v648
        %v715 = vpop.permute.xlu0 %714
        %718 = vset.pattern.permute.xlu0 0
        %719 = vperm.xlu0 %718, %v649
        %v720 = vpop.permute.xlu0 %719
        %723 = vset.pattern.permute.xlu0 0
        %724 = vperm.xlu0 %723, %v650
        %v725 = vpop.permute.xlu0 %724
        %728 = vset.pattern.permute.xlu0 0
        %729 = vperm.xlu0 %728, %v651
        %v730 = vpop.permute.xlu0 %729
        %v732 = vmul.f32 %v620, %v655
        %v733 = vmul.f32 %v621, %v660
        %v734 = vmul.f32 %v622, %v665
        %v735 = vmul.f32 %v623, %v670
        %v736 = vmul.f32 %v624, %v675
        %v737 = vmul.f32 %v625, %v680
        %v738 = vmul.f32 %v626, %v685
        %v739 = vmul.f32 %v627, %v690
        %v740 = vmul.f32 %v628, %v695
        %v741 = vmul.f32 %v629, %v700
        %v742 = vmul.f32 %v630, %v705
        %v743 = vmul.f32 %v631, %v710
        %v744 = vmul.f32 %v632, %v715
        %v745 = vmul.f32 %v633, %v720
        %v746 = vmul.f32 %v634, %v725
        %v747 = vmul.f32 %v635, %v730
        %v748 = vld [vmem:[%s365] sm:$0xff]
        %v749 = vld [vmem:[%s365 + $0x8] sm:$0xff]
        %v750 = vld [vmem:[%s365 + $0x10] sm:$0xff]
        %v751 = vld [vmem:[%s365 + $0x18] sm:$0xff]
        %v752 = vld [vmem:[%s365 + $0x20] sm:$0xff]
        %v753 = vld [vmem:[%s365 + $0x28] sm:$0xff]
        %v754 = vld [vmem:[%s365 + $0x30] sm:$0xff]
        %v755 = vld [vmem:[%s365 + $0x38] sm:$0xff]
        %v756 = vld [vmem:[%s365 + $0x40] sm:$0xff]
        %v757 = vld [vmem:[%s365 + $0x48] sm:$0xff]
        %v758 = vld [vmem:[%s365 + $0x50] sm:$0xff]
        %v759 = vld [vmem:[%s365 + $0x58] sm:$0xff]
        %v760 = vld [vmem:[%s365 + $0x60] sm:$0xff]
        %v761 = vld [vmem:[%s365 + $0x68] sm:$0xff]
        %v762 = vld [vmem:[%s365 + $0x70] sm:$0xff]
        %v763 = vld [vmem:[%s365 + $0x78] sm:$0xff]
        %v764 = vpack.c.bf16 %v749, %v748
        %v765 = vpack.c.bf16 %v751, %v750
        %v766 = vpack.c.bf16 %v753, %v752
        %v767 = vpack.c.bf16 %v755, %v754
        %v768 = vpack.c.bf16 %v757, %v756
        %v769 = vpack.c.bf16 %v759, %v758
        %v770 = vpack.c.bf16 %v761, %v760
        %v771 = vpack.c.bf16 %v763, %v762
        %v772 = vld [vmem:[%s4] sm:$0xf]
        %v773 = vld [vmem:[%s4 + $0x4] sm:$0xf]
        %v774 = vld [vmem:[%s4 + $0x8] sm:$0xf]
        %v775 = vld [vmem:[%s4 + $0xc] sm:$0xf]
        %v776 = vld [vmem:[%s4 + $0x10] sm:$0xf]
        %v777 = vld [vmem:[%s4 + $0x14] sm:$0xf]
        %v778 = vld [vmem:[%s4 + $0x18] sm:$0xf]
        %v779 = vld [vmem:[%s4 + $0x1c] sm:$0xf]
        %v780 = vld [vmem:[%s4 + $0x20] sm:$0xf]
        %v781 = vld [vmem:[%s4 + $0x24] sm:$0xf]
        %v782 = vld [vmem:[%s4 + $0x28] sm:$0xf]
        %v783 = vld [vmem:[%s4 + $0x2c] sm:$0xf]
        %v784 = vld [vmem:[%s4 + $0x30] sm:$0xf]
        %v785 = vld [vmem:[%s4 + $0x34] sm:$0xf]
        %v786 = vld [vmem:[%s4 + $0x38] sm:$0xf]
        %v787 = vld [vmem:[%s4 + $0x3c] sm:$0xf]
        %v788 = vpack.c.bf16 %v733, %v732
        %v789 = vpack.c.bf16 %v735, %v734
        %v790 = vpack.c.bf16 %v737, %v736
        %v791 = vpack.c.bf16 %v739, %v738
        %v792 = vpack.c.bf16 %v741, %v740
        %v793 = vpack.c.bf16 %v743, %v742
        %v794 = vpack.c.bf16 %v745, %v744
        %v795 = vpack.c.bf16 %v747, %v746
        %v796 = vld [vmem:[%s5] sm:$0xf]
        %v797 = vld [vmem:[%s5 + $0x4] sm:$0xf]
        %v798 = vld [vmem:[%s5 + $0x8] sm:$0xf]
        %v799 = vld [vmem:[%s5 + $0xc] sm:$0xf]
        %v800 = vld [vmem:[%s5 + $0x10] sm:$0xf]
        %v801 = vld [vmem:[%s5 + $0x14] sm:$0xf]
        %v802 = vld [vmem:[%s5 + $0x18] sm:$0xf]
        %v803 = vld [vmem:[%s5 + $0x1c] sm:$0xf]
        %v804 = vld [vmem:[%s5 + $0x20] sm:$0xf]
        %v805 = vld [vmem:[%s5 + $0x24] sm:$0xf]
        %v806 = vld [vmem:[%s5 + $0x28] sm:$0xf]
        %v807 = vld [vmem:[%s5 + $0x2c] sm:$0xf]
        %v808 = vld [vmem:[%s5 + $0x30] sm:$0xf]
        %v809 = vld [vmem:[%s5 + $0x34] sm:$0xf]
        %v810 = vld [vmem:[%s5 + $0x38] sm:$0xf]
        %v811 = vld [vmem:[%s5 + $0x3c] sm:$0xf]
        %v828 = vunpack.c.l.b16 %v796
        %v829 = vunpack.c.l.b16 %v797
        %v830 = vunpack.c.l.b16 %v798
        %v831 = vunpack.c.l.b16 %v799
        %v832 = vunpack.c.l.b16 %v800
        %v833 = vunpack.c.l.b16 %v801
        %v834 = vunpack.c.l.b16 %v802
        %v835 = vunpack.c.l.b16 %v803
        %v836 = vunpack.c.l.b16 %v804
        %v837 = vunpack.c.l.b16 %v805
        %v838 = vunpack.c.l.b16 %v806
        %v839 = vunpack.c.l.b16 %v807
        %v840 = vunpack.c.l.b16 %v808
        %v841 = vunpack.c.l.b16 %v809
        %v842 = vunpack.c.l.b16 %v810
        %v843 = vunpack.c.l.b16 %v811
        %v844 = vpack.c.b16 %v829, %v828
        %v845 = vpack.c.b16 %v831, %v830
        %v846 = vpack.c.b16 %v833, %v832
        %v847 = vpack.c.b16 %v835, %v834
        %v848 = vpack.c.b16 %v837, %v836
        %v849 = vpack.c.b16 %v839, %v838
        %v850 = vpack.c.b16 %v841, %v840
        %v851 = vpack.c.b16 %v843, %v842
        %860 = vmatprep.subr.bf16.mxu0 0
        %861 = vmatpush1.bf16.msra.mxu0 %v844
        %862 = vmatprep.subr.bf16.mxu0 0
        %863 = vmatpush1.bf16.msra.mxu0 %v845
        %864 = vmatprep.subr.bf16.mxu0 0
        %865 = vmatpush1.bf16.msra.mxu0 %v846
        %866 = vmatprep.subr.bf16.mxu0 0
        %867 = vmatpush1.bf16.msra.mxu0 %v847
        %868 = vmatprep.subr.bf16.mxu0 0
        %869 = vmatpush1.bf16.msra.mxu0 %v848
        %870 = vmatprep.subr.bf16.mxu0 0
        %871 = vmatpush1.bf16.msra.mxu0 %v849
        %872 = vmatprep.subr.bf16.mxu0 0
        %873 = vmatpush1.bf16.msra.mxu0 %v850
        %874 = vmatprep.subr.bf16.mxu0 0
        %875 = vmatpush1.bf16.msra.mxu0 %v851
        %876 = vmatprep.subr.bf16.mxu0 0
        %877 = vmatpush1.bf16.msra.mxu0 0
        %878 = vmatprep.subr.bf16.mxu0 0
        %879 = vmatpush1.bf16.msra.mxu0 0
        %880 = vmatprep.subr.bf16.mxu0 0
        %881 = vmatpush1.bf16.msra.mxu0 0
        %882 = vmatprep.subr.bf16.mxu0 0
        %883 = vmatpush1.bf16.msra.mxu0 0
        %884 = vmatprep.subr.bf16.mxu0 0
        %885 = vmatpush1.bf16.msra.mxu0 0
        %886 = vmatprep.subr.bf16.mxu0 0
        %887 = vmatpush1.bf16.msra.mxu0 0
        %888 = vmatprep.subr.bf16.mxu0 0
        %889 = vmatpush1.bf16.msra.mxu0 0
        %890 = vmatprep.subr.bf16.mxu0 0
        %891 = vmatpush1.bf16.msra.mxu0 0
        %892 = vmatprep.mubr.bf16.mxu0 0
        %893 = vmatmul.mubr.bf16.gmra.mrb[0].mxu0 %v788
        %v894 = vpop.f32.mrb[0].mxu0
        %v895 = vadd.f32 0.0, %v894
        %v896 = vpop.f32.mrb[0].mxu0
        %v897 = vpop.f32.mrb[0].mxu0
        %v898 = vadd.f32 0.0, %v897
        %v899 = vpop.f32.mrb[0].mxu0
        %900 = vmatprep.mubr.bf16.mxu0 0
        %901 = vmatmul.mubr.bf16.gmra.mrb[0].mxu0 %v789
        %v902 = vpop.f32.mrb[0].mxu0
        %v903 = vadd.f32 0.0, %v902
        %v904 = vpop.f32.mrb[0].mxu0
        %v905 = vpop.f32.mrb[0].mxu0
        %v906 = vadd.f32 0.0, %v905
        %v907 = vpop.f32.mrb[0].mxu0
        %908 = vmatprep.mubr.bf16.mxu0 0
        %909 = vmatmul.mubr.bf16.gmra.mrb[0].mxu0 %v790
        %v910 = vpop.f32.mrb[0].mxu0
        %v911 = vadd.f32 0.0, %v910
        %v912 = vpop.f32.mrb[0].mxu0
        %v913 = vpop.f32.mrb[0].mxu0
        %v914 = vadd.f32 0.0, %v913
        %v915 = vpop.f32.mrb[0].mxu0
        %916 = vmatprep.mubr.bf16.mxu0 0
        %917 = vmatmul.mubr.bf16.gmra.mrb[0].mxu0 %v791
        %v918 = vpop.f32.mrb[0].mxu0
        %v919 = vadd.f32 0.0, %v918
        %v920 = vpop.f32.mrb[0].mxu0
        %v921 = vpop.f32.mrb[0].mxu0
        %v922 = vadd.f32 0.0, %v921
        %v923 = vpop.f32.mrb[0].mxu0
        %924 = vmatprep.mubr.bf16.mxu0 0
        %925 = vmatmul.mubr.bf16.gmra.mrb[0].mxu0 %v792
        %v926 = vpop.f32.mrb[0].mxu0
        %v927 = vadd.f32 0.0, %v926
        %v928 = vpop.f32.mrb[0].mxu0
        %v929 = vpop.f32.mrb[0].mxu0
        %v930 = vadd.f32 0.0, %v929
        %v931 = vpop.f32.mrb[0].mxu0
        %932 = vmatprep.mubr.bf16.mxu0 0
        %933 = vmatmul.mubr.bf16.gmra.mrb[0].mxu0 %v793
        %v934 = vpop.f32.mrb[0].mxu0
        %v935 = vadd.f32 0.0, %v934
        %v936 = vpop.f32.mrb[0].mxu0
        %v937 = vpop.f32.mrb[0].mxu0
        %v938 = vadd.f32 0.0, %v937
        %v939 = vpop.f32.mrb[0].mxu0
        %940 = vmatprep.mubr.bf16.mxu0 0
        %941 = vmatmul.mubr.bf16.gmra.mrb[0].mxu0 %v794
        %v942 = vpop.f32.mrb[0].mxu0
        %v943 = vadd.f32 0.0, %v942
        %v944 = vpop.f32.mrb[0].mxu0
        %v945 = vpop.f32.mrb[0].mxu0
        %v946 = vadd.f32 0.0, %v945
        %v947 = vpop.f32.mrb[0].mxu0
        %948 = vmatprep.mubr.bf16.mxu0 0
        %949 = vmatmul.mubr.bf16.gmra.mrb[0].mxu0 %v795
        %v950 = vpop.f32.mrb[0].mxu0
        %v951 = vadd.f32 0.0, %v950
        %v952 = vpop.f32.mrb[0].mxu0
        %v953 = vpop.f32.mrb[0].mxu0
        %v954 = vadd.f32 0.0, %v953
        %v955 = vpop.f32.mrb[0].mxu0
        %956 = vdwg.mxu0
        %v973 = vunpack.c.l.b16 %v772
        %v974 = vunpack.c.l.b16 %v773
        %v975 = vunpack.c.l.b16 %v774
        %v976 = vunpack.c.l.b16 %v775
        %v977 = vunpack.c.l.b16 %v776
        %v978 = vunpack.c.l.b16 %v777
        %v979 = vunpack.c.l.b16 %v778
        %v980 = vunpack.c.l.b16 %v779
        %v981 = vunpack.c.l.b16 %v780
        %v982 = vunpack.c.l.b16 %v781
        %v983 = vunpack.c.l.b16 %v782
        %v984 = vunpack.c.l.b16 %v783
        %v985 = vunpack.c.l.b16 %v784
        %v986 = vunpack.c.l.b16 %v785
        %v987 = vunpack.c.l.b16 %v786
        %v988 = vunpack.c.l.b16 %v787
        %v989 = vpack.c.b16 %v974, %v973
        %v990 = vpack.c.b16 %v976, %v975
        %v991 = vpack.c.b16 %v978, %v977
        %v992 = vpack.c.b16 %v980, %v979
        %v993 = vpack.c.b16 %v982, %v981
        %v994 = vpack.c.b16 %v984, %v983
        %v995 = vpack.c.b16 %v986, %v985
        %v996 = vpack.c.b16 %v988, %v987
        %1005 = vmatprep.subr.bf16.mxu0 0
        %1006 = vmatpush1.bf16.msra.mxu0 %v989
        %1007 = vmatprep.subr.bf16.mxu0 0
        %1008 = vmatpush1.bf16.msra.mxu0 %v990
        %1009 = vmatprep.subr.bf16.mxu0 0
        %1010 = vmatpush1.bf16.msra.mxu0 %v991
        %1011 = vmatprep.subr.bf16.mxu0 0
        %1012 = vmatpush1.bf16.msra.mxu0 %v992
        %1013 = vmatprep.subr.bf16.mxu0 0
        %1014 = vmatpush1.bf16.msra.mxu0 %v993
        %1015 = vmatprep.subr.bf16.mxu0 0
        %1016 = vmatpush1.bf16.msra.mxu0 %v994
        %1017 = vmatprep.subr.bf16.mxu0 0
        %1018 = vmatpush1.bf16.msra.mxu0 %v995
        %1019 = vmatprep.subr.bf16.mxu0 0
        %1020 = vmatpush1.bf16.msra.mxu0 %v996
        %1021 = vmatprep.subr.bf16.mxu0 0
        %1022 = vmatpush1.bf16.msra.mxu0 0
        %1023 = vmatprep.subr.bf16.mxu0 0
        %1024 = vmatpush1.bf16.msra.mxu0 0
        %1025 = vmatprep.subr.bf16.mxu0 0
        %1026 = vmatpush1.bf16.msra.mxu0 0
        %1027 = vmatprep.subr.bf16.mxu0 0
        %1028 = vmatpush1.bf16.msra.mxu0 0
        %1029 = vmatprep.subr.bf16.mxu0 0
        %1030 = vmatpush1.bf16.msra.mxu0 0
        %1031 = vmatprep.subr.bf16.mxu0 0
        %1032 = vmatpush1.bf16.msra.mxu0 0
        %1033 = vmatprep.subr.bf16.mxu0 0
        %1034 = vmatpush1.bf16.msra.mxu0 0
        %1035 = vmatprep.subr.bf16.mxu0 0
        %1036 = vmatpush1.bf16.msra.mxu0 0
        %1037 = vmatprep.mubr.bf16.mxu0 0
        %1038 = vmatmul.mubr.bf16.gmra.mrb[0].mxu0 %v764
        %v1039 = vpop.f32.mrb[0].mxu0
        %v1040 = vadd.f32 %v895, %v1039
        %v1041 = vpop.f32.mrb[0].mxu0
        %v1042 = vpop.f32.mrb[0].mxu0
        %v1043 = vadd.f32 %v898, %v1042
        %v1044 = vpop.f32.mrb[0].mxu0
        %1045 = vmatprep.mubr.bf16.mxu0 0
        %1046 = vmatmul.mubr.bf16.gmra.mrb[0].mxu0 %v765
        %v1047 = vpop.f32.mrb[0].mxu0
        %v1048 = vadd.f32 %v903, %v1047
        %v1049 = vpop.f32.mrb[0].mxu0
        %v1050 = vpop.f32.mrb[0].mxu0
        %v1051 = vadd.f32 %v906, %v1050
        %v1052 = vpop.f32.mrb[0].mxu0
        %1053 = vmatprep.mubr.bf16.mxu0 0
        %1054 = vmatmul.mubr.bf16.gmra.mrb[0].mxu0 %v766
        %v1055 = vpop.f32.mrb[0].mxu0
        %v1056 = vadd.f32 %v911, %v1055
        %v1057 = vpop.f32.mrb[0].mxu0
        %v1058 = vpop.f32.mrb[0].mxu0
        %v1059 = vadd.f32 %v914, %v1058
        %v1060 = vpop.f32.mrb[0].mxu0
        %1061 = vmatprep.mubr.bf16.mxu0 0
        %1062 = vmatmul.mubr.bf16.gmra.mrb[0].mxu0 %v767
        %v1063 = vpop.f32.mrb[0].mxu0
        %v1064 = vadd.f32 %v919, %v1063
        %v1065 = vpop.f32.mrb[0].mxu0
        %v1066 = vpop.f32.mrb[0].mxu0
        %v1067 = vadd.f32 %v922, %v1066
        %v1068 = vpop.f32.mrb[0].mxu0
        %1069 = vmatprep.mubr.bf16.mxu0 0
        %1070 = vmatmul.mubr.bf16.gmra.mrb[0].mxu0 %v768
        %v1071 = vpop.f32.mrb[0].mxu0
        %v1072 = vadd.f32 %v927, %v1071
        %v1073 = vpop.f32.mrb[0].mxu0
        %v1074 = vpop.f32.mrb[0].mxu0
        %v1075 = vadd.f32 %v930, %v1074
        %v1076 = vpop.f32.mrb[0].mxu0
        %1077 = vmatprep.mubr.bf16.mxu0 0
        %1078 = vmatmul.mubr.bf16.gmra.mrb[0].mxu0 %v769
        %v1079 = vpop.f32.mrb[0].mxu0
        %v1080 = vadd.f32 %v935, %v1079
        %v1081 = vpop.f32.mrb[0].mxu0
        %v1082 = vpop.f32.mrb[0].mxu0
        %v1083 = vadd.f32 %v938, %v1082
        %v1084 = vpop.f32.mrb[0].mxu0
        %1085 = vmatprep.mubr.bf16.mxu0 0
        %1086 = vmatmul.mubr.bf16.gmra.mrb[0].mxu0 %v770
        %v1087 = vpop.f32.mrb[0].mxu0
        %v1088 = vadd.f32 %v943, %v1087
        %v1089 = vpop.f32.mrb[0].mxu0
        %v1090 = vpop.f32.mrb[0].mxu0
        %v1091 = vadd.f32 %v946, %v1090
        %v1092 = vpop.f32.mrb[0].mxu0
        %1093 = vmatprep.mubr.bf16.mxu0 0
        %1094 = vmatmul.mubr.bf16.gmra.mrb[0].mxu0 %v771
        %v1095 = vpop.f32.mrb[0].mxu0
        %v1096 = vadd.f32 %v951, %v1095
        %v1097 = vpop.f32.mrb[0].mxu0
        %v1098 = vpop.f32.mrb[0].mxu0
        %v1099 = vadd.f32 %v954, %v1098
        %v1100 = vpop.f32.mrb[0].mxu0
        %1101 = vdwg.mxu0
        %v1102 = vld [vmem:[%s6] sm:$0x1]
        %v1104 = vlaneseq
        %v1105 = vshrl.u32 %v1104, 7
        %v1106 = vsub.s32 0, %v1105
        %v1107 = vrot.slane %v1102, %v1106
        %v1109 = vadd.f32 %v1040, %v1107
        %v1110 = vadd.f32 %v1043, %v1107
        %v1111 = vadd.f32 %v1048, %v1107
        %v1112 = vadd.f32 %v1051, %v1107
        %v1113 = vadd.f32 %v1056, %v1107
        %v1114 = vadd.f32 %v1059, %v1107
        %v1115 = vadd.f32 %v1064, %v1107
        %v1116 = vadd.f32 %v1067, %v1107
        %v1117 = vadd.f32 %v1072, %v1107
        %v1118 = vadd.f32 %v1075, %v1107
        %v1119 = vadd.f32 %v1080, %v1107
        %v1120 = vadd.f32 %v1083, %v1107
        %v1121 = vadd.f32 %v1088, %v1107
        %v1122 = vadd.f32 %v1091, %v1107
        %v1123 = vadd.f32 %v1096, %v1107
        %v1124 = vadd.f32 %v1099, %v1107
        %vm1125 = vcmask 261120
        %1126 = vst.msk [vmem:[%s377] sm:$0xff] %vm1125, %v1109
        %1127 = vst.msk [vmem:[%s377 + $0x8] sm:$0xff] %vm1125, %v1110
        %1128 = vst.msk [vmem:[%s377 + $0x10] sm:$0xff] %vm1125, %v1111
        %1129 = vst.msk [vmem:[%s377 + $0x18] sm:$0xff] %vm1125, %v1112
        %1130 = vst.msk [vmem:[%s377 + $0x20] sm:$0xff] %vm1125, %v1113
        %1131 = vst.msk [vmem:[%s377 + $0x28] sm:$0xff] %vm1125, %v1114
        %1132 = vst.msk [vmem:[%s377 + $0x30] sm:$0xff] %vm1125, %v1115
        %1133 = vst.msk [vmem:[%s377 + $0x38] sm:$0xff] %vm1125, %v1116
        %1134 = vst.msk [vmem:[%s377 + $0x40] sm:$0xff] %vm1125, %v1117
        %1135 = vst.msk [vmem:[%s377 + $0x48] sm:$0xff] %vm1125, %v1118
        %1136 = vst.msk [vmem:[%s377 + $0x50] sm:$0xff] %vm1125, %v1119
        %1137 = vst.msk [vmem:[%s377 + $0x58] sm:$0xff] %vm1125, %v1120
        %1138 = vst.msk [vmem:[%s377 + $0x60] sm:$0xff] %vm1125, %v1121
        %1139 = vst.msk [vmem:[%s377 + $0x68] sm:$0xff] %vm1125, %v1122
        %1140 = vst.msk [vmem:[%s377 + $0x70] sm:$0xff] %vm1125, %v1123
        %1141 = vst.msk [vmem:[%s377 + $0x78] sm:$0xff] %vm1125, %v1124
      $region56: #{_sage_forward_impl.5} parent=47 // pred_fallthru
        _
      %s1142 = smul.u32 16, %s22
      %p1143 = scmp.lt.s32.totalorder %s1142, 31
      %s1144 = scalar_select %p1143, %s1142, 31
      %s1145 = smul.addr %s1144, 8
      %s1146 = scalar_lea.vmem %s7, %s1145
      // Predicated region
      $region57: #{_sage_forward_impl.5} parent=47 // pred_check
        %p1147 = pneg %p217
      $region58: #{_sage_forward_impl.5} parent=47 // pred_check_branch
        %1149 = sbr.rel (%p1147) target = $region60
      $region59: #{_sage_forward_impl.5} parent=47 // pred_region
        %s1150 = smul.u32 16, %s22
      $region60: #{_sage_forward_impl.5} parent=47 // pred_fallthru
        _
    $region48: #{_sage_forward_impl.5} parent=5 // pred_fallthru
      _
    %p1151 = scmp.le.s32.totalorder 2, %s13
    // Predicated region
    $region61: #{_sage_forward_impl.5} parent=5 // pred_check
      %p1152 = pneg %p1151
    $region62: #{_sage_forward_impl.5} parent=5 // pred_check_branch
      %1154 = sbr.rel (%p1152) target = $region64
    $region63: #{_sage_forward_impl.5} parent=5 // pred_region
      %s1155 = ssub.s32 %s13, 2
      // Predicated region
      $region65: #{_sage_forward_impl.5} parent=63 // pred_check
        %p1156 = pneg %p223
      $region66: #{_sage_forward_impl.5} parent=63 // pred_check_branch
        %1158 = sbr.rel (%p1156) target = $region68
      $region67: #{_sage_forward_impl.5} parent=63 // pred_region
        %s1159 = smul.u32 16, %s24
        %p1160 = scmp.lt.s32.totalorder %s1159, 31
        %s1161 = scalar_select %p1160, %s1159, 31
        %s1162 = smul.addr %s1161, 8
        %s1163 = scalar_lea.vmem %s7, %s1162
      $region68: #{_sage_forward_impl.5} parent=63 // pred_fallthru
        _
    $region64: #{_sage_forward_impl.5} parent=5 // pred_fallthru
      _
  $region6: #{_sage_forward_impl.5} parent=0 // loop_footer
    %s17 = sadd.s32 1, %s13
  $region7: #{_sage_forward_impl.5} parent=0 // loop_footer_branch
    %12 = sbr.rel target = $region3
  $region8: #{_sage_forward_impl.5} parent=0 // loop_exit
    _

</llo_original>
